<compile_context>
chip_gen: v7x
topology: tpu7x:2x2x1
jax: 0.10.0
libtpu: 0.0.40
codegen_flags: <defaults>
</compile_context>

<pallas_src>
import functools

import numpy as np

import jax
import jax.numpy as jnp
from jax import lax
from jax.experimental import pallas as pl
from jax.experimental.pallas import tpu as pltpu


# --------------------------------------------------------------------------
# Static tap tables (shifts + boundary masks) in the flat spatial ordering
#   p = d*H*W + h*W + w,   d = vh*view_n + vw,   q = h*W + w
# --------------------------------------------------------------------------
def _taps():
    return [(kd - 1, kh - 1, kw - 1)
            for kd in range(3) for kh in range(3) for kw in range(3)]


def _build_tap_tables(view_n, H, W):
    D = view_n * view_n
    HW = H * W
    N = D * HW
    p = np.arange(N)
    d, h, w = p // HW, (p // W) % H, p % W
    q, vh, vw = p % HW, d // view_n, d % view_n

    shifts_s, masks_s, shifts_a, masks_a = [], [], [], []
    for od, oh, ow in _taps():
        # s_body conv: axes are (depth=d=view index, height=h, width=w)
        shifts_s.append(od * HW + oh * W + ow)
        masks_s.append((0 <= d + od) & (d + od < D) &
                       (0 <= h + oh) & (h + oh < H) &
                       (0 <= w + ow) & (w + ow < W))
        # a_body conv (after the permute): axes are (depth=q=pixel index,
        # height=vh, width=vw) -- expressed as a shift in spatial ordering.
        shifts_a.append((oh * view_n + ow) * HW + od)
        masks_a.append((0 <= q + od) & (q + od < HW) &
                       (0 <= vh + oh) & (vh + oh < view_n) &
                       (0 <= vw + ow) & (vw + ow < view_n))

    mask_s = np.stack(masks_s).astype(np.float32)       # (27, N)
    mask_a = np.stack(masks_a).astype(np.float32)       # (27, N)
    return tuple(int(s) for s in shifts_s), tuple(int(s) for s in shifts_a), \
        mask_s, mask_a


# --------------------------------------------------------------------------
# Kernel
# --------------------------------------------------------------------------
def _resblock_kernel(alpha_ref, x_ref, w1_ref, b1_ref, w2_ref, b2_ref,
                     ms_ref, ma_ref, out_ref, pad_ref, col_ref, *,
                     C, N, S, shifts_s, shifts_a, compute_dtype):
    f32 = jnp.float32

    # Halo strips: small and lane-dense, re-zeroed every step (robust under
    # megacore grid sharding); the interior [S:S+N] is fully overwritten
    # before each conv below, so it never needs clearing.
    pad_ref[:, :S] = jnp.zeros((C, S), f32)
    pad_ref[:, S + N:] = jnp.zeros((C, S), f32)

    x2d = x_ref[0].astype(f32)                                   # (C, N)

    def conv3x3x3(act, w_ref, b_ref, mask_ref, shifts):
        """act: (C, N) f32 (already activated) -> (C, N) f32 conv output."""
        pad_ref[:, S:S + N] = act
        for t, s in enumerate(shifts):                           # static unroll
            tap = pad_ref[:, S + s:S + s + N] * mask_ref[t:t + 1, :]
            col_ref[t * C:(t + 1) * C, :] = tap.astype(compute_dtype)
        y = jnp.dot(w_ref[...], col_ref[...],
                    preferred_element_type=f32)                  # (C, N) f32
        return y + b_ref[...]

    # -------- s_body: PReLU + Conv3d over (view_n^2, H, W) -----------------
    a1 = jnp.where(x2d > 0, x2d, alpha_ref[0] * x2d)
    y1 = conv3x3x3(a1, w1_ref, b1_ref, ms_ref, shifts_s)

    # -------- a_body: PReLU + Conv3d over (H*W, view_n, view_n) ------------
    # Both permutes are folded into shifts_a / mask_a, so y2 is produced
    # directly in the spatial flat ordering needed for the residual.
    a2 = jnp.where(y1 > 0, y1, alpha_ref[1] * y1)
    y2 = conv3x3x3(a2, w2_ref, b2_ref, ma_ref, shifts_a)

    out_ref[0] = (y2 + x2d).astype(out_ref.dtype)


# --------------------------------------------------------------------------
# Wrapper
# --------------------------------------------------------------------------
def res_block_sa_2d(x_ncdhw, params, *, view_n, image_h, image_w,
                    compute_dtype=jnp.bfloat16):
    """Forward pass of ResBlock_SA_2d. x_ncdhw: (B, C, view_n**2, H, W)."""
    B, C, V2, H, W = x_ncdhw.shape
    assert V2 == view_n * view_n and H == image_h and W == image_w
    N = V2 * H * W

    shifts_s, shifts_a, mask_s, mask_a = _build_tap_tables(view_n, H, W)
    S = int(max(abs(s) for s in shifts_s + shifts_a))            # halo width

    x_flat = x_ncdhw.reshape(B, C, N)            # free, contiguous reshape

    # PyTorch weight (Cout, Cin, kd, kh, kw) -> (Cout, 27*Cin); columns ordered
    # (tap, ci) to match the col scratch row layout built in the kernel.
    def as_mat(wt):
        return jnp.transpose(wt, (0, 2, 3, 4, 1)).reshape(C, 27 * C) \
                  .astype(compute_dtype)

    w1 = as_mat(params["s_w"])
    w2 = as_mat(params["a_w"])
    b1 = params["s_b"].reshape(C, 1).astype(jnp.float32)
    b2 = params["a_b"].reshape(C, 1).astype(jnp.float32)
    alphas = jnp.array([params["s_alpha"], params["a_alpha"]], jnp.float32)

    kernel = functools.partial(_resblock_kernel, C=C, N=N, S=S,
                               shifts_s=shifts_s, shifts_a=shifts_a,
                               compute_dtype=compute_dtype)

    # TODO(synk): for production C/H/W/view_n, tile the matmul N dimension
    # (output pixels) with an inner loop / second parallel grid axis so the
    # (27*C, N) col scratch fits v7x's 64 MiB VMEM and both v7x TensorCores
    # stay busy when B == 1; at these sizes a single N tile is optimal.
    out_flat = pl.pallas_call(
        kernel,
        out_shape=jax.ShapeDtypeStruct((B, C, N), x_ncdhw.dtype),
        grid_spec=pltpu.PrefetchScalarGridSpec(
            num_scalar_prefetch=0,
            grid=(B,),
            in_specs=[
                pl.BlockSpec(memory_space=pltpu.MemorySpace.SMEM),  # alphas
                pl.BlockSpec((1, C, N), lambda b: (b, 0, 0)),       # x slab
                pl.BlockSpec((C, 27 * C), lambda b: (0, 0)),        # w1
                pl.BlockSpec((C, 1), lambda b: (0, 0)),             # b1
                pl.BlockSpec((C, 27 * C), lambda b: (0, 0)),        # w2
                pl.BlockSpec((C, 1), lambda b: (0, 0)),             # b2
                pl.BlockSpec((27, N), lambda b: (0, 0)),            # mask_s
                pl.BlockSpec((27, N), lambda b: (0, 0)),            # mask_a
            ],
            out_specs=pl.BlockSpec((1, C, N), lambda b: (b, 0, 0)),
            scratch_shapes=[
                pltpu.VMEM((C, N + 2 * S), jnp.float32),     # flat halo pad
                pltpu.VMEM((27 * C, N), compute_dtype),      # im2col columns
            ],
        ),
        # VMEM use at these shapes is <2 MiB with the lane-dense layout, well
        # under the default scoped limit; re-derive (and N-tile) for
        # production C/H/W on v7x's 64 MiB cores.
        compiler_params=pltpu.CompilerParams(
            dimension_semantics=("parallel",),
        ),
    )(alphas, x_flat, w1, b1, w2, b2,
      jnp.asarray(mask_s), jnp.asarray(mask_a))

    return out_flat.reshape(B, C, V2, H, W)


# --------------------------------------------------------------------------
# Pure-JAX reference (matches PyTorch semantics) for validation
# --------------------------------------------------------------------------
def _pure_jax_reference(x, params, view_n, compute_dtype=jnp.float32):
    def prelu(t, a):
        return jnp.where(t > 0, t, a * t)

    def conv3d(t, w, b):
        out = lax.conv_general_dilated(
            t.astype(compute_dtype), w.astype(compute_dtype),
            window_strides=(1, 1, 1),
            padding=((1, 1), (1, 1), (1, 1)),
            dimension_numbers=("NCDHW", "OIDHW", "NCDHW"),
            preferred_element_type=jnp.float32)
        return out + b.reshape(1, -1, 1, 1, 1)

    B, C, V2, H, W = x.shape
    res = conv3d(prelu(x, params["s_alpha"]), params["s_w"], params["s_b"])
    res = jnp.transpose(res, (0, 1, 3, 4, 2)).reshape(B, C, H * W, view_n, view_n)
    res = conv3d(prelu(res, params["a_alpha"]), params["a_w"], params["a_b"])
    res = jnp.transpose(res, (0, 1, 3, 4, 2)).reshape(B, C, view_n * view_n, H, W)
    return res + x


if __name__ == "__main__":
    batch, n_feats, view_n, image_h, image_w = 2, 4, 3, 8, 8
    V2 = view_n * view_n

    key = jax.random.PRNGKey(0)
    k = jax.random.split(key, 5)
    x = jax.random.normal(k[0], (batch, n_feats, V2, image_h, image_w),
                          jnp.float32)

    # Deterministic synthetic parameters (PReLU slope uses PyTorch's 0.25 init).
    params = {
        "s_alpha": jnp.float32(0.25),
        "a_alpha": jnp.float32(0.25),
        "s_w": 0.1 * jax.random.normal(k[1], (n_feats, n_feats, 3, 3, 3),
                                       jnp.float32),
        "s_b": 0.1 * jax.random.normal(k[2], (n_feats,), jnp.float32),
        "a_w": 0.1 * jax.random.normal(k[3], (n_feats, n_feats, 3, 3, 3),
                                       jnp.float32),
        "a_b": 0.1 * jax.random.normal(k[4], (n_feats,), jnp.float32),
    }

    # 1) Exact-semantics check: f32 matmul operands vs. f32 reference.
    fwd_f32 = jax.jit(functools.partial(res_block_sa_2d, view_n=view_n,
                                        image_h=image_h, image_w=image_w,
                                        compute_dtype=jnp.float32))
    out_f32 = jax.block_until_ready(fwd_f32(x, params))
    ref_f32 = _pure_jax_reference(x, params, view_n, jnp.float32)
    assert out_f32.shape == x.shape
    assert jnp.allclose(out_f32, ref_f32, atol=1e-4, rtol=1e-4), \
        float(jnp.max(jnp.abs(out_f32 - ref_f32)))

    # 2) Performance default: bf16 MXU operands with f32 accumulation,
    #    checked against a reference that uses the same operand precision.
    fwd_bf16 = jax.jit(functools.partial(res_block_sa_2d, view_n=view_n,
                                         image_h=image_h, image_w=image_w,
                                         compute_dtype=jnp.bfloat16))
    out_bf16 = jax.block_until_ready(fwd_bf16(x, params))
    ref_bf16 = _pure_jax_reference(x, params, view_n, jnp.bfloat16)
    assert jnp.allclose(out_bf16, ref_bf16, atol=1e-2, rtol=1e-2), \
        float(jnp.max(jnp.abs(out_bf16 - ref_bf16)))

    print("KERNEL_OK")
</pallas_src>

<mosaic_0001>
module attributes {stable_mosaic.version = 11 : i64} {
  func.func @_resblock_kernel(%arg0: i32, %arg1: memref<2xf32, #tpu.memory_space<smem>>, %arg2: memref<1x4x576xf32, #tpu.memory_space<vmem>>, %arg3: memref<4x108xf32, #tpu.memory_space<vmem>>, %arg4: memref<4x1xf32, #tpu.memory_space<vmem>>, %arg5: memref<4x108xf32, #tpu.memory_space<vmem>>, %arg6: memref<4x1xf32, #tpu.memory_space<vmem>>, %arg7: memref<27x576xf32, #tpu.memory_space<vmem>>, %arg8: memref<27x576xf32, #tpu.memory_space<vmem>>, %arg9: memref<1x4x576xf32, #tpu.memory_space<vmem>>, %arg10: memref<4x1090xf32, #tpu.memory_space<vmem>>, %arg11: memref<108x576xf32, #tpu.memory_space<vmem>>) attributes {dimension_semantics = [#tpu.dimension_semantics<parallel>], iteration_bounds = array<i64: 2>, scalar_prefetch = 0 : i64, scratch_operands = 2 : i64, tpu.core_type = #tpu.core_type<tc>, window_params = [{transform_indices = @transform_0, window_bounds = array<i64: 2>}, {transform_indices = @transform_1, window_bounds = array<i64: 1, 4, 576>}, {pipeline_mode = #tpu.pipeline_mode<synchronous>, transform_indices = @transform_2, window_bounds = array<i64: 4, 108>}, {pipeline_mode = #tpu.pipeline_mode<synchronous>, transform_indices = @transform_3, window_bounds = array<i64: 4, 1>}, {pipeline_mode = #tpu.pipeline_mode<synchronous>, transform_indices = @transform_4, window_bounds = array<i64: 4, 108>}, {pipeline_mode = #tpu.pipeline_mode<synchronous>, transform_indices = @transform_5, window_bounds = array<i64: 4, 1>}, {pipeline_mode = #tpu.pipeline_mode<synchronous>, transform_indices = @transform_6, window_bounds = array<i64: 27, 576>}, {pipeline_mode = #tpu.pipeline_mode<synchronous>, transform_indices = @transform_7, window_bounds = array<i64: 27, 576>}, {transform_indices = @transform_8, window_bounds = array<i64: 1, 4, 576>}]} {
    %cst = arith.constant 0.000000e+00 : f32
    %0 = vector.broadcast %cst : f32 to vector<4x257xf32>
    %c0 = arith.constant 0 : index
    %c0_0 = arith.constant 0 : index
    %1 = vector.load %arg10[%c0, %c0_0] : memref<4x1090xf32, #tpu.memory_space<vmem>>, vector<4x257xf32>
    tpu.vector_store %arg10[%c0, %c0_0], %0 {strides = array<i32>} : memref<4x1090xf32, #tpu.memory_space<vmem>>, vector<4x257xf32>,
    %cst_1 = arith.constant 0.000000e+00 : f32
    %2 = vector.broadcast %cst_1 : f32 to vector<4x257xf32>
    %c0_2 = arith.constant 0 : index
    %c833 = arith.constant 833 : index
    %3 = vector.load %arg10[%c0_2, %c833] : memref<4x1090xf32, #tpu.memory_space<vmem>>, vector<4x257xf32>
    tpu.vector_store %arg10[%c0_2, %c833], %2 {strides = array<i32>} : memref<4x1090xf32, #tpu.memory_space<vmem>>, vector<4x257xf32>,
    %c0_3 = arith.constant 0 : index
    %c0_4 = arith.constant 0 : index
    %c0_5 = arith.constant 0 : index
    %4 = vector.load %arg2[%c0_3, %c0_4, %c0_5] : memref<1x4x576xf32, #tpu.memory_space<vmem>>, vector<1x4x576xf32>
    %5 = vector.shape_cast %4 : vector<1x4x576xf32> to vector<4x576xf32>
    %cst_6 = arith.constant 0.000000e+00 : f32
    %6 = vector.broadcast %cst_6 : f32 to vector<4x576xf32>
    %7 = arith.cmpf ogt, %5, %6 : vector<4x576xf32>
    %c0_7 = arith.constant 0 : index
    %8 = memref.load %arg1[%c0_7] : memref<2xf32, #tpu.memory_space<smem>>
    %9 = vector.broadcast %8 : f32 to vector<4x576xf32>
    %10 = arith.mulf %9, %5 : vector<4x576xf32>
    %11 = arith.select %7, %5, %10 : vector<4x576xi1>, vector<4x576xf32>
    %c0_8 = arith.constant 0 : index
    %c257 = arith.constant 257 : index
    %12 = vector.load %arg10[%c0_8, %c257] : memref<4x1090xf32, #tpu.memory_space<vmem>>, vector<4x576xf32>
    tpu.vector_store %arg10[%c0_8, %c257], %11 {strides = array<i32>} : memref<4x1090xf32, #tpu.memory_space<vmem>>, vector<4x576xf32>,
    %c0_9 = arith.constant 0 : index
    %c184 = arith.constant 184 : index
    %13 = vector.load %arg10[%c0_9, %c184] : memref<4x1090xf32, #tpu.memory_space<vmem>>, vector<4x576xf32>
    %c0_10 = arith.constant 0 : index
    %c0_11 = arith.constant 0 : index
    %14 = vector.load %arg7[%c0_10, %c0_11] : memref<27x576xf32, #tpu.memory_space<vmem>>, vector<1x576xf32>
    %15 = vector.broadcast %14 : vector<1x576xf32> to vector<4x576xf32>
    %16 = arith.mulf %13, %15 : vector<4x576xf32>
    %c0_12 = arith.constant 0 : index
    %c0_13 = arith.constant 0 : index
    %17 = vector.load %arg11[%c0_12, %c0_13] : memref<108x576xf32, #tpu.memory_space<vmem>>, vector<4x576xf32>
    tpu.vector_store %arg11[%c0_12, %c0_13], %16 {strides = array<i32>} : memref<108x576xf32, #tpu.memory_space<vmem>>, vector<4x576xf32>,
    %c0_14 = arith.constant 0 : index
    %c185 = arith.constant 185 : index
    %18 = vector.load %arg10[%c0_14, %c185] : memref<4x1090xf32, #tpu.memory_space<vmem>>, vector<4x576xf32>
    %c1 = arith.constant 1 : index
    %c0_15 = arith.constant 0 : index
    %19 = vector.load %arg7[%c1, %c0_15] : memref<27x576xf32, #tpu.memory_space<vmem>>, vector<1x576xf32>
    %20 = vector.broadcast %19 : vector<1x576xf32> to vector<4x576xf32>
    %21 = arith.mulf %18, %20 : vector<4x576xf32>
    %c4 = arith.constant 4 : index
    %c0_16 = arith.constant 0 : index
    %22 = vector.load %arg11[%c4, %c0_16] : memref<108x576xf32, #tpu.memory_space<vmem>>, vector<4x576xf32>
    tpu.vector_store %arg11[%c4, %c0_16], %21 {strides = array<i32>} : memref<108x576xf32, #tpu.memory_space<vmem>>, vector<4x576xf32>,
    %c0_17 = arith.constant 0 : index
    %c186 = arith.constant 186 : index
    %23 = vector.load %arg10[%c0_17, %c186] : memref<4x1090xf32, #tpu.memory_space<vmem>>, vector<4x576xf32>
    %c2 = arith.constant 2 : index
    %c0_18 = arith.constant 0 : index
    %24 = vector.load %arg7[%c2, %c0_18] : memref<27x576xf32, #tpu.memory_space<vmem>>, vector<1x576xf32>
    %25 = vector.broadcast %24 : vector<1x576xf32> to vector<4x576xf32>
    %26 = arith.mulf %23, %25 : vector<4x576xf32>
    %c8 = arith.constant 8 : index
    %c0_19 = arith.constant 0 : index
    %27 = vector.load %arg11[%c8, %c0_19] : memref<108x576xf32, #tpu.memory_space<vmem>>, vector<4x576xf32>
    tpu.vector_store %arg11[%c8, %c0_19], %26 {strides = array<i32>} : memref<108x576xf32, #tpu.memory_space<vmem>>, vector<4x576xf32>,
    %c0_20 = arith.constant 0 : index
    %c192 = arith.constant 192 : index
    %28 = vector.load %arg10[%c0_20, %c192] : memref<4x1090xf32, #tpu.memory_space<vmem>>, vector<4x576xf32>
    %c3 = arith.constant 3 : index
    %c0_21 = arith.constant 0 : index
    %29 = vector.load %arg7[%c3, %c0_21] : memref<27x576xf32, #tpu.memory_space<vmem>>, vector<1x576xf32>
    %30 = vector.broadcast %29 : vector<1x576xf32> to vector<4x576xf32>
    %31 = arith.mulf %28, %30 : vector<4x576xf32>
    %c12 = arith.constant 12 : index
    %c0_22 = arith.constant 0 : index
    %32 = vector.load %arg11[%c12, %c0_22] : memref<108x576xf32, #tpu.memory_space<vmem>>, vector<4x576xf32>
    tpu.vector_store %arg11[%c12, %c0_22], %31 {strides = array<i32>} : memref<108x576xf32, #tpu.memory_space<vmem>>, vector<4x576xf32>,
    %c0_23 = arith.constant 0 : index
    %c193 = arith.constant 193 : index
    %33 = vector.load %arg10[%c0_23, %c193] : memref<4x1090xf32, #tpu.memory_space<vmem>>, vector<4x576xf32>
    %c4_24 = arith.constant 4 : index
    %c0_25 = arith.constant 0 : index
    %34 = vector.load %arg7[%c4_24, %c0_25] : memref<27x576xf32, #tpu.memory_space<vmem>>, vector<1x576xf32>
    %35 = vector.broadcast %34 : vector<1x576xf32> to vector<4x576xf32>
    %36 = arith.mulf %33, %35 : vector<4x576xf32>
    %c16 = arith.constant 16 : index
    %c0_26 = arith.constant 0 : index
    %37 = vector.load %arg11[%c16, %c0_26] : memref<108x576xf32, #tpu.memory_space<vmem>>, vector<4x576xf32>
    tpu.vector_store %arg11[%c16, %c0_26], %36 {strides = array<i32>} : memref<108x576xf32, #tpu.memory_space<vmem>>, vector<4x576xf32>,
    %c0_27 = arith.constant 0 : index
    %c194 = arith.constant 194 : index
    %38 = vector.load %arg10[%c0_27, %c194] : memref<4x1090xf32, #tpu.memory_space<vmem>>, vector<4x576xf32>
    %c5 = arith.constant 5 : index
    %c0_28 = arith.constant 0 : index
    %39 = vector.load %arg7[%c5, %c0_28] : memref<27x576xf32, #tpu.memory_space<vmem>>, vector<1x576xf32>
    %40 = vector.broadcast %39 : vector<1x576xf32> to vector<4x576xf32>
    %41 = arith.mulf %38, %40 : vector<4x576xf32>
    %c20 = arith.constant 20 : index
    %c0_29 = arith.constant 0 : index
    %42 = vector.load %arg11[%c20, %c0_29] : memref<108x576xf32, #tpu.memory_space<vmem>>, vector<4x576xf32>
    tpu.vector_store %arg11[%c20, %c0_29], %41 {strides = array<i32>} : memref<108x576xf32, #tpu.memory_space<vmem>>, vector<4x576xf32>,
    %c0_30 = arith.constant 0 : index
    %c200 = arith.constant 200 : index
    %43 = vector.load %arg10[%c0_30, %c200] : memref<4x1090xf32, #tpu.memory_space<vmem>>, vector<4x576xf32>
    %c6 = arith.constant 6 : index
    %c0_31 = arith.constant 0 : index
    %44 = vector.load %arg7[%c6, %c0_31] : memref<27x576xf32, #tpu.memory_space<vmem>>, vector<1x576xf32>
    %45 = vector.broadcast %44 : vector<1x576xf32> to vector<4x576xf32>
    %46 = arith.mulf %43, %45 : vector<4x576xf32>
    %c24 = arith.constant 24 : index
    %c0_32 = arith.constant 0 : index
    %47 = vector.load %arg11[%c24, %c0_32] : memref<108x576xf32, #tpu.memory_space<vmem>>, vector<4x576xf32>
    tpu.vector_store %arg11[%c24, %c0_32], %46 {strides = array<i32>} : memref<108x576xf32, #tpu.memory_space<vmem>>, vector<4x576xf32>,
    %c0_33 = arith.constant 0 : index
    %c201 = arith.constant 201 : index
    %48 = vector.load %arg10[%c0_33, %c201] : memref<4x1090xf32, #tpu.memory_space<vmem>>, vector<4x576xf32>
    %c7 = arith.constant 7 : index
    %c0_34 = arith.constant 0 : index
    %49 = vector.load %arg7[%c7, %c0_34] : memref<27x576xf32, #tpu.memory_space<vmem>>, vector<1x576xf32>
    %50 = vector.broadcast %49 : vector<1x576xf32> to vector<4x576xf32>
    %51 = arith.mulf %48, %50 : vector<4x576xf32>
    %c28 = arith.constant 28 : index
    %c0_35 = arith.constant 0 : index
    %52 = vector.load %arg11[%c28, %c0_35] : memref<108x576xf32, #tpu.memory_space<vmem>>, vector<4x576xf32>
    tpu.vector_store %arg11[%c28, %c0_35], %51 {strides = array<i32>} : memref<108x576xf32, #tpu.memory_space<vmem>>, vector<4x576xf32>,
    %c0_36 = arith.constant 0 : index
    %c202 = arith.constant 202 : index
    %53 = vector.load %arg10[%c0_36, %c202] : memref<4x1090xf32, #tpu.memory_space<vmem>>, vector<4x576xf32>
    %c8_37 = arith.constant 8 : index
    %c0_38 = arith.constant 0 : index
    %54 = vector.load %arg7[%c8_37, %c0_38] : memref<27x576xf32, #tpu.memory_space<vmem>>, vector<1x576xf32>
    %55 = vector.broadcast %54 : vector<1x576xf32> to vector<4x576xf32>
    %56 = arith.mulf %53, %55 : vector<4x576xf32>
    %c32 = arith.constant 32 : index
    %c0_39 = arith.constant 0 : index
    %57 = vector.load %arg11[%c32, %c0_39] : memref<108x576xf32, #tpu.memory_space<vmem>>, vector<4x576xf32>
    tpu.vector_store %arg11[%c32, %c0_39], %56 {strides = array<i32>} : memref<108x576xf32, #tpu.memory_space<vmem>>, vector<4x576xf32>,
    %c0_40 = arith.constant 0 : index
    %c248 = arith.constant 248 : index
    %58 = vector.load %arg10[%c0_40, %c248] : memref<4x1090xf32, #tpu.memory_space<vmem>>, vector<4x576xf32>
    %c9 = arith.constant 9 : index
    %c0_41 = arith.constant 0 : index
    %59 = vector.load %arg7[%c9, %c0_41] : memref<27x576xf32, #tpu.memory_space<vmem>>, vector<1x576xf32>
    %60 = vector.broadcast %59 : vector<1x576xf32> to vector<4x576xf32>
    %61 = arith.mulf %58, %60 : vector<4x576xf32>
    %c36 = arith.constant 36 : index
    %c0_42 = arith.constant 0 : index
    %62 = vector.load %arg11[%c36, %c0_42] : memref<108x576xf32, #tpu.memory_space<vmem>>, vector<4x576xf32>
    tpu.vector_store %arg11[%c36, %c0_42], %61 {strides = array<i32>} : memref<108x576xf32, #tpu.memory_space<vmem>>, vector<4x576xf32>,
    %c0_43 = arith.constant 0 : index
    %c249 = arith.constant 249 : index
    %63 = vector.load %arg10[%c0_43, %c249] : memref<4x1090xf32, #tpu.memory_space<vmem>>, vector<4x576xf32>
    %c10 = arith.constant 10 : index
    %c0_44 = arith.constant 0 : index
    %64 = vector.load %arg7[%c10, %c0_44] : memref<27x576xf32, #tpu.memory_space<vmem>>, vector<1x576xf32>
    %65 = vector.broadcast %64 : vector<1x576xf32> to vector<4x576xf32>
    %66 = arith.mulf %63, %65 : vector<4x576xf32>
    %c40 = arith.constant 40 : index
    %c0_45 = arith.constant 0 : index
    %67 = vector.load %arg11[%c40, %c0_45] : memref<108x576xf32, #tpu.memory_space<vmem>>, vector<4x576xf32>
    tpu.vector_store %arg11[%c40, %c0_45], %66 {strides = array<i32>} : memref<108x576xf32, #tpu.memory_space<vmem>>, vector<4x576xf32>,
    %c0_46 = arith.constant 0 : index
    %c250 = arith.constant 250 : index
    %68 = vector.load %arg10[%c0_46, %c250] : memref<4x1090xf32, #tpu.memory_space<vmem>>, vector<4x576xf32>
    %c11 = arith.constant 11 : index
    %c0_47 = arith.constant 0 : index
    %69 = vector.load %arg7[%c11, %c0_47] : memref<27x576xf32, #tpu.memory_space<vmem>>, vector<1x576xf32>
    %70 = vector.broadcast %69 : vector<1x576xf32> to vector<4x576xf32>
    %71 = arith.mulf %68, %70 : vector<4x576xf32>
    %c44 = arith.constant 44 : index
    %c0_48 = arith.constant 0 : index
    %72 = vector.load %arg11[%c44, %c0_48] : memref<108x576xf32, #tpu.memory_space<vmem>>, vector<4x576xf32>
    tpu.vector_store %arg11[%c44, %c0_48], %71 {strides = array<i32>} : memref<108x576xf32, #tpu.memory_space<vmem>>, vector<4x576xf32>,
    %c0_49 = arith.constant 0 : index
    %c256 = arith.constant 256 : index
    %73 = vector.load %arg10[%c0_49, %c256] : memref<4x1090xf32, #tpu.memory_space<vmem>>, vector<4x576xf32>
    %c12_50 = arith.constant 12 : index
    %c0_51 = arith.constant 0 : index
    %74 = vector.load %arg7[%c12_50, %c0_51] : memref<27x576xf32, #tpu.memory_space<vmem>>, vector<1x576xf32>
    %75 = vector.broadcast %74 : vector<1x576xf32> to vector<4x576xf32>
    %76 = arith.mulf %73, %75 : vector<4x576xf32>
    %c48 = arith.constant 48 : index
    %c0_52 = arith.constant 0 : index
    %77 = vector.load %arg11[%c48, %c0_52] : memref<108x576xf32, #tpu.memory_space<vmem>>, vector<4x576xf32>
    tpu.vector_store %arg11[%c48, %c0_52], %76 {strides = array<i32>} : memref<108x576xf32, #tpu.memory_space<vmem>>, vector<4x576xf32>,
    %c0_53 = arith.constant 0 : index
    %c257_54 = arith.constant 257 : index
    %78 = vector.load %arg10[%c0_53, %c257_54] : memref<4x1090xf32, #tpu.memory_space<vmem>>, vector<4x576xf32>
    %c13 = arith.constant 13 : index
    %c0_55 = arith.constant 0 : index
    %79 = vector.load %arg7[%c13, %c0_55] : memref<27x576xf32, #tpu.memory_space<vmem>>, vector<1x576xf32>
    %80 = vector.broadcast %79 : vector<1x576xf32> to vector<4x576xf32>
    %81 = arith.mulf %78, %80 : vector<4x576xf32>
    %c52 = arith.constant 52 : index
    %c0_56 = arith.constant 0 : index
    %82 = vector.load %arg11[%c52, %c0_56] : memref<108x576xf32, #tpu.memory_space<vmem>>, vector<4x576xf32>
    tpu.vector_store %arg11[%c52, %c0_56], %81 {strides = array<i32>} : memref<108x576xf32, #tpu.memory_space<vmem>>, vector<4x576xf32>,
    %c0_57 = arith.constant 0 : index
    %c258 = arith.constant 258 : index
    %83 = vector.load %arg10[%c0_57, %c258] : memref<4x1090xf32, #tpu.memory_space<vmem>>, vector<4x576xf32>
    %c14 = arith.constant 14 : index
    %c0_58 = arith.constant 0 : index
    %84 = vector.load %arg7[%c14, %c0_58] : memref<27x576xf32, #tpu.memory_space<vmem>>, vector<1x576xf32>
    %85 = vector.broadcast %84 : vector<1x576xf32> to vector<4x576xf32>
    %86 = arith.mulf %83, %85 : vector<4x576xf32>
    %c56 = arith.constant 56 : index
    %c0_59 = arith.constant 0 : index
    %87 = vector.load %arg11[%c56, %c0_59] : memref<108x576xf32, #tpu.memory_space<vmem>>, vector<4x576xf32>
    tpu.vector_store %arg11[%c56, %c0_59], %86 {strides = array<i32>} : memref<108x576xf32, #tpu.memory_space<vmem>>, vector<4x576xf32>,
    %c0_60 = arith.constant 0 : index
    %c264 = arith.constant 264 : index
    %88 = vector.load %arg10[%c0_60, %c264] : memref<4x1090xf32, #tpu.memory_space<vmem>>, vector<4x576xf32>
    %c15 = arith.constant 15 : index
    %c0_61 = arith.constant 0 : index
    %89 = vector.load %arg7[%c15, %c0_61] : memref<27x576xf32, #tpu.memory_space<vmem>>, vector<1x576xf32>
    %90 = vector.broadcast %89 : vector<1x576xf32> to vector<4x576xf32>
    %91 = arith.mulf %88, %90 : vector<4x576xf32>
    %c60 = arith.constant 60 : index
    %c0_62 = arith.constant 0 : index
    %92 = vector.load %arg11[%c60, %c0_62] : memref<108x576xf32, #tpu.memory_space<vmem>>, vector<4x576xf32>
    tpu.vector_store %arg11[%c60, %c0_62], %91 {strides = array<i32>} : memref<108x576xf32, #tpu.memory_space<vmem>>, vector<4x576xf32>,
    %c0_63 = arith.constant 0 : index
    %c265 = arith.constant 265 : index
    %93 = vector.load %arg10[%c0_63, %c265] : memref<4x1090xf32, #tpu.memory_space<vmem>>, vector<4x576xf32>
    %c16_64 = arith.constant 16 : index
    %c0_65 = arith.constant 0 : index
    %94 = vector.load %arg7[%c16_64, %c0_65] : memref<27x576xf32, #tpu.memory_space<vmem>>, vector<1x576xf32>
    %95 = vector.broadcast %94 : vector<1x576xf32> to vector<4x576xf32>
    %96 = arith.mulf %93, %95 : vector<4x576xf32>
    %c64 = arith.constant 64 : index
    %c0_66 = arith.constant 0 : index
    %97 = vector.load %arg11[%c64, %c0_66] : memref<108x576xf32, #tpu.memory_space<vmem>>, vector<4x576xf32>
    tpu.vector_store %arg11[%c64, %c0_66], %96 {strides = array<i32>} : memref<108x576xf32, #tpu.memory_space<vmem>>, vector<4x576xf32>,
    %c0_67 = arith.constant 0 : index
    %c266 = arith.constant 266 : index
    %98 = vector.load %arg10[%c0_67, %c266] : memref<4x1090xf32, #tpu.memory_space<vmem>>, vector<4x576xf32>
    %c17 = arith.constant 17 : index
    %c0_68 = arith.constant 0 : index
    %99 = vector.load %arg7[%c17, %c0_68] : memref<27x576xf32, #tpu.memory_space<vmem>>, vector<1x576xf32>
    %100 = vector.broadcast %99 : vector<1x576xf32> to vector<4x576xf32>
    %101 = arith.mulf %98, %100 : vector<4x576xf32>
    %c68 = arith.constant 68 : index
    %c0_69 = arith.constant 0 : index
    %102 = vector.load %arg11[%c68, %c0_69] : memref<108x576xf32, #tpu.memory_space<vmem>>, vector<4x576xf32>
    tpu.vector_store %arg11[%c68, %c0_69], %101 {strides = array<i32>} : memref<108x576xf32, #tpu.memory_space<vmem>>, vector<4x576xf32>,
    %c0_70 = arith.constant 0 : index
    %c312 = arith.constant 312 : index
    %103 = vector.load %arg10[%c0_70, %c312] : memref<4x1090xf32, #tpu.memory_space<vmem>>, vector<4x576xf32>
    %c18 = arith.constant 18 : index
    %c0_71 = arith.constant 0 : index
    %104 = vector.load %arg7[%c18, %c0_71] : memref<27x576xf32, #tpu.memory_space<vmem>>, vector<1x576xf32>
    %105 = vector.broadcast %104 : vector<1x576xf32> to vector<4x576xf32>
    %106 = arith.mulf %103, %105 : vector<4x576xf32>
    %c72 = arith.constant 72 : index
    %c0_72 = arith.constant 0 : index
    %107 = vector.load %arg11[%c72, %c0_72] : memref<108x576xf32, #tpu.memory_space<vmem>>, vector<4x576xf32>
    tpu.vector_store %arg11[%c72, %c0_72], %106 {strides = array<i32>} : memref<108x576xf32, #tpu.memory_space<vmem>>, vector<4x576xf32>,
    %c0_73 = arith.constant 0 : index
    %c313 = arith.constant 313 : index
    %108 = vector.load %arg10[%c0_73, %c313] : memref<4x1090xf32, #tpu.memory_space<vmem>>, vector<4x576xf32>
    %c19 = arith.constant 19 : index
    %c0_74 = arith.constant 0 : index
    %109 = vector.load %arg7[%c19, %c0_74] : memref<27x576xf32, #tpu.memory_space<vmem>>, vector<1x576xf32>
    %110 = vector.broadcast %109 : vector<1x576xf32> to vector<4x576xf32>
    %111 = arith.mulf %108, %110 : vector<4x576xf32>
    %c76 = arith.constant 76 : index
    %c0_75 = arith.constant 0 : index
    %112 = vector.load %arg11[%c76, %c0_75] : memref<108x576xf32, #tpu.memory_space<vmem>>, vector<4x576xf32>
    tpu.vector_store %arg11[%c76, %c0_75], %111 {strides = array<i32>} : memref<108x576xf32, #tpu.memory_space<vmem>>, vector<4x576xf32>,
    %c0_76 = arith.constant 0 : index
    %c314 = arith.constant 314 : index
    %113 = vector.load %arg10[%c0_76, %c314] : memref<4x1090xf32, #tpu.memory_space<vmem>>, vector<4x576xf32>
    %c20_77 = arith.constant 20 : index
    %c0_78 = arith.constant 0 : index
    %114 = vector.load %arg7[%c20_77, %c0_78] : memref<27x576xf32, #tpu.memory_space<vmem>>, vector<1x576xf32>
    %115 = vector.broadcast %114 : vector<1x576xf32> to vector<4x576xf32>
    %116 = arith.mulf %113, %115 : vector<4x576xf32>
    %c80 = arith.constant 80 : index
    %c0_79 = arith.constant 0 : index
    %117 = vector.load %arg11[%c80, %c0_79] : memref<108x576xf32, #tpu.memory_space<vmem>>, vector<4x576xf32>
    tpu.vector_store %arg11[%c80, %c0_79], %116 {strides = array<i32>} : memref<108x576xf32, #tpu.memory_space<vmem>>, vector<4x576xf32>,
    %c0_80 = arith.constant 0 : index
    %c320 = arith.constant 320 : index
    %118 = vector.load %arg10[%c0_80, %c320] : memref<4x1090xf32, #tpu.memory_space<vmem>>, vector<4x576xf32>
    %c21 = arith.constant 21 : index
    %c0_81 = arith.constant 0 : index
    %119 = vector.load %arg7[%c21, %c0_81] : memref<27x576xf32, #tpu.memory_space<vmem>>, vector<1x576xf32>
    %120 = vector.broadcast %119 : vector<1x576xf32> to vector<4x576xf32>
    %121 = arith.mulf %118, %120 : vector<4x576xf32>
    %c84 = arith.constant 84 : index
    %c0_82 = arith.constant 0 : index
    %122 = vector.load %arg11[%c84, %c0_82] : memref<108x576xf32, #tpu.memory_space<vmem>>, vector<4x576xf32>
    tpu.vector_store %arg11[%c84, %c0_82], %121 {strides = array<i32>} : memref<108x576xf32, #tpu.memory_space<vmem>>, vector<4x576xf32>,
    %c0_83 = arith.constant 0 : index
    %c321 = arith.constant 321 : index
    %123 = vector.load %arg10[%c0_83, %c321] : memref<4x1090xf32, #tpu.memory_space<vmem>>, vector<4x576xf32>
    %c22 = arith.constant 22 : index
    %c0_84 = arith.constant 0 : index
    %124 = vector.load %arg7[%c22, %c0_84] : memref<27x576xf32, #tpu.memory_space<vmem>>, vector<1x576xf32>
    %125 = vector.broadcast %124 : vector<1x576xf32> to vector<4x576xf32>
    %126 = arith.mulf %123, %125 : vector<4x576xf32>
    %c88 = arith.constant 88 : index
    %c0_85 = arith.constant 0 : index
    %127 = vector.load %arg11[%c88, %c0_85] : memref<108x576xf32, #tpu.memory_space<vmem>>, vector<4x576xf32>
    tpu.vector_store %arg11[%c88, %c0_85], %126 {strides = array<i32>} : memref<108x576xf32, #tpu.memory_space<vmem>>, vector<4x576xf32>,
    %c0_86 = arith.constant 0 : index
    %c322 = arith.constant 322 : index
    %128 = vector.load %arg10[%c0_86, %c322] : memref<4x1090xf32, #tpu.memory_space<vmem>>, vector<4x576xf32>
    %c23 = arith.constant 23 : index
    %c0_87 = arith.constant 0 : index
    %129 = vector.load %arg7[%c23, %c0_87] : memref<27x576xf32, #tpu.memory_space<vmem>>, vector<1x576xf32>
    %130 = vector.broadcast %129 : vector<1x576xf32> to vector<4x576xf32>
    %131 = arith.mulf %128, %130 : vector<4x576xf32>
    %c92 = arith.constant 92 : index
    %c0_88 = arith.constant 0 : index
    %132 = vector.load %arg11[%c92, %c0_88] : memref<108x576xf32, #tpu.memory_space<vmem>>, vector<4x576xf32>
    tpu.vector_store %arg11[%c92, %c0_88], %131 {strides = array<i32>} : memref<108x576xf32, #tpu.memory_space<vmem>>, vector<4x576xf32>,
    %c0_89 = arith.constant 0 : index
    %c328 = arith.constant 328 : index
    %133 = vector.load %arg10[%c0_89, %c328] : memref<4x1090xf32, #tpu.memory_space<vmem>>, vector<4x576xf32>
    %c24_90 = arith.constant 24 : index
    %c0_91 = arith.constant 0 : index
    %134 = vector.load %arg7[%c24_90, %c0_91] : memref<27x576xf32, #tpu.memory_space<vmem>>, vector<1x576xf32>
    %135 = vector.broadcast %134 : vector<1x576xf32> to vector<4x576xf32>
    %136 = arith.mulf %133, %135 : vector<4x576xf32>
    %c96 = arith.constant 96 : index
    %c0_92 = arith.constant 0 : index
    %137 = vector.load %arg11[%c96, %c0_92] : memref<108x576xf32, #tpu.memory_space<vmem>>, vector<4x576xf32>
    tpu.vector_store %arg11[%c96, %c0_92], %136 {strides = array<i32>} : memref<108x576xf32, #tpu.memory_space<vmem>>, vector<4x576xf32>,
    %c0_93 = arith.constant 0 : index
    %c329 = arith.constant 329 : index
    %138 = vector.load %arg10[%c0_93, %c329] : memref<4x1090xf32, #tpu.memory_space<vmem>>, vector<4x576xf32>
    %c25 = arith.constant 25 : index
    %c0_94 = arith.constant 0 : index
    %139 = vector.load %arg7[%c25, %c0_94] : memref<27x576xf32, #tpu.memory_space<vmem>>, vector<1x576xf32>
    %140 = vector.broadcast %139 : vector<1x576xf32> to vector<4x576xf32>
    %141 = arith.mulf %138, %140 : vector<4x576xf32>
    %c100 = arith.constant 100 : index
    %c0_95 = arith.constant 0 : index
    %142 = vector.load %arg11[%c100, %c0_95] : memref<108x576xf32, #tpu.memory_space<vmem>>, vector<4x576xf32>
    tpu.vector_store %arg11[%c100, %c0_95], %141 {strides = array<i32>} : memref<108x576xf32, #tpu.memory_space<vmem>>, vector<4x576xf32>,
    %c0_96 = arith.constant 0 : index
    %c330 = arith.constant 330 : index
    %143 = vector.load %arg10[%c0_96, %c330] : memref<4x1090xf32, #tpu.memory_space<vmem>>, vector<4x576xf32>
    %c26 = arith.constant 26 : index
    %c0_97 = arith.constant 0 : index
    %144 = vector.load %arg7[%c26, %c0_97] : memref<27x576xf32, #tpu.memory_space<vmem>>, vector<1x576xf32>
    %145 = vector.broadcast %144 : vector<1x576xf32> to vector<4x576xf32>
    %146 = arith.mulf %143, %145 : vector<4x576xf32>
    %c104 = arith.constant 104 : index
    %c0_98 = arith.constant 0 : index
    %147 = vector.load %arg11[%c104, %c0_98] : memref<108x576xf32, #tpu.memory_space<vmem>>, vector<4x576xf32>
    tpu.vector_store %arg11[%c104, %c0_98], %146 {strides = array<i32>} : memref<108x576xf32, #tpu.memory_space<vmem>>, vector<4x576xf32>,
    %c0_99 = arith.constant 0 : index
    %c0_100 = arith.constant 0 : index
    %148 = vector.load %arg3[%c0_99, %c0_100] : memref<4x108xf32, #tpu.memory_space<vmem>>, vector<4x108xf32>
    %c0_101 = arith.constant 0 : index
    %c0_102 = arith.constant 0 : index
    %149 = vector.load %arg11[%c0_101, %c0_102] : memref<108x576xf32, #tpu.memory_space<vmem>>, vector<108x576xf32>
    %cst_103 = arith.constant dense<0.000000e+00> : vector<4x576xf32>
    %150 = tpu.matmul %148, %149, %cst_103 {dimension_numbers = #tpu.dot_dimension_numbers<[1], [0], [0], [1], [0, 0, 1, 1], [], []>} : vector<4x108xf32>, vector<108x576xf32>, vector<4x576xf32> -> vector<4x576xf32>
    %c0_104 = arith.constant 0 : index
    %c0_105 = arith.constant 0 : index
    %151 = vector.load %arg4[%c0_104, %c0_105] : memref<4x1xf32, #tpu.memory_space<vmem>>, vector<4x1xf32>
    %152 = vector.broadcast %151 : vector<4x1xf32> to vector<4x576xf32>
    %153 = arith.addf %150, %152 : vector<4x576xf32>
    %cst_106 = arith.constant 0.000000e+00 : f32
    %154 = vector.broadcast %cst_106 : f32 to vector<4x576xf32>
    %155 = arith.cmpf ogt, %153, %154 : vector<4x576xf32>
    %c1_107 = arith.constant 1 : index
    %156 = memref.load %arg1[%c1_107] : memref<2xf32, #tpu.memory_space<smem>>
    %157 = vector.broadcast %156 : f32 to vector<4x576xf32>
    %158 = arith.mulf %157, %153 : vector<4x576xf32>
    %159 = arith.select %155, %153, %158 : vector<4x576xi1>, vector<4x576xf32>
    %c0_108 = arith.constant 0 : index
    %c257_109 = arith.constant 257 : index
    %160 = vector.load %arg10[%c0_108, %c257_109] : memref<4x1090xf32, #tpu.memory_space<vmem>>, vector<4x576xf32>
    tpu.vector_store %arg10[%c0_108, %c257_109], %159 {strides = array<i32>} : memref<4x1090xf32, #tpu.memory_space<vmem>>, vector<4x576xf32>,
    %c0_110 = arith.constant 0 : index
    %c0_111 = arith.constant 0 : index
    %161 = vector.load %arg10[%c0_110, %c0_111] : memref<4x1090xf32, #tpu.memory_space<vmem>>, vector<4x576xf32>
    %c0_112 = arith.constant 0 : index
    %c0_113 = arith.constant 0 : index
    %162 = vector.load %arg8[%c0_112, %c0_113] : memref<27x576xf32, #tpu.memory_space<vmem>>, vector<1x576xf32>
    %163 = vector.broadcast %162 : vector<1x576xf32> to vector<4x576xf32>
    %164 = arith.mulf %161, %163 : vector<4x576xf32>
    %c0_114 = arith.constant 0 : index
    %c0_115 = arith.constant 0 : index
    %165 = vector.load %arg11[%c0_114, %c0_115] : memref<108x576xf32, #tpu.memory_space<vmem>>, vector<4x576xf32>
    tpu.vector_store %arg11[%c0_114, %c0_115], %164 {strides = array<i32>} : memref<108x576xf32, #tpu.memory_space<vmem>>, vector<4x576xf32>,
    %c0_116 = arith.constant 0 : index
    %c64_117 = arith.constant 64 : index
    %166 = vector.load %arg10[%c0_116, %c64_117] : memref<4x1090xf32, #tpu.memory_space<vmem>>, vector<4x576xf32>
    %c1_118 = arith.constant 1 : index
    %c0_119 = arith.constant 0 : index
    %167 = vector.load %arg8[%c1_118, %c0_119] : memref<27x576xf32, #tpu.memory_space<vmem>>, vector<1x576xf32>
    %168 = vector.broadcast %167 : vector<1x576xf32> to vector<4x576xf32>
    %169 = arith.mulf %166, %168 : vector<4x576xf32>
    %c4_120 = arith.constant 4 : index
    %c0_121 = arith.constant 0 : index
    %170 = vector.load %arg11[%c4_120, %c0_121] : memref<108x576xf32, #tpu.memory_space<vmem>>, vector<4x576xf32>
    tpu.vector_store %arg11[%c4_120, %c0_121], %169 {strides = array<i32>} : memref<108x576xf32, #tpu.memory_space<vmem>>, vector<4x576xf32>,
    %c0_122 = arith.constant 0 : index
    %c128 = arith.constant 128 : index
    %171 = vector.load %arg10[%c0_122, %c128] : memref<4x1090xf32, #tpu.memory_space<vmem>>, vector<4x576xf32>
    %c2_123 = arith.constant 2 : index
    %c0_124 = arith.constant 0 : index
    %172 = vector.load %arg8[%c2_123, %c0_124] : memref<27x576xf32, #tpu.memory_space<vmem>>, vector<1x576xf32>
    %173 = vector.broadcast %172 : vector<1x576xf32> to vector<4x576xf32>
    %174 = arith.mulf %171, %173 : vector<4x576xf32>
    %c8_125 = arith.constant 8 : index
    %c0_126 = arith.constant 0 : index
    %175 = vector.load %arg11[%c8_125, %c0_126] : memref<108x576xf32, #tpu.memory_space<vmem>>, vector<4x576xf32>
    tpu.vector_store %arg11[%c8_125, %c0_126], %174 {strides = array<i32>} : memref<108x576xf32, #tpu.memory_space<vmem>>, vector<4x576xf32>,
    %c0_127 = arith.constant 0 : index
    %c192_128 = arith.constant 192 : index
    %176 = vector.load %arg10[%c0_127, %c192_128] : memref<4x1090xf32, #tpu.memory_space<vmem>>, vector<4x576xf32>
    %c3_129 = arith.constant 3 : index
    %c0_130 = arith.constant 0 : index
    %177 = vector.load %arg8[%c3_129, %c0_130] : memref<27x576xf32, #tpu.memory_space<vmem>>, vector<1x576xf32>
    %178 = vector.broadcast %177 : vector<1x576xf32> to vector<4x576xf32>
    %179 = arith.mulf %176, %178 : vector<4x576xf32>
    %c12_131 = arith.constant 12 : index
    %c0_132 = arith.constant 0 : index
    %180 = vector.load %arg11[%c12_131, %c0_132] : memref<108x576xf32, #tpu.memory_space<vmem>>, vector<4x576xf32>
    tpu.vector_store %arg11[%c12_131, %c0_132], %179 {strides = array<i32>} : memref<108x576xf32, #tpu.memory_space<vmem>>, vector<4x576xf32>,
    %c0_133 = arith.constant 0 : index
    %c256_134 = arith.constant 256 : index
    %181 = vector.load %arg10[%c0_133, %c256_134] : memref<4x1090xf32, #tpu.memory_space<vmem>>, vector<4x576xf32>
    %c4_135 = arith.constant 4 : index
    %c0_136 = arith.constant 0 : index
    %182 = vector.load %arg8[%c4_135, %c0_136] : memref<27x576xf32, #tpu.memory_space<vmem>>, vector<1x576xf32>
    %183 = vector.broadcast %182 : vector<1x576xf32> to vector<4x576xf32>
    %184 = arith.mulf %181, %183 : vector<4x576xf32>
    %c16_137 = arith.constant 16 : index
    %c0_138 = arith.constant 0 : index
    %185 = vector.load %arg11[%c16_137, %c0_138] : memref<108x576xf32, #tpu.memory_space<vmem>>, vector<4x576xf32>
    tpu.vector_store %arg11[%c16_137, %c0_138], %184 {strides = array<i32>} : memref<108x576xf32, #tpu.memory_space<vmem>>, vector<4x576xf32>,
    %c0_139 = arith.constant 0 : index
    %c320_140 = arith.constant 320 : index
    %186 = vector.load %arg10[%c0_139, %c320_140] : memref<4x1090xf32, #tpu.memory_space<vmem>>, vector<4x576xf32>
    %c5_141 = arith.constant 5 : index
    %c0_142 = arith.constant 0 : index
    %187 = vector.load %arg8[%c5_141, %c0_142] : memref<27x576xf32, #tpu.memory_space<vmem>>, vector<1x576xf32>
    %188 = vector.broadcast %187 : vector<1x576xf32> to vector<4x576xf32>
    %189 = arith.mulf %186, %188 : vector<4x576xf32>
    %c20_143 = arith.constant 20 : index
    %c0_144 = arith.constant 0 : index
    %190 = vector.load %arg11[%c20_143, %c0_144] : memref<108x576xf32, #tpu.memory_space<vmem>>, vector<4x576xf32>
    tpu.vector_store %arg11[%c20_143, %c0_144], %189 {strides = array<i32>} : memref<108x576xf32, #tpu.memory_space<vmem>>, vector<4x576xf32>,
    %c0_145 = arith.constant 0 : index
    %c384 = arith.constant 384 : index
    %191 = vector.load %arg10[%c0_145, %c384] : memref<4x1090xf32, #tpu.memory_space<vmem>>, vector<4x576xf32>
    %c6_146 = arith.constant 6 : index
    %c0_147 = arith.constant 0 : index
    %192 = vector.load %arg8[%c6_146, %c0_147] : memref<27x576xf32, #tpu.memory_space<vmem>>, vector<1x576xf32>
    %193 = vector.broadcast %192 : vector<1x576xf32> to vector<4x576xf32>
    %194 = arith.mulf %191, %193 : vector<4x576xf32>
    %c24_148 = arith.constant 24 : index
    %c0_149 = arith.constant 0 : index
    %195 = vector.load %arg11[%c24_148, %c0_149] : memref<108x576xf32, #tpu.memory_space<vmem>>, vector<4x576xf32>
    tpu.vector_store %arg11[%c24_148, %c0_149], %194 {strides = array<i32>} : memref<108x576xf32, #tpu.memory_space<vmem>>, vector<4x576xf32>,
    %c0_150 = arith.constant 0 : index
    %c448 = arith.constant 448 : index
    %196 = vector.load %arg10[%c0_150, %c448] : memref<4x1090xf32, #tpu.memory_space<vmem>>, vector<4x576xf32>
    %c7_151 = arith.constant 7 : index
    %c0_152 = arith.constant 0 : index
    %197 = vector.load %arg8[%c7_151, %c0_152] : memref<27x576xf32, #tpu.memory_space<vmem>>, vector<1x576xf32>
    %198 = vector.broadcast %197 : vector<1x576xf32> to vector<4x576xf32>
    %199 = arith.mulf %196, %198 : vector<4x576xf32>
    %c28_153 = arith.constant 28 : index
    %c0_154 = arith.constant 0 : index
    %200 = vector.load %arg11[%c28_153, %c0_154] : memref<108x576xf32, #tpu.memory_space<vmem>>, vector<4x576xf32>
    tpu.vector_store %arg11[%c28_153, %c0_154], %199 {strides = array<i32>} : memref<108x576xf32, #tpu.memory_space<vmem>>, vector<4x576xf32>,
    %c0_155 = arith.constant 0 : index
    %c512 = arith.constant 512 : index
    %201 = vector.load %arg10[%c0_155, %c512] : memref<4x1090xf32, #tpu.memory_space<vmem>>, vector<4x576xf32>
    %c8_156 = arith.constant 8 : index
    %c0_157 = arith.constant 0 : index
    %202 = vector.load %arg8[%c8_156, %c0_157] : memref<27x576xf32, #tpu.memory_space<vmem>>, vector<1x576xf32>
    %203 = vector.broadcast %202 : vector<1x576xf32> to vector<4x576xf32>
    %204 = arith.mulf %201, %203 : vector<4x576xf32>
    %c32_158 = arith.constant 32 : index
    %c0_159 = arith.constant 0 : index
    %205 = vector.load %arg11[%c32_158, %c0_159] : memref<108x576xf32, #tpu.memory_space<vmem>>, vector<4x576xf32>
    tpu.vector_store %arg11[%c32_158, %c0_159], %204 {strides = array<i32>} : memref<108x576xf32, #tpu.memory_space<vmem>>, vector<4x576xf32>,
    %c0_160 = arith.constant 0 : index
    %c1_161 = arith.constant 1 : index
    %206 = vector.load %arg10[%c0_160, %c1_161] : memref<4x1090xf32, #tpu.memory_space<vmem>>, vector<4x576xf32>
    %c9_162 = arith.constant 9 : index
    %c0_163 = arith.constant 0 : index
    %207 = vector.load %arg8[%c9_162, %c0_163] : memref<27x576xf32, #tpu.memory_space<vmem>>, vector<1x576xf32>
    %208 = vector.broadcast %207 : vector<1x576xf32> to vector<4x576xf32>
    %209 = arith.mulf %206, %208 : vector<4x576xf32>
    %c36_164 = arith.constant 36 : index
    %c0_165 = arith.constant 0 : index
    %210 = vector.load %arg11[%c36_164, %c0_165] : memref<108x576xf32, #tpu.memory_space<vmem>>, vector<4x576xf32>
    tpu.vector_store %arg11[%c36_164, %c0_165], %209 {strides = array<i32>} : memref<108x576xf32, #tpu.memory_space<vmem>>, vector<4x576xf32>,
    %c0_166 = arith.constant 0 : index
    %c65 = arith.constant 65 : index
    %211 = vector.load %arg10[%c0_166, %c65] : memref<4x1090xf32, #tpu.memory_space<vmem>>, vector<4x576xf32>
    %c10_167 = arith.constant 10 : index
    %c0_168 = arith.constant 0 : index
    %212 = vector.load %arg8[%c10_167, %c0_168] : memref<27x576xf32, #tpu.memory_space<vmem>>, vector<1x576xf32>
    %213 = vector.broadcast %212 : vector<1x576xf32> to vector<4x576xf32>
    %214 = arith.mulf %211, %213 : vector<4x576xf32>
    %c40_169 = arith.constant 40 : index
    %c0_170 = arith.constant 0 : index
    %215 = vector.load %arg11[%c40_169, %c0_170] : memref<108x576xf32, #tpu.memory_space<vmem>>, vector<4x576xf32>
    tpu.vector_store %arg11[%c40_169, %c0_170], %214 {strides = array<i32>} : memref<108x576xf32, #tpu.memory_space<vmem>>, vector<4x576xf32>,
    %c0_171 = arith.constant 0 : index
    %c129 = arith.constant 129 : index
    %216 = vector.load %arg10[%c0_171, %c129] : memref<4x1090xf32, #tpu.memory_space<vmem>>, vector<4x576xf32>
    %c11_172 = arith.constant 11 : index
    %c0_173 = arith.constant 0 : index
    %217 = vector.load %arg8[%c11_172, %c0_173] : memref<27x576xf32, #tpu.memory_space<vmem>>, vector<1x576xf32>
    %218 = vector.broadcast %217 : vector<1x576xf32> to vector<4x576xf32>
    %219 = arith.mulf %216, %218 : vector<4x576xf32>
    %c44_174 = arith.constant 44 : index
    %c0_175 = arith.constant 0 : index
    %220 = vector.load %arg11[%c44_174, %c0_175] : memref<108x576xf32, #tpu.memory_space<vmem>>, vector<4x576xf32>
    tpu.vector_store %arg11[%c44_174, %c0_175], %219 {strides = array<i32>} : memref<108x576xf32, #tpu.memory_space<vmem>>, vector<4x576xf32>,
    %c0_176 = arith.constant 0 : index
    %c193_177 = arith.constant 193 : index
    %221 = vector.load %arg10[%c0_176, %c193_177] : memref<4x1090xf32, #tpu.memory_space<vmem>>, vector<4x576xf32>
    %c12_178 = arith.constant 12 : index
    %c0_179 = arith.constant 0 : index
    %222 = vector.load %arg8[%c12_178, %c0_179] : memref<27x576xf32, #tpu.memory_space<vmem>>, vector<1x576xf32>
    %223 = vector.broadcast %222 : vector<1x576xf32> to vector<4x576xf32>
    %224 = arith.mulf %221, %223 : vector<4x576xf32>
    %c48_180 = arith.constant 48 : index
    %c0_181 = arith.constant 0 : index
    %225 = vector.load %arg11[%c48_180, %c0_181] : memref<108x576xf32, #tpu.memory_space<vmem>>, vector<4x576xf32>
    tpu.vector_store %arg11[%c48_180, %c0_181], %224 {strides = array<i32>} : memref<108x576xf32, #tpu.memory_space<vmem>>, vector<4x576xf32>,
    %c0_182 = arith.constant 0 : index
    %c257_183 = arith.constant 257 : index
    %226 = vector.load %arg10[%c0_182, %c257_183] : memref<4x1090xf32, #tpu.memory_space<vmem>>, vector<4x576xf32>
    %c13_184 = arith.constant 13 : index
    %c0_185 = arith.constant 0 : index
    %227 = vector.load %arg8[%c13_184, %c0_185] : memref<27x576xf32, #tpu.memory_space<vmem>>, vector<1x576xf32>
    %228 = vector.broadcast %227 : vector<1x576xf32> to vector<4x576xf32>
    %229 = arith.mulf %226, %228 : vector<4x576xf32>
    %c52_186 = arith.constant 52 : index
    %c0_187 = arith.constant 0 : index
    %230 = vector.load %arg11[%c52_186, %c0_187] : memref<108x576xf32, #tpu.memory_space<vmem>>, vector<4x576xf32>
    tpu.vector_store %arg11[%c52_186, %c0_187], %229 {strides = array<i32>} : memref<108x576xf32, #tpu.memory_space<vmem>>, vector<4x576xf32>,
    %c0_188 = arith.constant 0 : index
    %c321_189 = arith.constant 321 : index
    %231 = vector.load %arg10[%c0_188, %c321_189] : memref<4x1090xf32, #tpu.memory_space<vmem>>, vector<4x576xf32>
    %c14_190 = arith.constant 14 : index
    %c0_191 = arith.constant 0 : index
    %232 = vector.load %arg8[%c14_190, %c0_191] : memref<27x576xf32, #tpu.memory_space<vmem>>, vector<1x576xf32>
    %233 = vector.broadcast %232 : vector<1x576xf32> to vector<4x576xf32>
    %234 = arith.mulf %231, %233 : vector<4x576xf32>
    %c56_192 = arith.constant 56 : index
    %c0_193 = arith.constant 0 : index
    %235 = vector.load %arg11[%c56_192, %c0_193] : memref<108x576xf32, #tpu.memory_space<vmem>>, vector<4x576xf32>
    tpu.vector_store %arg11[%c56_192, %c0_193], %234 {strides = array<i32>} : memref<108x576xf32, #tpu.memory_space<vmem>>, vector<4x576xf32>,
    %c0_194 = arith.constant 0 : index
    %c385 = arith.constant 385 : index
    %236 = vector.load %arg10[%c0_194, %c385] : memref<4x1090xf32, #tpu.memory_space<vmem>>, vector<4x576xf32>
    %c15_195 = arith.constant 15 : index
    %c0_196 = arith.constant 0 : index
    %237 = vector.load %arg8[%c15_195, %c0_196] : memref<27x576xf32, #tpu.memory_space<vmem>>, vector<1x576xf32>
    %238 = vector.broadcast %237 : vector<1x576xf32> to vector<4x576xf32>
    %239 = arith.mulf %236, %238 : vector<4x576xf32>
    %c60_197 = arith.constant 60 : index
    %c0_198 = arith.constant 0 : index
    %240 = vector.load %arg11[%c60_197, %c0_198] : memref<108x576xf32, #tpu.memory_space<vmem>>, vector<4x576xf32>
    tpu.vector_store %arg11[%c60_197, %c0_198], %239 {strides = array<i32>} : memref<108x576xf32, #tpu.memory_space<vmem>>, vector<4x576xf32>,
    %c0_199 = arith.constant 0 : index
    %c449 = arith.constant 449 : index
    %241 = vector.load %arg10[%c0_199, %c449] : memref<4x1090xf32, #tpu.memory_space<vmem>>, vector<4x576xf32>
    %c16_200 = arith.constant 16 : index
    %c0_201 = arith.constant 0 : index
    %242 = vector.load %arg8[%c16_200, %c0_201] : memref<27x576xf32, #tpu.memory_space<vmem>>, vector<1x576xf32>
    %243 = vector.broadcast %242 : vector<1x576xf32> to vector<4x576xf32>
    %244 = arith.mulf %241, %243 : vector<4x576xf32>
    %c64_202 = arith.constant 64 : index
    %c0_203 = arith.constant 0 : index
    %245 = vector.load %arg11[%c64_202, %c0_203] : memref<108x576xf32, #tpu.memory_space<vmem>>, vector<4x576xf32>
    tpu.vector_store %arg11[%c64_202, %c0_203], %244 {strides = array<i32>} : memref<108x576xf32, #tpu.memory_space<vmem>>, vector<4x576xf32>,
    %c0_204 = arith.constant 0 : index
    %c513 = arith.constant 513 : index
    %246 = vector.load %arg10[%c0_204, %c513] : memref<4x1090xf32, #tpu.memory_space<vmem>>, vector<4x576xf32>
    %c17_205 = arith.constant 17 : index
    %c0_206 = arith.constant 0 : index
    %247 = vector.load %arg8[%c17_205, %c0_206] : memref<27x576xf32, #tpu.memory_space<vmem>>, vector<1x576xf32>
    %248 = vector.broadcast %247 : vector<1x576xf32> to vector<4x576xf32>
    %249 = arith.mulf %246, %248 : vector<4x576xf32>
    %c68_207 = arith.constant 68 : index
    %c0_208 = arith.constant 0 : index
    %250 = vector.load %arg11[%c68_207, %c0_208] : memref<108x576xf32, #tpu.memory_space<vmem>>, vector<4x576xf32>
    tpu.vector_store %arg11[%c68_207, %c0_208], %249 {strides = array<i32>} : memref<108x576xf32, #tpu.memory_space<vmem>>, vector<4x576xf32>,
    %c0_209 = arith.constant 0 : index
    %c2_210 = arith.constant 2 : index
    %251 = vector.load %arg10[%c0_209, %c2_210] : memref<4x1090xf32, #tpu.memory_space<vmem>>, vector<4x576xf32>
    %c18_211 = arith.constant 18 : index
    %c0_212 = arith.constant 0 : index
    %252 = vector.load %arg8[%c18_211, %c0_212] : memref<27x576xf32, #tpu.memory_space<vmem>>, vector<1x576xf32>
    %253 = vector.broadcast %252 : vector<1x576xf32> to vector<4x576xf32>
    %254 = arith.mulf %251, %253 : vector<4x576xf32>
    %c72_213 = arith.constant 72 : index
    %c0_214 = arith.constant 0 : index
    %255 = vector.load %arg11[%c72_213, %c0_214] : memref<108x576xf32, #tpu.memory_space<vmem>>, vector<4x576xf32>
    tpu.vector_store %arg11[%c72_213, %c0_214], %254 {strides = array<i32>} : memref<108x576xf32, #tpu.memory_space<vmem>>, vector<4x576xf32>,
    %c0_215 = arith.constant 0 : index
    %c66 = arith.constant 66 : index
    %256 = vector.load %arg10[%c0_215, %c66] : memref<4x1090xf32, #tpu.memory_space<vmem>>, vector<4x576xf32>
    %c19_216 = arith.constant 19 : index
    %c0_217 = arith.constant 0 : index
    %257 = vector.load %arg8[%c19_216, %c0_217] : memref<27x576xf32, #tpu.memory_space<vmem>>, vector<1x576xf32>
    %258 = vector.broadcast %257 : vector<1x576xf32> to vector<4x576xf32>
    %259 = arith.mulf %256, %258 : vector<4x576xf32>
    %c76_218 = arith.constant 76 : index
    %c0_219 = arith.constant 0 : index
    %260 = vector.load %arg11[%c76_218, %c0_219] : memref<108x576xf32, #tpu.memory_space<vmem>>, vector<4x576xf32>
    tpu.vector_store %arg11[%c76_218, %c0_219], %259 {strides = array<i32>} : memref<108x576xf32, #tpu.memory_space<vmem>>, vector<4x576xf32>,
    %c0_220 = arith.constant 0 : index
    %c130 = arith.constant 130 : index
    %261 = vector.load %arg10[%c0_220, %c130] : memref<4x1090xf32, #tpu.memory_space<vmem>>, vector<4x576xf32>
    %c20_221 = arith.constant 20 : index
    %c0_222 = arith.constant 0 : index
    %262 = vector.load %arg8[%c20_221, %c0_222] : memref<27x576xf32, #tpu.memory_space<vmem>>, vector<1x576xf32>
    %263 = vector.broadcast %262 : vector<1x576xf32> to vector<4x576xf32>
    %264 = arith.mulf %261, %263 : vector<4x576xf32>
    %c80_223 = arith.constant 80 : index
    %c0_224 = arith.constant 0 : index
    %265 = vector.load %arg11[%c80_223, %c0_224] : memref<108x576xf32, #tpu.memory_space<vmem>>, vector<4x576xf32>
    tpu.vector_store %arg11[%c80_223, %c0_224], %264 {strides = array<i32>} : memref<108x576xf32, #tpu.memory_space<vmem>>, vector<4x576xf32>,
    %c0_225 = arith.constant 0 : index
    %c194_226 = arith.constant 194 : index
    %266 = vector.load %arg10[%c0_225, %c194_226] : memref<4x1090xf32, #tpu.memory_space<vmem>>, vector<4x576xf32>
    %c21_227 = arith.constant 21 : index
    %c0_228 = arith.constant 0 : index
    %267 = vector.load %arg8[%c21_227, %c0_228] : memref<27x576xf32, #tpu.memory_space<vmem>>, vector<1x576xf32>
    %268 = vector.broadcast %267 : vector<1x576xf32> to vector<4x576xf32>
    %269 = arith.mulf %266, %268 : vector<4x576xf32>
    %c84_229 = arith.constant 84 : index
    %c0_230 = arith.constant 0 : index
    %270 = vector.load %arg11[%c84_229, %c0_230] : memref<108x576xf32, #tpu.memory_space<vmem>>, vector<4x576xf32>
    tpu.vector_store %arg11[%c84_229, %c0_230], %269 {strides = array<i32>} : memref<108x576xf32, #tpu.memory_space<vmem>>, vector<4x576xf32>,
    %c0_231 = arith.constant 0 : index
    %c258_232 = arith.constant 258 : index
    %271 = vector.load %arg10[%c0_231, %c258_232] : memref<4x1090xf32, #tpu.memory_space<vmem>>, vector<4x576xf32>
    %c22_233 = arith.constant 22 : index
    %c0_234 = arith.constant 0 : index
    %272 = vector.load %arg8[%c22_233, %c0_234] : memref<27x576xf32, #tpu.memory_space<vmem>>, vector<1x576xf32>
    %273 = vector.broadcast %272 : vector<1x576xf32> to vector<4x576xf32>
    %274 = arith.mulf %271, %273 : vector<4x576xf32>
    %c88_235 = arith.constant 88 : index
    %c0_236 = arith.constant 0 : index
    %275 = vector.load %arg11[%c88_235, %c0_236] : memref<108x576xf32, #tpu.memory_space<vmem>>, vector<4x576xf32>
    tpu.vector_store %arg11[%c88_235, %c0_236], %274 {strides = array<i32>} : memref<108x576xf32, #tpu.memory_space<vmem>>, vector<4x576xf32>,
    %c0_237 = arith.constant 0 : index
    %c322_238 = arith.constant 322 : index
    %276 = vector.load %arg10[%c0_237, %c322_238] : memref<4x1090xf32, #tpu.memory_space<vmem>>, vector<4x576xf32>
    %c23_239 = arith.constant 23 : index
    %c0_240 = arith.constant 0 : index
    %277 = vector.load %arg8[%c23_239, %c0_240] : memref<27x576xf32, #tpu.memory_space<vmem>>, vector<1x576xf32>
    %278 = vector.broadcast %277 : vector<1x576xf32> to vector<4x576xf32>
    %279 = arith.mulf %276, %278 : vector<4x576xf32>
    %c92_241 = arith.constant 92 : index
    %c0_242 = arith.constant 0 : index
    %280 = vector.load %arg11[%c92_241, %c0_242] : memref<108x576xf32, #tpu.memory_space<vmem>>, vector<4x576xf32>
    tpu.vector_store %arg11[%c92_241, %c0_242], %279 {strides = array<i32>} : memref<108x576xf32, #tpu.memory_space<vmem>>, vector<4x576xf32>,
    %c0_243 = arith.constant 0 : index
    %c386 = arith.constant 386 : index
    %281 = vector.load %arg10[%c0_243, %c386] : memref<4x1090xf32, #tpu.memory_space<vmem>>, vector<4x576xf32>
    %c24_244 = arith.constant 24 : index
    %c0_245 = arith.constant 0 : index
    %282 = vector.load %arg8[%c24_244, %c0_245] : memref<27x576xf32, #tpu.memory_space<vmem>>, vector<1x576xf32>
    %283 = vector.broadcast %282 : vector<1x576xf32> to vector<4x576xf32>
    %284 = arith.mulf %281, %283 : vector<4x576xf32>
    %c96_246 = arith.constant 96 : index
    %c0_247 = arith.constant 0 : index
    %285 = vector.load %arg11[%c96_246, %c0_247] : memref<108x576xf32, #tpu.memory_space<vmem>>, vector<4x576xf32>
    tpu.vector_store %arg11[%c96_246, %c0_247], %284 {strides = array<i32>} : memref<108x576xf32, #tpu.memory_space<vmem>>, vector<4x576xf32>,
    %c0_248 = arith.constant 0 : index
    %c450 = arith.constant 450 : index
    %286 = vector.load %arg10[%c0_248, %c450] : memref<4x1090xf32, #tpu.memory_space<vmem>>, vector<4x576xf32>
    %c25_249 = arith.constant 25 : index
    %c0_250 = arith.constant 0 : index
    %287 = vector.load %arg8[%c25_249, %c0_250] : memref<27x576xf32, #tpu.memory_space<vmem>>, vector<1x576xf32>
    %288 = vector.broadcast %287 : vector<1x576xf32> to vector<4x576xf32>
    %289 = arith.mulf %286, %288 : vector<4x576xf32>
    %c100_251 = arith.constant 100 : index
    %c0_252 = arith.constant 0 : index
    %290 = vector.load %arg11[%c100_251, %c0_252] : memref<108x576xf32, #tpu.memory_space<vmem>>, vector<4x576xf32>
    tpu.vector_store %arg11[%c100_251, %c0_252], %289 {strides = array<i32>} : memref<108x576xf32, #tpu.memory_space<vmem>>, vector<4x576xf32>,
    %c0_253 = arith.constant 0 : index
    %c514 = arith.constant 514 : index
    %291 = vector.load %arg10[%c0_253, %c514] : memref<4x1090xf32, #tpu.memory_space<vmem>>, vector<4x576xf32>
    %c26_254 = arith.constant 26 : index
    %c0_255 = arith.constant 0 : index
    %292 = vector.load %arg8[%c26_254, %c0_255] : memref<27x576xf32, #tpu.memory_space<vmem>>, vector<1x576xf32>
    %293 = vector.broadcast %292 : vector<1x576xf32> to vector<4x576xf32>
    %294 = arith.mulf %291, %293 : vector<4x576xf32>
    %c104_256 = arith.constant 104 : index
    %c0_257 = arith.constant 0 : index
    %295 = vector.load %arg11[%c104_256, %c0_257] : memref<108x576xf32, #tpu.memory_space<vmem>>, vector<4x576xf32>
    tpu.vector_store %arg11[%c104_256, %c0_257], %294 {strides = array<i32>} : memref<108x576xf32, #tpu.memory_space<vmem>>, vector<4x576xf32>,
    %c0_258 = arith.constant 0 : index
    %c0_259 = arith.constant 0 : index
    %296 = vector.load %arg5[%c0_258, %c0_259] : memref<4x108xf32, #tpu.memory_space<vmem>>, vector<4x108xf32>
    %c0_260 = arith.constant 0 : index
    %c0_261 = arith.constant 0 : index
    %297 = vector.load %arg11[%c0_260, %c0_261] : memref<108x576xf32, #tpu.memory_space<vmem>>, vector<108x576xf32>
    %cst_262 = arith.constant dense<0.000000e+00> : vector<4x576xf32>
    %298 = tpu.matmul %296, %297, %cst_262 {dimension_numbers = #tpu.dot_dimension_numbers<[1], [0], [0], [1], [0, 0, 1, 1], [], []>} : vector<4x108xf32>, vector<108x576xf32>, vector<4x576xf32> -> vector<4x576xf32>
    %c0_263 = arith.constant 0 : index
    %c0_264 = arith.constant 0 : index
    %299 = vector.load %arg6[%c0_263, %c0_264] : memref<4x1xf32, #tpu.memory_space<vmem>>, vector<4x1xf32>
    %300 = vector.broadcast %299 : vector<4x1xf32> to vector<4x576xf32>
    %301 = arith.addf %298, %300 : vector<4x576xf32>
    %302 = arith.addf %301, %5 : vector<4x576xf32>
    %c0_265 = arith.constant 0 : index
    %c0_266 = arith.constant 0 : index
    %c0_267 = arith.constant 0 : index
    %303 = vector.load %arg9[%c0_265, %c0_266, %c0_267] : memref<1x4x576xf32, #tpu.memory_space<vmem>>, vector<1x4x576xf32>
    %304 = vector.shape_cast %303 : vector<1x4x576xf32> to vector<4x576xf32>
    %305 = vector.shape_cast %302 : vector<4x576xf32> to vector<1x4x576xf32>
    tpu.vector_store %arg9[%c0_265, %c0_266, %c0_267], %305 {strides = array<i32>} : memref<1x4x576xf32, #tpu.memory_space<vmem>>, vector<1x4x576xf32>,
    return
  }
  func.func @transform_0(%arg0: i32) -> i32 {
    %c0_i32 = arith.constant 0 : i32
    %c0_i32_0 = arith.constant 0 : i32
    return %c0_i32 : i32
  }
  func.func @transform_1(%arg0: i32) -> (i32, i32, i32) {
    %c0_i32 = arith.constant 0 : i32
    %c0_i32_0 = arith.constant 0 : i32
    %c0_i32_1 = arith.constant 0 : i32
    return %arg0, %c0_i32, %c0_i32_0 : i32, i32, i32
  }
  func.func @transform_2(%arg0: i32) -> (i32, i32) {
    %c0_i32 = arith.constant 0 : i32
    %c0_i32_0 = arith.constant 0 : i32
    %c0_i32_1 = arith.constant 0 : i32
    return %c0_i32, %c0_i32_0 : i32, i32
  }
  func.func @transform_3(%arg0: i32) -> (i32, i32) {
    %c0_i32 = arith.constant 0 : i32
    %c0_i32_0 = arith.constant 0 : i32
    %c0_i32_1 = arith.constant 0 : i32
    return %c0_i32, %c0_i32_0 : i32, i32
  }
  func.func @transform_4(%arg0: i32) -> (i32, i32) {
    %c0_i32 = arith.constant 0 : i32
    %c0_i32_0 = arith.constant 0 : i32
    %c0_i32_1 = arith.constant 0 : i32
    return %c0_i32, %c0_i32_0 : i32, i32
  }
  func.func @transform_5(%arg0: i32) -> (i32, i32) {
    %c0_i32 = arith.constant 0 : i32
    %c0_i32_0 = arith.constant 0 : i32
    %c0_i32_1 = arith.constant 0 : i32
    return %c0_i32, %c0_i32_0 : i32, i32
  }
  func.func @transform_6(%arg0: i32) -> (i32, i32) {
    %c0_i32 = arith.constant 0 : i32
    %c0_i32_0 = arith.constant 0 : i32
    %c0_i32_1 = arith.constant 0 : i32
    return %c0_i32, %c0_i32_0 : i32, i32
  }
  func.func @transform_7(%arg0: i32) -> (i32, i32) {
    %c0_i32 = arith.constant 0 : i32
    %c0_i32_0 = arith.constant 0 : i32
    %c0_i32_1 = arith.constant 0 : i32
    return %c0_i32, %c0_i32_0 : i32, i32
  }
  func.func @transform_8(%arg0: i32) -> (i32, i32, i32) {
    %c0_i32 = arith.constant 0 : i32
    %c0_i32_0 = arith.constant 0 : i32
    %c0_i32_1 = arith.constant 0 : i32
    return %arg0, %c0_i32, %c0_i32_0 : i32, i32, i32
  }
}

</mosaic_0001>

<llo_original>
// kernel: res_block_sa_2d.1
$region0: #{res_block_sa_2d.1}
  #allocation0 [shape = 'u32[]', space=smem, size = 0x4, offset = 0x4, fixed_abs, tag = 'smem constant byte address 0x4 - core index']
  #allocation1 [shape = 'u32[144,128]{1,0:T(1,128)}', space=vmem, size = 0x12000, scoped, tag = 'internal scratch']
  #allocation2 [shape = 'f32[4,1090]{1,0:T(4,128)}', space=vmem, size = 0x4800, scoped, tag = 'scratch operand']
  #allocation3 [shape = 'f32[108,576]{1,0:T(8,128)}', space=vmem, size = 0x46000, scoped, tag = 'scratch operand']
  %s0 = inlined_call_operand.vmem [shape: f32[2], index: 0, kind: input, shape index: {}]
  %s1 = inlined_call_operand.vmem [shape: f32[2,4,576], index: 1, kind: input, shape index: {}]
  %s2 = inlined_call_operand.vmem [shape: f32[4,108], index: 2, kind: input, shape index: {}]
  %s3 = inlined_call_operand.vmem [shape: f32[4,1], index: 3, kind: input, shape index: {}]
  %s4 = inlined_call_operand.vmem [shape: f32[4,108], index: 4, kind: input, shape index: {}]
  %s5 = inlined_call_operand.vmem [shape: f32[4,1], index: 5, kind: input, shape index: {}]
  %s6 = inlined_call_operand.vmem [shape: f32[27,576], index: 6, kind: input, shape index: {}]
  %s7 = inlined_call_operand.vmem [shape: f32[27,576], index: 7, kind: input, shape index: {}]
  %s8 = inlined_call_operand.vmem [shape: f32[2,4,576], index: 8, kind: output, shape index: {}]
  %s9 = sld [smem:[#allocation0]]
  $region69: #{res_block_sa_2d.1} parent=0
    _
  %s11 = ssub.s32 1, %s9
  %s12 = scalar_select 0, %s11, %s9
  $region1: #{res_block_sa_2d.1} parent=0
    #allocation4 [shape = 'u8[512]{0}', space=smem, size = 0x200, scoped, tag = 'input window, operand 0, single buffered']
    #allocation5 [shape = 's32[2]{0}', space=sflag, size = 0x8, scoped, tag = 'scoped memory for res_block_sa_2d.1']
    %13 = vsyncpa [#allocation5], 0
    loop: start=0, step=1, limit=4
    $region2: #{res_block_sa_2d.1} parent=1 // loop_pre_header
      _
    $region3: #{res_block_sa_2d.1} parent=1 // loop_header
      %s15 = sphi 0, %s19
      %p16 = scmp.ge.s32.totalorder %s15, 4
      %s23 = sphi 0, %s23
      %s25 = sphi 0, %s23
      %s26 = sphi 0, %s25
      %s40 = sphi 0, %s26
      %s46 = sphi 0, %s48
      %s49 = sphi 0, %s46
      %s50 = sphi 0, %s49
      %s66 = sphi 0, %s50
      %s70 = sphi 0, %s70
      %s72 = sphi 0, %s70
      %s73 = sphi 0, %s72
      %s87 = sphi 0, %s73
      %s91 = sphi 0, %s91
      %s93 = sphi 0, %s91
      %s94 = sphi 0, %s93
      %s108 = sphi 0, %s94
      %s112 = sphi 0, %s112
      %s114 = sphi 0, %s112
      %s115 = sphi 0, %s114
      %s129 = sphi 0, %s115
      %s133 = sphi 0, %s133
      %s135 = sphi 0, %s133
      %s136 = sphi 0, %s135
      %s150 = sphi 0, %s136
      %s154 = sphi 0, %s154
      %s156 = sphi 0, %s154
      %s157 = sphi 0, %s156
      %s171 = sphi 0, %s157
      %s175 = sphi 0, %s175
      %s177 = sphi 0, %s175
      %s178 = sphi 0, %s177
      %s192 = sphi 0, %s178
      %s198 = sphi 0, %s200
      %s201 = sphi 0, %s198
      %s202 = sphi 0, %s201
      %s218 = sphi 0, %s202
    $region4: #{res_block_sa_2d.1} parent=1 // loop_header_branch
      %18 = sbr.rel (%p16) target = $region8
    $region5: #{res_block_sa_2d.1} parent=1 // loop_body
      %s20 = ssub.s32 %s15, 1
      %s21 = ssub.s32 %s15, 2
      %s22 = sadd.s32 %s15, 1
      %s24 = sadd.s32 %s23, 1
      %p27 = scmp.eq.s32.totalorder %s15, 1
      %p28 = scmp.ne.s32.totalorder %s23, %s25
      %p29 = scmp.eq.s32.totalorder %s15, 0
      %p30 = por %p28, %p29
      %p31 = scmp.ne.s32.totalorder %s23, %s25
      %p32 = scmp.eq.s32.totalorder %s20, 1
      %p33 = por %p31, %p32
      %p34 = scmp.ne.s32.totalorder %s25, %s26
      %p35 = scmp.eq.s32.totalorder %s20, 0
      %p36 = por %p34, %p35
      %p37 = scmp.ne.s32.totalorder %s25, %s26
      %p38 = scmp.eq.s32.totalorder %s21, 1
      %p39 = por %p37, %p38
      %p41 = scmp.ne.s32.totalorder %s26, %s40
      %p42 = scmp.eq.s32.totalorder %s21, 0
      %p43 = por %p41, %p42
      %s44 = ssub.s32 %s15, %s22
      %p45 = scmp.eq.s32.totalorder %s44, 0
      %s47 = sadd.s32 %s46, 1
      %s48 = scalar_select %p45, %s46, %s47
      %p51 = pneg %p45
      %p52 = scmp.eq.s32.totalorder %s15, 1
      %p53 = por %p51, %p52
      %p54 = scmp.ne.s32.totalorder %s46, %s49
      %p55 = scmp.eq.s32.totalorder %s15, 0
      %p56 = por %p54, %p55
      %p57 = scmp.ne.s32.totalorder %s46, %s49
      %p58 = scmp.eq.s32.totalorder %s20, 1
      %p59 = por %p57, %p58
      %p60 = scmp.ne.s32.totalorder %s49, %s50
      %p61 = scmp.eq.s32.totalorder %s20, 0
      %p62 = por %p60, %p61
      %p63 = scmp.ne.s32.totalorder %s49, %s50
      %p64 = scmp.eq.s32.totalorder %s21, 1
      %p65 = por %p63, %p64
      %p67 = scmp.ne.s32.totalorder %s50, %s66
      %p68 = scmp.eq.s32.totalorder %s21, 0
      %p69 = por %p67, %p68
      %s71 = sadd.s32 %s70, 1
      %p74 = scmp.eq.s32.totalorder %s15, 1
      %p75 = scmp.ne.s32.totalorder %s70, %s72
      %p76 = scmp.eq.s32.totalorder %s15, 0
      %p77 = por %p75, %p76
      %p78 = scmp.ne.s32.totalorder %s70, %s72
      %p79 = scmp.eq.s32.totalorder %s20, 1
      %p80 = por %p78, %p79
      %p81 = scmp.ne.s32.totalorder %s72, %s73
      %p82 = scmp.eq.s32.totalorder %s20, 0
      %p83 = por %p81, %p82
      %p84 = scmp.ne.s32.totalorder %s72, %s73
      %p85 = scmp.eq.s32.totalorder %s21, 1
      %p86 = por %p84, %p85
      %p88 = scmp.ne.s32.totalorder %s73, %s87
      %p89 = scmp.eq.s32.totalorder %s21, 0
      %p90 = por %p88, %p89
      %s92 = sadd.s32 %s91, 1
      %p95 = scmp.eq.s32.totalorder %s15, 1
      %p96 = scmp.ne.s32.totalorder %s91, %s93
      %p97 = scmp.eq.s32.totalorder %s15, 0
      %p98 = por %p96, %p97
      %p99 = scmp.ne.s32.totalorder %s91, %s93
      %p100 = scmp.eq.s32.totalorder %s20, 1
      %p101 = por %p99, %p100
      %p102 = scmp.ne.s32.totalorder %s93, %s94
      %p103 = scmp.eq.s32.totalorder %s20, 0
      %p104 = por %p102, %p103
      %p105 = scmp.ne.s32.totalorder %s93, %s94
      %p106 = scmp.eq.s32.totalorder %s21, 1
      %p107 = por %p105, %p106
      %p109 = scmp.ne.s32.totalorder %s94, %s108
      %p110 = scmp.eq.s32.totalorder %s21, 0
      %p111 = por %p109, %p110
      %s113 = sadd.s32 %s112, 1
      %p116 = scmp.eq.s32.totalorder %s15, 1
      %p117 = scmp.ne.s32.totalorder %s112, %s114
      %p118 = scmp.eq.s32.totalorder %s15, 0
      %p119 = por %p117, %p118
      %p120 = scmp.ne.s32.totalorder %s112, %s114
      %p121 = scmp.eq.s32.totalorder %s20, 1
      %p122 = por %p120, %p121
      %p123 = scmp.ne.s32.totalorder %s114, %s115
      %p124 = scmp.eq.s32.totalorder %s20, 0
      %p125 = por %p123, %p124
      %p126 = scmp.ne.s32.totalorder %s114, %s115
      %p127 = scmp.eq.s32.totalorder %s21, 1
      %p128 = por %p126, %p127
      %p130 = scmp.ne.s32.totalorder %s115, %s129
      %p131 = scmp.eq.s32.totalorder %s21, 0
      %p132 = por %p130, %p131
      %s134 = sadd.s32 %s133, 1
      %p137 = scmp.eq.s32.totalorder %s15, 1
      %p138 = scmp.ne.s32.totalorder %s133, %s135
      %p139 = scmp.eq.s32.totalorder %s15, 0
      %p140 = por %p138, %p139
      %p141 = scmp.ne.s32.totalorder %s133, %s135
      %p142 = scmp.eq.s32.totalorder %s20, 1
      %p143 = por %p141, %p142
      %p144 = scmp.ne.s32.totalorder %s135, %s136
      %p145 = scmp.eq.s32.totalorder %s20, 0
      %p146 = por %p144, %p145
      %p147 = scmp.ne.s32.totalorder %s135, %s136
      %p148 = scmp.eq.s32.totalorder %s21, 1
      %p149 = por %p147, %p148
      %p151 = scmp.ne.s32.totalorder %s136, %s150
      %p152 = scmp.eq.s32.totalorder %s21, 0
      %p153 = por %p151, %p152
      %s155 = sadd.s32 %s154, 1
      %p158 = scmp.eq.s32.totalorder %s15, 1
      %p159 = scmp.ne.s32.totalorder %s154, %s156
      %p160 = scmp.eq.s32.totalorder %s15, 0
      %p161 = por %p159, %p160
      %p162 = scmp.ne.s32.totalorder %s154, %s156
      %p163 = scmp.eq.s32.totalorder %s20, 1
      %p164 = por %p162, %p163
      %p165 = scmp.ne.s32.totalorder %s156, %s157
      %p166 = scmp.eq.s32.totalorder %s20, 0
      %p167 = por %p165, %p166
      %p168 = scmp.ne.s32.totalorder %s156, %s157
      %p169 = scmp.eq.s32.totalorder %s21, 1
      %p170 = por %p168, %p169
      %p172 = scmp.ne.s32.totalorder %s157, %s171
      %p173 = scmp.eq.s32.totalorder %s21, 0
      %p174 = por %p172, %p173
      %s176 = sadd.s32 %s175, 1
      %p179 = scmp.eq.s32.totalorder %s15, 1
      %p180 = scmp.ne.s32.totalorder %s175, %s177
      %p181 = scmp.eq.s32.totalorder %s15, 0
      %p182 = por %p180, %p181
      %p183 = scmp.ne.s32.totalorder %s175, %s177
      %p184 = scmp.eq.s32.totalorder %s20, 1
      %p185 = por %p183, %p184
      %p186 = scmp.ne.s32.totalorder %s177, %s178
      %p187 = scmp.eq.s32.totalorder %s20, 0
      %p188 = por %p186, %p187
      %p189 = scmp.ne.s32.totalorder %s177, %s178
      %p190 = scmp.eq.s32.totalorder %s21, 1
      %p191 = por %p189, %p190
      %p193 = scmp.ne.s32.totalorder %s178, %s192
      %p194 = scmp.eq.s32.totalorder %s21, 0
      %p195 = por %p193, %p194
      %s196 = ssub.s32 %s15, %s22
      %p197 = scmp.eq.s32.totalorder %s196, 0
      %s199 = sadd.s32 %s198, 1
      %s200 = scalar_select %p197, %s198, %s199
      %p203 = pneg %p197
      %p204 = scmp.eq.s32.totalorder %s15, 1
      %p205 = por %p203, %p204
      %p206 = scmp.ne.s32.totalorder %s198, %s201
      %p207 = scmp.eq.s32.totalorder %s15, 0
      %p208 = por %p206, %p207
      %p209 = scmp.ne.s32.totalorder %s198, %s201
      %p210 = scmp.eq.s32.totalorder %s20, 1
      %p211 = por %p209, %p210
      %p212 = scmp.ne.s32.totalorder %s201, %s202
      %p213 = scmp.eq.s32.totalorder %s20, 0
      %p214 = por %p212, %p213
      %p215 = scmp.ne.s32.totalorder %s201, %s202
      %p216 = scmp.eq.s32.totalorder %s21, 1
      %p217 = por %p215, %p216
      %p219 = scmp.ne.s32.totalorder %s202, %s218
      %p220 = scmp.eq.s32.totalorder %s21, 0
      %p221 = por %p219, %p220
      %p222 = scmp.le.s32.totalorder 1, %s15
      %p223 = scmp.lt.s32.totalorder %s15, 3
      %p224 = pnand %p222, %p223
      %p225 = pneg %p224
      // Predicated region
      $region9: #{res_block_sa_2d.1} parent=5 // pred_check
        _
      $region10: #{res_block_sa_2d.1} parent=5 // pred_check_branch
        %227 = sbr.rel (%p224) target = $region12
      $region11: #{res_block_sa_2d.1} parent=5 // pred_region
        %s228 = ssub.s32 %s15, 1
        // Predicated region
        $region13: #{res_block_sa_2d.1} parent=11 // pred_check
          %p229 = pneg %p36
        $region14: #{res_block_sa_2d.1} parent=11 // pred_check_branch
          %231 = sbr.rel (%p229) target = $region16
        $region15: #{res_block_sa_2d.1} parent=11 // pred_region
          %s233 = ssub.s32 16, 16
          %234 = vsyncadd [#allocation5], %s233
          %s236 = sshll.u32 %s0, 4
          %s237 = int_to_ptr.vmem [resolvable:$true] %s236
          %239 = dma.vmem_to_smem %s237, 16, [#allocation4], [#allocation5]
        $region16: #{res_block_sa_2d.1} parent=11 // pred_fallthru
          _
        // Predicated region
        $region17: #{res_block_sa_2d.1} parent=11 // pred_check
          %p240 = pneg %p83
        $region18: #{res_block_sa_2d.1} parent=11 // pred_check_branch
          %242 = sbr.rel (%p240) target = $region20
        $region19: #{res_block_sa_2d.1} parent=11 // pred_region
          _
        $region20: #{res_block_sa_2d.1} parent=11 // pred_fallthru
          _
        // Predicated region
        $region21: #{res_block_sa_2d.1} parent=11 // pred_check
          %p243 = pneg %p104
        $region22: #{res_block_sa_2d.1} parent=11 // pred_check_branch
          %245 = sbr.rel (%p243) target = $region24
        $region23: #{res_block_sa_2d.1} parent=11 // pred_region
          _
        $region24: #{res_block_sa_2d.1} parent=11 // pred_fallthru
          _
        // Predicated region
        $region25: #{res_block_sa_2d.1} parent=11 // pred_check
          %p246 = pneg %p125
        $region26: #{res_block_sa_2d.1} parent=11 // pred_check_branch
          %248 = sbr.rel (%p246) target = $region28
        $region27: #{res_block_sa_2d.1} parent=11 // pred_region
          _
        $region28: #{res_block_sa_2d.1} parent=11 // pred_fallthru
          _
        // Predicated region
        $region29: #{res_block_sa_2d.1} parent=11 // pred_check
          %p249 = pneg %p146
        $region30: #{res_block_sa_2d.1} parent=11 // pred_check_branch
          %251 = sbr.rel (%p249) target = $region32
        $region31: #{res_block_sa_2d.1} parent=11 // pred_region
          _
        $region32: #{res_block_sa_2d.1} parent=11 // pred_fallthru
          _
        // Predicated region
        $region33: #{res_block_sa_2d.1} parent=11 // pred_check
          %p252 = pneg %p167
        $region34: #{res_block_sa_2d.1} parent=11 // pred_check_branch
          %254 = sbr.rel (%p252) target = $region36
        $region35: #{res_block_sa_2d.1} parent=11 // pred_region
          _
        $region36: #{res_block_sa_2d.1} parent=11 // pred_fallthru
          _
        // Predicated region
        $region37: #{res_block_sa_2d.1} parent=11 // pred_check
          %p255 = pneg %p188
        $region38: #{res_block_sa_2d.1} parent=11 // pred_check_branch
          %257 = sbr.rel (%p255) target = $region40
        $region39: #{res_block_sa_2d.1} parent=11 // pred_region
          _
        $region40: #{res_block_sa_2d.1} parent=11 // pred_fallthru
          _
      $region12: #{res_block_sa_2d.1} parent=5 // pred_fallthru
        _
      %p258 = scmp.lt.s32.totalorder %s15, 2
      // Predicated region
      $region41: #{res_block_sa_2d.1} parent=5 // pred_check
        %p259 = pneg %p258
      $region42: #{res_block_sa_2d.1} parent=5 // pred_check_branch
        %261 = sbr.rel (%p259) target = $region44
      $region43: #{res_block_sa_2d.1} parent=5 // pred_region
        // Predicated region
        $region45: #{res_block_sa_2d.1} parent=43 // pred_check
          %p262 = pneg %p56
        $region46: #{res_block_sa_2d.1} parent=43 // pred_check_branch
          %264 = sbr.rel (%p262) target = $region48
        $region47: #{res_block_sa_2d.1} parent=43 // pred_region
          %p265 = scmp.lt.s32.totalorder %s15, 1
          %s266 = scalar_select %p265, %s15, 1
          %s267 = smul.addr %s266, 5
          %s268 = smul.addr %s267, 4
          %s269 = scalar_lea.vmem %s1, %s268
        $region48: #{res_block_sa_2d.1} parent=43 // pred_fallthru
          _
      $region44: #{res_block_sa_2d.1} parent=5 // pred_fallthru
        _
      %p270 = scmp.le.s32.totalorder 1, %s15
      %p271 = scmp.lt.s32.totalorder %s15, 3
      %p272 = pnand %p270, %p271
      %p273 = pneg %p272
      // Predicated region
      $region49: #{res_block_sa_2d.1} parent=5 // pred_check
        _
      $region50: #{res_block_sa_2d.1} parent=5 // pred_check_branch
        %275 = sbr.rel (%p272) target = $region52
      $region51: #{res_block_sa_2d.1} parent=5 // pred_region
        %s276 = ssub.s32 %s15, 1
        // Predicated region
        $region53: #{res_block_sa_2d.1} parent=51 // pred_check
          %p277 = pneg %p36
        $region54: #{res_block_sa_2d.1} parent=51 // pred_check_branch
          %279 = sbr.rel (%p277) target = $region56
        $region55: #{res_block_sa_2d.1} parent=51 // pred_region
          %280 = dma.done [#allocation5], 16
        $region56: #{res_block_sa_2d.1} parent=51 // pred_fallthru
          _
        %281 = sfence
        %p282 = pneg %p36
        %p283 = pneg %p33
        %p284 = scmp.lt.s32.totalorder %s20, 1
        %s285 = scalar_select %p284, %s20, 1
        %s286 = smul.addr %s285, 5
        %s287 = smul.addr %s286, 4
        %s288 = scalar_lea.vmem %s1, %s287
        %p289 = pneg %p62
        %p290 = pneg %p59
        %p291 = pneg %p83
        %p292 = pneg %p80
        %p293 = pneg %p104
        %p294 = pneg %p101
        %p295 = pneg %p125
        %p296 = pneg %p122
        %p297 = pneg %p146
        %p298 = pneg %p143
        %p299 = pneg %p167
        %p300 = pneg %p164
        %p301 = pneg %p188
        %p302 = pneg %p185
        %p303 = pneg %p214
        %p304 = pneg %p211
        %p305 = scmp.lt.s32.totalorder %s20, 1
        %s306 = scalar_select %p305, %s20, 1
        %s307 = smul.addr %s306, 5
        %s308 = smul.addr %s307, 4
        %s309 = scalar_lea.vmem %s8, %s308
        %p310 = scmp.lt.s32.totalorder %s20, 1
        %s311 = scalar_select %p310, %s20, 1
        %s312 = smul.addr %s311, 5
        %s313 = smul.addr %s312, 4
        %s314 = scalar_lea.vmem %s1, %s313
        %p315 = scmp.lt.s32.totalorder %s20, 1
        %s316 = scalar_select %p315, %s20, 1
        %s317 = smul.addr %s316, 5
        %s318 = smul.addr %s317, 4
        %s319 = scalar_lea.vmem %s8, %s318
        %320 = vst [vmem:[#allocation2] sm:$0xff] 0.0
        %vm321 = vcmask 3072
        %322 = vst.msk [vmem:[#allocation2 + $0x8] sm:$0xf] %vm321, 0.0
        %vm323 = vcmask 1043976
        %vm324 = vcmask 1047556
        %vm325 = vmor %vm324, %vm323
        %326 = vst.msk [vmem:[#allocation2 + $0x18] sm:$0xff] %vm325, 0.0
        %vm327 = vcmask 535552
        %328 = vst.msk [vmem:[#allocation2 + $0x20] sm:$0xf] %vm327, 0.0
        %v329 = vld [vmem:[%s314] sm:$0xff]
        %v330 = vld [vmem:[%s314 + $0x8] sm:$0xff]
        %v331 = vld [vmem:[%s314 + $0x10] sm:$0xf]
        %vm332 = vcmp.gt.f32.partialorder %v329, 0.0
        %vm333 = vcmp.gt.f32.partialorder %v330, 0.0
        %vm334 = vcmp.gt.f32.partialorder %v331, 0.0
        %s335 = sld [smem:[#allocation4]]
        %v336 = vstv %s335
        %v337 = vmul.f32 %v336, %v329
        %v338 = vmul.f32 %v336, %v330
        %v339 = vmul.f32 %v336, %v331
        %v340 = vsel %vm332, %v329, %v337
        %v341 = vsel %vm333, %v330, %v338
        %v342 = vsel %vm334, %v331, %v339
        %346 = vrot.lane.b32.xlu0 %v340, 1
        %v347 = vpop.permute.xlu0 %346
        %348 = vrot.lane.b32.xlu0 %v341, 1
        %v349 = vpop.permute.xlu0 %348
        %350 = vrot.lane.b32.xlu0 %v342, 1
        %v351 = vpop.permute.xlu0 %350
        %v352 = vrot.slane %v347, 4
        %v353 = vrot.slane %v349, 4
        %vm354 = vcmask 7168
        %v355 = vsel %vm354, %v352, %v347
        %vm356 = vcmask 1043456
        %v357 = vsel %vm356, %v352, %v353
        %v358 = vsel %vm354, %v357, %v349
        %v359 = vsel %vm354, %v353, %v351
        %vm363 = vcmask 1043464
        %vm364 = vmor %vm324, %vm363
        %365 = vst.msk [vmem:[#allocation2 + $0x8] sm:$0xff] %vm364, %v355
        %366 = vst [vmem:[#allocation2 + $0x10] sm:$0xff] %v358
        %vm367 = vcmask 527360
        %368 = vst.msk [vmem:[#allocation2 + $0x18] sm:$0xf] %vm367, %v359
        %v369 = vld [vmem:[#allocation2 + $0x4] sm:$0xff]
        %v370 = vld [vmem:[#allocation2 + $0xc] sm:$0xff]
        %v371 = vld [vmem:[#allocation2 + $0x14] sm:$0xf]
        %v372 = vld [vmem:[%s6] ss:$8 sm:$0xf]
        %v373 = vld [vmem:[%s6] ss:$8 sm:$0x10]
        %v374 = vor.u32 %v372, %v373
        %v376 = vlaneseq
        %v377 = vshrl.u32 %v376, 7
        %v378 = vsub.s32 0, %v377
        %v379 = vrot.slane %v374, %v378
        %v380 = vlaneseq
        %v381 = vshrl.u32 %v380, 7
        %v382 = vsub.s32 1, %v381
        %v383 = vrot.slane %v374, %v382
        %v384 = vlaneseq
        %v385 = vshrl.u32 %v384, 7
        %v386 = vsub.s32 2, %v385
        %v387 = vrot.slane %v374, %v386
        %v388 = vlaneseq
        %v389 = vshrl.u32 %v388, 7
        %v390 = vsub.s32 3, %v389
        %v391 = vrot.slane %v374, %v390
        %v392 = vlaneseq
        %v393 = vshrl.u32 %v392, 7
        %v394 = vsub.s32 4, %v393
        %v395 = vrot.slane %v374, %v394
        %v396 = vcombine.low %v379, %v383
        %v397 = vcombine.low %v387, %v391
        %398 = vrot.lane.b32.xlu0 %v396, 56
        %v399 = vpop.permute.xlu0 %398
        %400 = vrot.lane.b32.xlu0 %v397, 56
        %v401 = vpop.permute.xlu0 %400
        %402 = vrot.lane.b32.xlu0 %v395, 56
        %v403 = vpop.permute.xlu0 %402
        %v404 = vrot.slane %v399, 4
        %v405 = vrot.slane %v401, 4
        %vm406 = vcmask 457728
        %v407 = vsel %vm406, %v404, %v399
        %v408 = vsel %vm356, %v404, %v405
        %v409 = vsel %vm406, %v408, %v401
        %v410 = vsel %vm406, %v405, %v403
        %v414 = vmul.f32 %v369, %v407
        %v415 = vmul.f32 %v370, %v409
        %v416 = vmul.f32 %v371, %v410
        %v420 = vcombine.high %v414, %v414
        %v421 = vcombine.high %v415, %v415
        %422 = vrot.lane.b32.xlu0 %v414, 72
        %v423 = vpop.permute.xlu0 %422
        %424 = vrot.lane.b32.xlu0 %v420, 72
        %v425 = vpop.permute.xlu0 %424
        %426 = vrot.lane.b32.xlu0 %v415, 72
        %v427 = vpop.permute.xlu0 %426
        %428 = vrot.lane.b32.xlu0 %v421, 72
        %v429 = vpop.permute.xlu0 %428
        %430 = vrot.lane.b32.xlu0 %v416, 72
        %v431 = vpop.permute.xlu0 %430
        %vm432 = vcmask 588800
        %v433 = vsel %vm432, %v423, %v425
        %v434 = vsel %vm432, %v425, %v427
        %v435 = vsel %vm432, %v427, %v429
        %v436 = vsel %vm432, %v429, %v431
        %442 = vst [vmem:[#allocation3] sm:$0xf] %v433
        %443 = vst [vmem:[#allocation3 + $0x8] sm:$0xf] %v434
        %444 = vst [vmem:[#allocation3 + $0x10] sm:$0xf] %v435
        %445 = vst [vmem:[#allocation3 + $0x18] sm:$0xf] %v436
        %vm446 = vcmask 519168
        %447 = vst.msk [vmem:[#allocation3 + $0x20] sm:$0xf] %vm446, %v431
        %v448 = vld [vmem:[#allocation2 + $0x4] sm:$0xff]
        %v449 = vld [vmem:[#allocation2 + $0xc] sm:$0xff]
        %v450 = vld [vmem:[#allocation2 + $0x14] sm:$0xf]
        %s451 = scalar_lea.vmem %s6, 1
        %v452 = vld [vmem:[%s451] ss:$8 sm:$0xf]
        %v453 = vld [vmem:[%s451] ss:$8 sm:$0x10]
        %v454 = vor.u32 %v452, %v453
        %v456 = vlaneseq
        %v457 = vshrl.u32 %v456, 7
        %v458 = vsub.s32 0, %v457
        %v459 = vrot.slane %v454, %v458
        %v460 = vlaneseq
        %v461 = vshrl.u32 %v460, 7
        %v462 = vsub.s32 1, %v461
        %v463 = vrot.slane %v454, %v462
        %v464 = vlaneseq
        %v465 = vshrl.u32 %v464, 7
        %v466 = vsub.s32 2, %v465
        %v467 = vrot.slane %v454, %v466
        %v468 = vlaneseq
        %v469 = vshrl.u32 %v468, 7
        %v470 = vsub.s32 3, %v469
        %v471 = vrot.slane %v454, %v470
        %v472 = vlaneseq
        %v473 = vshrl.u32 %v472, 7
        %v474 = vsub.s32 4, %v473
        %v475 = vrot.slane %v454, %v474
        %v476 = vcombine.low %v459, %v463
        %v477 = vcombine.low %v467, %v471
        %478 = vrot.lane.b32.xlu0 %v476, 57
        %v479 = vpop.permute.xlu0 %478
        %480 = vrot.lane.b32.xlu0 %v477, 57
        %v481 = vpop.permute.xlu0 %480
        %482 = vrot.lane.b32.xlu0 %v475, 57
        %v483 = vpop.permute.xlu0 %482
        %v484 = vrot.slane %v479, 4
        %v485 = vrot.slane %v481, 4
        %vm486 = vcmask 465920
        %v487 = vsel %vm486, %v484, %v479
        %v488 = vsel %vm356, %v484, %v485
        %v489 = vsel %vm486, %v488, %v481
        %v490 = vsel %vm486, %v485, %v483
        %v494 = vmul.f32 %v448, %v487
        %v495 = vmul.f32 %v449, %v489
        %v496 = vmul.f32 %v450, %v490
        %v500 = vcombine.low %v494, %v494
        %v501 = vcombine.low %v495, %v495
        %v502 = vcombine.low %v496, %v496
        %503 = vrot.lane.b32.xlu0 %v500, 71
        %v504 = vpop.permute.xlu0 %503
        %505 = vrot.lane.b32.xlu0 %v494, 71
        %v506 = vpop.permute.xlu0 %505
        %507 = vrot.lane.b32.xlu0 %v501, 71
        %v508 = vpop.permute.xlu0 %507
        %509 = vrot.lane.b32.xlu0 %v495, 71
        %v510 = vpop.permute.xlu0 %509
        %511 = vrot.lane.b32.xlu0 %v502, 71
        %v512 = vpop.permute.xlu0 %511
        %vm513 = vcmask 580608
        %v514 = vsel %vm513, %v504, %v506
        %v515 = vsel %vm513, %v506, %v508
        %v516 = vsel %vm513, %v508, %v510
        %v517 = vsel %vm513, %v510, %v512
        %523 = vst [vmem:[#allocation3] sm:$0xf0] %v514
        %524 = vst [vmem:[#allocation3 + $0x8] sm:$0xf0] %v515
        %525 = vst [vmem:[#allocation3 + $0x10] sm:$0xf0] %v516
        %526 = vst [vmem:[#allocation3 + $0x18] sm:$0xf0] %v517
        %vm527 = vcmask 523268
        %528 = vst.msk [vmem:[#allocation3 + $0x20] sm:$0xf0] %vm527, %v512
        %v529 = vld [vmem:[#allocation2 + $0x4] sm:$0xff]
        %v530 = vld [vmem:[#allocation2 + $0xc] sm:$0xff]
        %v531 = vld [vmem:[#allocation2 + $0x14] sm:$0xf]
        %s532 = scalar_lea.vmem %s6, 2
        %v533 = vld [vmem:[%s532] ss:$8 sm:$0xf]
        %v534 = vld [vmem:[%s532] ss:$8 sm:$0x10]
        %v535 = vor.u32 %v533, %v534
        %v537 = vlaneseq
        %v538 = vshrl.u32 %v537, 7
        %v539 = vsub.s32 0, %v538
        %v540 = vrot.slane %v535, %v539
        %v541 = vlaneseq
        %v542 = vshrl.u32 %v541, 7
        %v543 = vsub.s32 1, %v542
        %v544 = vrot.slane %v535, %v543
        %v545 = vlaneseq
        %v546 = vshrl.u32 %v545, 7
        %v547 = vsub.s32 2, %v546
        %v548 = vrot.slane %v535, %v547
        %v549 = vlaneseq
        %v550 = vshrl.u32 %v549, 7
        %v551 = vsub.s32 3, %v550
        %v552 = vrot.slane %v535, %v551
        %v553 = vlaneseq
        %v554 = vshrl.u32 %v553, 7
        %v555 = vsub.s32 4, %v554
        %v556 = vrot.slane %v535, %v555
        %v557 = vcombine.low %v540, %v544
        %v558 = vcombine.low %v548, %v552
        %559 = vrot.lane.b32.xlu0 %v557, 58
        %v560 = vpop.permute.xlu0 %559
        %561 = vrot.lane.b32.xlu0 %v558, 58
        %v562 = vpop.permute.xlu0 %561
        %563 = vrot.lane.b32.xlu0 %v556, 58
        %v564 = vpop.permute.xlu0 %563
        %v565 = vrot.slane %v560, 4
        %v566 = vrot.slane %v562, 4
        %vm567 = vcmask 474112
        %v568 = vsel %vm567, %v565, %v560
        %v569 = vsel %vm356, %v565, %v566
        %v570 = vsel %vm567, %v569, %v562
        %v571 = vsel %vm567, %v566, %v564
        %v575 = vmul.f32 %v529, %v568
        %v576 = vmul.f32 %v530, %v570
        %v577 = vmul.f32 %v531, %v571
        %v581 = vcombine.high %v575, %v575
        %v582 = vcombine.high %v576, %v576
        %583 = vrot.lane.b32.xlu0 %v575, 70
        %v584 = vpop.permute.xlu0 %583
        %585 = vrot.lane.b32.xlu0 %v581, 70
        %v586 = vpop.permute.xlu0 %585
        %587 = vrot.lane.b32.xlu0 %v576, 70
        %v588 = vpop.permute.xlu0 %587
        %589 = vrot.lane.b32.xlu0 %v582, 70
        %v590 = vpop.permute.xlu0 %589
        %591 = vrot.lane.b32.xlu0 %v577, 70
        %v592 = vpop.permute.xlu0 %591
        %vm593 = vcmask 572416
        %v594 = vsel %vm593, %v584, %v586
        %v595 = vsel %vm593, %v586, %v588
        %v596 = vsel %vm593, %v588, %v590
        %v597 = vsel %vm593, %v590, %v592
        %603 = vst [vmem:[#allocation3 + $0x28] sm:$0xf] %v594
        %604 = vst [vmem:[#allocation3 + $0x30] sm:$0xf] %v595
        %605 = vst [vmem:[#allocation3 + $0x38] sm:$0xf] %v596
        %606 = vst [vmem:[#allocation3 + $0x40] sm:$0xf] %v597
        %607 = vst.msk [vmem:[#allocation3 + $0x48] sm:$0xf] %vm446, %v592
        %v608 = vld [vmem:[#allocation2 + $0x4] sm:$0xff]
        %v609 = vld [vmem:[#allocation2 + $0xc] sm:$0xff]
        %v610 = vld [vmem:[#allocation2 + $0x14] sm:$0xf]
        %s611 = scalar_lea.vmem %s6, 3
        %v612 = vld [vmem:[%s611] ss:$8 sm:$0xf]
        %v613 = vld [vmem:[%s611] ss:$8 sm:$0x10]
        %v614 = vor.u32 %v612, %v613
        %v616 = vlaneseq
        %v617 = vshrl.u32 %v616, 7
        %v618 = vsub.s32 0, %v617
        %v619 = vrot.slane %v614, %v618
        %v620 = vlaneseq
        %v621 = vshrl.u32 %v620, 7
        %v622 = vsub.s32 1, %v621
        %v623 = vrot.slane %v614, %v622
        %v624 = vlaneseq
        %v625 = vshrl.u32 %v624, 7
        %v626 = vsub.s32 2, %v625
        %v627 = vrot.slane %v614, %v626
        %v628 = vlaneseq
        %v629 = vshrl.u32 %v628, 7
        %v630 = vsub.s32 3, %v629
        %v631 = vrot.slane %v614, %v630
        %v632 = vlaneseq
        %v633 = vshrl.u32 %v632, 7
        %v634 = vsub.s32 4, %v633
        %v635 = vrot.slane %v614, %v634
        %v636 = vcombine.low %v619, %v623
        %v637 = vcombine.low %v627, %v631
        %638 = vrot.lane.b32.xlu0 %v636, 64
        %v639 = vpop.permute.xlu0 %638
        %640 = vrot.lane.b32.xlu0 %v637, 64
        %v641 = vpop.permute.xlu0 %640
        %642 = vrot.lane.b32.xlu0 %v635, 64
        %v643 = vpop.permute.xlu0 %642
        %v644 = vrot.slane %v639, 4
        %v645 = vrot.slane %v641, 4
        %vm646 = vcmask 523264
        %v647 = vsel %vm646, %v644, %v639
        %v648 = vsel %vm356, %v644, %v645
        %v649 = vsel %vm646, %v648, %v641
        %v650 = vsel %vm646, %v645, %v643
        %v654 = vmul.f32 %v608, %v647
        %v655 = vmul.f32 %v609, %v649
        %v656 = vmul.f32 %v610, %v650
        %v660 = vcombine.low %v654, %v654
        %v661 = vcombine.low %v655, %v655
        %v662 = vcombine.low %v656, %v656
        %663 = vrot.lane.b32.xlu0 %v660, 64
        %v664 = vpop.permute.xlu0 %663
        %665 = vrot.lane.b32.xlu0 %v654, 64
        %v666 = vpop.permute.xlu0 %665
        %667 = vrot.lane.b32.xlu0 %v661, 64
        %v668 = vpop.permute.xlu0 %667
        %669 = vrot.lane.b32.xlu0 %v655, 64
        %v670 = vpop.permute.xlu0 %669
        %671 = vrot.lane.b32.xlu0 %v662, 64
        %v672 = vpop.permute.xlu0 %671
        %v673 = vsel %vm646, %v664, %v666
        %v674 = vsel %vm646, %v666, %v668
        %v675 = vsel %vm646, %v668, %v670
        %v676 = vsel %vm646, %v670, %v672
        %682 = vst [vmem:[#allocation3 + $0x28] sm:$0xf0] %v673
        %683 = vst [vmem:[#allocation3 + $0x30] sm:$0xf0] %v674
        %684 = vst [vmem:[#allocation3 + $0x38] sm:$0xf0] %v675
        %685 = vst [vmem:[#allocation3 + $0x40] sm:$0xf0] %v676
        %686 = vst.msk [vmem:[#allocation3 + $0x48] sm:$0xf0] %vm527, %v672
        %v687 = vld [vmem:[#allocation2 + $0x4] sm:$0xff]
        %v688 = vld [vmem:[#allocation2 + $0xc] sm:$0xff]
        %v689 = vld [vmem:[#allocation2 + $0x14] sm:$0xff]
        %s690 = scalar_lea.vmem %s6, 4
        %v691 = vld [vmem:[%s690] ss:$8 sm:$0xf]
        %v692 = vld [vmem:[%s690] ss:$8 sm:$0x10]
        %v693 = vor.u32 %v691, %v692
        %v695 = vlaneseq
        %v696 = vshrl.u32 %v695, 7
        %v697 = vsub.s32 0, %v696
        %v698 = vrot.slane %v693, %v697
        %v699 = vlaneseq
        %v700 = vshrl.u32 %v699, 7
        %v701 = vsub.s32 1, %v700
        %v702 = vrot.slane %v693, %v701
        %v703 = vlaneseq
        %v704 = vshrl.u32 %v703, 7
        %v705 = vsub.s32 2, %v704
        %v706 = vrot.slane %v693, %v705
        %v707 = vlaneseq
        %v708 = vshrl.u32 %v707, 7
        %v709 = vsub.s32 3, %v708
        %v710 = vrot.slane %v693, %v709
        %v711 = vlaneseq
        %v712 = vshrl.u32 %v711, 7
        %v713 = vsub.s32 4, %v712
        %v714 = vrot.slane %v693, %v713
        %v715 = vcombine.low %v698, %v702
        %v716 = vcombine.low %v706, %v710
        %717 = vrot.lane.b32.xlu0 %v715, 65
        %v718 = vpop.permute.xlu0 %717
        %719 = vrot.lane.b32.xlu0 %v716, 65
        %v720 = vpop.permute.xlu0 %719
        %721 = vrot.lane.b32.xlu0 %v714, 65
        %v722 = vpop.permute.xlu0 %721
        %v723 = vrot.slane %v718, 4
        %v724 = vrot.slane %v720, 4
        %v725 = vrot.slane %v722, 4
        %vm726 = vcmask 531456
        %v727 = vsel %vm726, %v723, %v718
        %v728 = vsel %vm356, %v723, %v724
        %v729 = vsel %vm726, %v728, %v720
        %v730 = vsel %vm356, %v724, %v725
        %v731 = vsel %vm726, %v730, %v722
        %v735 = vmul.f32 %v687, %v727
        %v736 = vmul.f32 %v688, %v729
        %v737 = vmul.f32 %v689, %v731
        %v741 = vcombine.high %v735, %v735
        %v742 = vcombine.high %v736, %v736
        %v743 = vcombine.high %v737, %v737
        %744 = vrot.lane.b32.xlu0 %v735, 63
        %v745 = vpop.permute.xlu0 %744
        %746 = vrot.lane.b32.xlu0 %v741, 63
        %v747 = vpop.permute.xlu0 %746
        %748 = vrot.lane.b32.xlu0 %v736, 63
        %v749 = vpop.permute.xlu0 %748
        %750 = vrot.lane.b32.xlu0 %v742, 63
        %v751 = vpop.permute.xlu0 %750
        %752 = vrot.lane.b32.xlu0 %v737, 63
        %v753 = vpop.permute.xlu0 %752
        %754 = vrot.lane.b32.xlu0 %v743, 63
        %v755 = vpop.permute.xlu0 %754
        %vm756 = vcmask 515072
        %v757 = vsel %vm756, %v745, %v747
        %v758 = vsel %vm756, %v747, %v749
        %v759 = vsel %vm756, %v749, %v751
        %v760 = vsel %vm756, %v751, %v753
        %v761 = vsel %vm756, %v753, %v755
        %767 = vst [vmem:[#allocation3 + $0x50] sm:$0xf] %v757
        %768 = vst [vmem:[#allocation3 + $0x58] sm:$0xf] %v758
        %769 = vst [vmem:[#allocation3 + $0x60] sm:$0xf] %v759
        %770 = vst [vmem:[#allocation3 + $0x68] sm:$0xf] %v760
        %771 = vst.msk [vmem:[#allocation3 + $0x70] sm:$0xf] %vm446, %v761
        %v772 = vld [vmem:[#allocation2 + $0x4] sm:$0xff]
        %v773 = vld [vmem:[#allocation2 + $0xc] sm:$0xff]
        %v774 = vld [vmem:[#allocation2 + $0x14] sm:$0xff]
        %s775 = scalar_lea.vmem %s6, 5
        %v776 = vld [vmem:[%s775] ss:$8 sm:$0xf]
        %v777 = vld [vmem:[%s775] ss:$8 sm:$0x10]
        %v778 = vor.u32 %v776, %v777
        %v780 = vlaneseq
        %v781 = vshrl.u32 %v780, 7
        %v782 = vsub.s32 0, %v781
        %v783 = vrot.slane %v778, %v782
        %v784 = vlaneseq
        %v785 = vshrl.u32 %v784, 7
        %v786 = vsub.s32 1, %v785
        %v787 = vrot.slane %v778, %v786
        %v788 = vlaneseq
        %v789 = vshrl.u32 %v788, 7
        %v790 = vsub.s32 2, %v789
        %v791 = vrot.slane %v778, %v790
        %v792 = vlaneseq
        %v793 = vshrl.u32 %v792, 7
        %v794 = vsub.s32 3, %v793
        %v795 = vrot.slane %v778, %v794
        %v796 = vlaneseq
        %v797 = vshrl.u32 %v796, 7
        %v798 = vsub.s32 4, %v797
        %v799 = vrot.slane %v778, %v798
        %v800 = vcombine.low %v783, %v787
        %v801 = vcombine.low %v791, %v795
        %802 = vrot.lane.b32.xlu0 %v800, 66
        %v803 = vpop.permute.xlu0 %802
        %804 = vrot.lane.b32.xlu0 %v801, 66
        %v805 = vpop.permute.xlu0 %804
        %806 = vrot.lane.b32.xlu0 %v799, 66
        %v807 = vpop.permute.xlu0 %806
        %v808 = vrot.slane %v803, 4
        %v809 = vrot.slane %v805, 4
        %v810 = vrot.slane %v807, 4
        %vm811 = vcmask 539648
        %v812 = vsel %vm811, %v808, %v803
        %v813 = vsel %vm356, %v808, %v809
        %v814 = vsel %vm811, %v813, %v805
        %v815 = vsel %vm356, %v809, %v810
        %v816 = vsel %vm811, %v815, %v807
        %v820 = vmul.f32 %v772, %v812
        %v821 = vmul.f32 %v773, %v814
        %v822 = vmul.f32 %v774, %v816
        %v826 = vcombine.low %v820, %v820
        %v827 = vcombine.low %v821, %v821
        %v828 = vcombine.low %v822, %v822
        %829 = vrot.lane.b32.xlu0 %v826, 62
        %v830 = vpop.permute.xlu0 %829
        %831 = vrot.lane.b32.xlu0 %v820, 62
        %v832 = vpop.permute.xlu0 %831
        %833 = vrot.lane.b32.xlu0 %v827, 62
        %v834 = vpop.permute.xlu0 %833
        %835 = vrot.lane.b32.xlu0 %v821, 62
        %v836 = vpop.permute.xlu0 %835
        %837 = vrot.lane.b32.xlu0 %v828, 62
        %v838 = vpop.permute.xlu0 %837
        %839 = vrot.lane.b32.xlu0 %v822, 62
        %v840 = vpop.permute.xlu0 %839
        %vm841 = vcmask 506880
        %v842 = vsel %vm841, %v830, %v832
        %v843 = vsel %vm841, %v832, %v834
        %v844 = vsel %vm841, %v834, %v836
        %v845 = vsel %vm841, %v836, %v838
        %v846 = vsel %vm841, %v838, %v840
        %852 = vst [vmem:[#allocation3 + $0x50] sm:$0xf0] %v842
        %853 = vst [vmem:[#allocation3 + $0x58] sm:$0xf0] %v843
        %854 = vst [vmem:[#allocation3 + $0x60] sm:$0xf0] %v844
        %855 = vst [vmem:[#allocation3 + $0x68] sm:$0xf0] %v845
        %856 = vst.msk [vmem:[#allocation3 + $0x70] sm:$0xf0] %vm527, %v846
        %v857 = vld [vmem:[#allocation2 + $0x4] sm:$0xff]
        %v858 = vld [vmem:[#allocation2 + $0xc] sm:$0xff]
        %v859 = vld [vmem:[#allocation2 + $0x14] sm:$0xff]
        %s860 = scalar_lea.vmem %s6, 6
        %v861 = vld [vmem:[%s860] ss:$8 sm:$0xf]
        %v862 = vld [vmem:[%s860] ss:$8 sm:$0x10]
        %v863 = vor.u32 %v861, %v862
        %v865 = vlaneseq
        %v866 = vshrl.u32 %v865, 7
        %v867 = vsub.s32 0, %v866
        %v868 = vrot.slane %v863, %v867
        %v869 = vlaneseq
        %v870 = vshrl.u32 %v869, 7
        %v871 = vsub.s32 1, %v870
        %v872 = vrot.slane %v863, %v871
        %v873 = vlaneseq
        %v874 = vshrl.u32 %v873, 7
        %v875 = vsub.s32 2, %v874
        %v876 = vrot.slane %v863, %v875
        %v877 = vlaneseq
        %v878 = vshrl.u32 %v877, 7
        %v879 = vsub.s32 3, %v878
        %v880 = vrot.slane %v863, %v879
        %v881 = vlaneseq
        %v882 = vshrl.u32 %v881, 7
        %v883 = vsub.s32 4, %v882
        %v884 = vrot.slane %v863, %v883
        %v885 = vcombine.low %v868, %v872
        %v886 = vcombine.low %v876, %v880
        %887 = vrot.lane.b32.xlu0 %v885, 72
        %v888 = vpop.permute.xlu0 %887
        %889 = vrot.lane.b32.xlu0 %v886, 72
        %v890 = vpop.permute.xlu0 %889
        %891 = vrot.lane.b32.xlu0 %v884, 72
        %v892 = vpop.permute.xlu0 %891
        %v893 = vrot.slane %v888, 4
        %v894 = vrot.slane %v890, 4
        %v895 = vrot.slane %v892, 4
        %v896 = vsel %vm432, %v893, %v888
        %v897 = vsel %vm356, %v893, %v894
        %v898 = vsel %vm432, %v897, %v890
        %v899 = vsel %vm356, %v894, %v895
        %v900 = vsel %vm432, %v899, %v892
        %v904 = vmul.f32 %v857, %v896
        %v905 = vmul.f32 %v858, %v898
        %v906 = vmul.f32 %v859, %v900
        %v910 = vcombine.high %v904, %v904
        %v911 = vcombine.high %v905, %v905
        %v912 = vcombine.high %v906, %v906
        %913 = vrot.lane.b32.xlu0 %v904, 56
        %v914 = vpop.permute.xlu0 %913
        %915 = vrot.lane.b32.xlu0 %v910, 56
        %v916 = vpop.permute.xlu0 %915
        %917 = vrot.lane.b32.xlu0 %v905, 56
        %v918 = vpop.permute.xlu0 %917
        %919 = vrot.lane.b32.xlu0 %v911, 56
        %v920 = vpop.permute.xlu0 %919
        %921 = vrot.lane.b32.xlu0 %v906, 56
        %v922 = vpop.permute.xlu0 %921
        %923 = vrot.lane.b32.xlu0 %v912, 56
        %v924 = vpop.permute.xlu0 %923
        %v925 = vsel %vm406, %v914, %v916
        %v926 = vsel %vm406, %v916, %v918
        %v927 = vsel %vm406, %v918, %v920
        %v928 = vsel %vm406, %v920, %v922
        %v929 = vsel %vm406, %v922, %v924
        %935 = vst [vmem:[#allocation3 + $0x78] sm:$0xf] %v925
        %936 = vst [vmem:[#allocation3 + $0x80] sm:$0xf] %v926
        %937 = vst [vmem:[#allocation3 + $0x88] sm:$0xf] %v927
        %938 = vst [vmem:[#allocation3 + $0x90] sm:$0xf] %v928
        %939 = vst.msk [vmem:[#allocation3 + $0x98] sm:$0xf] %vm446, %v929
        %v940 = vld [vmem:[#allocation2 + $0x4] sm:$0xff]
        %v941 = vld [vmem:[#allocation2 + $0xc] sm:$0xff]
        %v942 = vld [vmem:[#allocation2 + $0x14] sm:$0xff]
        %s943 = scalar_lea.vmem %s6, 7
        %v944 = vld [vmem:[%s943] ss:$8 sm:$0xf]
        %v945 = vld [vmem:[%s943] ss:$8 sm:$0x10]
        %v946 = vor.u32 %v944, %v945
        %v948 = vlaneseq
        %v949 = vshrl.u32 %v948, 7
        %v950 = vsub.s32 0, %v949
        %v951 = vrot.slane %v946, %v950
        %v952 = vlaneseq
        %v953 = vshrl.u32 %v952, 7
        %v954 = vsub.s32 1, %v953
        %v955 = vrot.slane %v946, %v954
        %v956 = vlaneseq
        %v957 = vshrl.u32 %v956, 7
        %v958 = vsub.s32 2, %v957
        %v959 = vrot.slane %v946, %v958
        %v960 = vlaneseq
        %v961 = vshrl.u32 %v960, 7
        %v962 = vsub.s32 3, %v961
        %v963 = vrot.slane %v946, %v962
        %v964 = vlaneseq
        %v965 = vshrl.u32 %v964, 7
        %v966 = vsub.s32 4, %v965
        %v967 = vrot.slane %v946, %v966
        %v968 = vcombine.low %v951, %v955
        %v969 = vcombine.low %v959, %v963
        %970 = vrot.lane.b32.xlu0 %v968, 73
        %v971 = vpop.permute.xlu0 %970
        %972 = vrot.lane.b32.xlu0 %v969, 73
        %v973 = vpop.permute.xlu0 %972
        %974 = vrot.lane.b32.xlu0 %v967, 73
        %v975 = vpop.permute.xlu0 %974
        %v976 = vrot.slane %v971, 4
        %v977 = vrot.slane %v973, 4
        %v978 = vrot.slane %v975, 4
        %vm979 = vcmask 596992
        %v980 = vsel %vm979, %v976, %v971
        %v981 = vsel %vm356, %v976, %v977
        %v982 = vsel %vm979, %v981, %v973
        %v983 = vsel %vm356, %v977, %v978
        %v984 = vsel %vm979, %v983, %v975
        %v988 = vmul.f32 %v940, %v980
        %v989 = vmul.f32 %v941, %v982
        %v990 = vmul.f32 %v942, %v984
        %v994 = vcombine.low %v988, %v988
        %v995 = vcombine.low %v989, %v989
        %v996 = vcombine.low %v990, %v990
        %997 = vrot.lane.b32.xlu0 %v994, 55
        %v998 = vpop.permute.xlu0 %997
        %999 = vrot.lane.b32.xlu0 %v988, 55
        %v1000 = vpop.permute.xlu0 %999
        %1001 = vrot.lane.b32.xlu0 %v995, 55
        %v1002 = vpop.permute.xlu0 %1001
        %1003 = vrot.lane.b32.xlu0 %v989, 55
        %v1004 = vpop.permute.xlu0 %1003
        %1005 = vrot.lane.b32.xlu0 %v996, 55
        %v1006 = vpop.permute.xlu0 %1005
        %1007 = vrot.lane.b32.xlu0 %v990, 55
        %v1008 = vpop.permute.xlu0 %1007
        %vm1009 = vcmask 449536
        %v1010 = vsel %vm1009, %v998, %v1000
        %v1011 = vsel %vm1009, %v1000, %v1002
        %v1012 = vsel %vm1009, %v1002, %v1004
        %v1013 = vsel %vm1009, %v1004, %v1006
        %v1014 = vsel %vm1009, %v1006, %v1008
        %1020 = vst [vmem:[#allocation3 + $0x78] sm:$0xf0] %v1010
        %1021 = vst [vmem:[#allocation3 + $0x80] sm:$0xf0] %v1011
        %1022 = vst [vmem:[#allocation3 + $0x88] sm:$0xf0] %v1012
        %1023 = vst [vmem:[#allocation3 + $0x90] sm:$0xf0] %v1013
        %1024 = vst.msk [vmem:[#allocation3 + $0x98] sm:$0xf0] %vm527, %v1014
        %v1025 = vld [vmem:[#allocation2 + $0x4] sm:$0xff]
        %v1026 = vld [vmem:[#allocation2 + $0xc] sm:$0xff]
        %v1027 = vld [vmem:[#allocation2 + $0x14] sm:$0xff]
        %s1028 = scalar_lea.vmem %s6, 40
        %v1029 = vld [vmem:[%s1028] ss:$8 sm:$0xf]
        %v1030 = vld [vmem:[%s1028] ss:$8 sm:$0x10]
        %v1031 = vor.u32 %v1029, %v1030
        %v1033 = vlaneseq
        %v1034 = vshrl.u32 %v1033, 7
        %v1035 = vsub.s32 0, %v1034
        %v1036 = vrot.slane %v1031, %v1035
        %v1037 = vlaneseq
        %v1038 = vshrl.u32 %v1037, 7
        %v1039 = vsub.s32 1, %v1038
        %v1040 = vrot.slane %v1031, %v1039
        %v1041 = vlaneseq
        %v1042 = vshrl.u32 %v1041, 7
        %v1043 = vsub.s32 2, %v1042
        %v1044 = vrot.slane %v1031, %v1043
        %v1045 = vlaneseq
        %v1046 = vshrl.u32 %v1045, 7
        %v1047 = vsub.s32 3, %v1046
        %v1048 = vrot.slane %v1031, %v1047
        %v1049 = vlaneseq
        %v1050 = vshrl.u32 %v1049, 7
        %v1051 = vsub.s32 4, %v1050
        %v1052 = vrot.slane %v1031, %v1051
        %v1053 = vcombine.low %v1036, %v1040
        %v1054 = vcombine.low %v1044, %v1048
        %1055 = vrot.lane.b32.xlu0 %v1053, 74
        %v1056 = vpop.permute.xlu0 %1055
        %1057 = vrot.lane.b32.xlu0 %v1054, 74
        %v1058 = vpop.permute.xlu0 %1057
        %1059 = vrot.lane.b32.xlu0 %v1052, 74
        %v1060 = vpop.permute.xlu0 %1059
        %v1061 = vrot.slane %v1056, 4
        %v1062 = vrot.slane %v1058, 4
        %v1063 = vrot.slane %v1060, 4
        %vm1064 = vcmask 605184
        %v1065 = vsel %vm1064, %v1061, %v1056
        %v1066 = vsel %vm356, %v1061, %v1062
        %v1067 = vsel %vm1064, %v1066, %v1058
        %v1068 = vsel %vm356, %v1062, %v1063
        %v1069 = vsel %vm1064, %v1068, %v1060
        %v1073 = vmul.f32 %v1025, %v1065
        %v1074 = vmul.f32 %v1026, %v1067
        %v1075 = vmul.f32 %v1027, %v1069
        %v1079 = vcombine.high %v1073, %v1073
        %v1080 = vcombine.high %v1074, %v1074
        %v1081 = vcombine.high %v1075, %v1075
        %1082 = vrot.lane.b32.xlu0 %v1073, 54
        %v1083 = vpop.permute.xlu0 %1082
        %1084 = vrot.lane.b32.xlu0 %v1079, 54
        %v1085 = vpop.permute.xlu0 %1084
        %1086 = vrot.lane.b32.xlu0 %v1074, 54
        %v1087 = vpop.permute.xlu0 %1086
        %1088 = vrot.lane.b32.xlu0 %v1080, 54
        %v1089 = vpop.permute.xlu0 %1088
        %1090 = vrot.lane.b32.xlu0 %v1075, 54
        %v1091 = vpop.permute.xlu0 %1090
        %1092 = vrot.lane.b32.xlu0 %v1081, 54
        %v1093 = vpop.permute.xlu0 %1092
        %vm1094 = vcmask 441344
        %v1095 = vsel %vm1094, %v1083, %v1085
        %v1096 = vsel %vm1094, %v1085, %v1087
        %v1097 = vsel %vm1094, %v1087, %v1089
        %v1098 = vsel %vm1094, %v1089, %v1091
        %v1099 = vsel %vm1094, %v1091, %v1093
        %1105 = vst [vmem:[#allocation3 + $0xa0] sm:$0xf] %v1095
        %1106 = vst [vmem:[#allocation3 + $0xa8] sm:$0xf] %v1096
        %1107 = vst [vmem:[#allocation3 + $0xb0] sm:$0xf] %v1097
        %1108 = vst [vmem:[#allocation3 + $0xb8] sm:$0xf] %v1098
        %1109 = vst.msk [vmem:[#allocation3 + $0xc0] sm:$0xf] %vm446, %v1099
        %v1110 = vld [vmem:[#allocation2 + $0x4] sm:$0xff]
        %v1111 = vld [vmem:[#allocation2 + $0xc] sm:$0xff]
        %v1112 = vld [vmem:[#allocation2 + $0x14] sm:$0xff]
        %s1113 = scalar_lea.vmem %s6, 41
        %v1114 = vld [vmem:[%s1113] ss:$8 sm:$0xf]
        %v1115 = vld [vmem:[%s1113] ss:$8 sm:$0x10]
        %v1116 = vor.u32 %v1114, %v1115
        %v1118 = vlaneseq
        %v1119 = vshrl.u32 %v1118, 7
        %v1120 = vsub.s32 0, %v1119
        %v1121 = vrot.slane %v1116, %v1120
        %v1122 = vlaneseq
        %v1123 = vshrl.u32 %v1122, 7
        %v1124 = vsub.s32 1, %v1123
        %v1125 = vrot.slane %v1116, %v1124
        %v1126 = vlaneseq
        %v1127 = vshrl.u32 %v1126, 7
        %v1128 = vsub.s32 2, %v1127
        %v1129 = vrot.slane %v1116, %v1128
        %v1130 = vlaneseq
        %v1131 = vshrl.u32 %v1130, 7
        %v1132 = vsub.s32 3, %v1131
        %v1133 = vrot.slane %v1116, %v1132
        %v1134 = vlaneseq
        %v1135 = vshrl.u32 %v1134, 7
        %v1136 = vsub.s32 4, %v1135
        %v1137 = vrot.slane %v1116, %v1136
        %v1138 = vcombine.low %v1121, %v1125
        %v1139 = vcombine.low %v1129, %v1133
        %1140 = vrot.lane.b32.xlu0 %v1138, 120
        %v1141 = vpop.permute.xlu0 %1140
        %1142 = vrot.lane.b32.xlu0 %v1139, 120
        %v1143 = vpop.permute.xlu0 %1142
        %1144 = vrot.lane.b32.xlu0 %v1137, 120
        %v1145 = vpop.permute.xlu0 %1144
        %v1146 = vrot.slane %v1141, 4
        %v1147 = vrot.slane %v1143, 4
        %v1148 = vrot.slane %v1145, 4
        %vm1149 = vcmask 982016
        %v1150 = vsel %vm1149, %v1146, %v1141
        %v1151 = vsel %vm356, %v1146, %v1147
        %v1152 = vsel %vm1149, %v1151, %v1143
        %v1153 = vsel %vm356, %v1147, %v1148
        %v1154 = vsel %vm1149, %v1153, %v1145
        %v1158 = vmul.f32 %v1110, %v1150
        %v1159 = vmul.f32 %v1111, %v1152
        %v1160 = vmul.f32 %v1112, %v1154
        %v1164 = vcombine.low %v1158, %v1158
        %v1165 = vcombine.low %v1159, %v1159
        %v1166 = vcombine.low %v1160, %v1160
        %1167 = vrot.lane.b32.xlu0 %v1164, 8
        %v1168 = vpop.permute.xlu0 %1167
        %1169 = vrot.lane.b32.xlu0 %v1158, 8
        %v1170 = vpop.permute.xlu0 %1169
        %1171 = vrot.lane.b32.xlu0 %v1165, 8
        %v1172 = vpop.permute.xlu0 %1171
        %1173 = vrot.lane.b32.xlu0 %v1159, 8
        %v1174 = vpop.permute.xlu0 %1173
        %1175 = vrot.lane.b32.xlu0 %v1166, 8
        %v1176 = vpop.permute.xlu0 %1175
        %1177 = vrot.lane.b32.xlu0 %v1160, 8
        %v1178 = vpop.permute.xlu0 %1177
        %vm1179 = vcmask 64512
        %v1180 = vsel %vm1179, %v1168, %v1170
        %v1181 = vsel %vm1179, %v1170, %v1172
        %v1182 = vsel %vm1179, %v1172, %v1174
        %v1183 = vsel %vm1179, %v1174, %v1176
        %v1184 = vsel %vm1179, %v1176, %v1178
        %1190 = vst [vmem:[#allocation3 + $0xa0] sm:$0xf0] %v1180
        %1191 = vst [vmem:[#allocation3 + $0xa8] sm:$0xf0] %v1181
        %1192 = vst [vmem:[#allocation3 + $0xb0] sm:$0xf0] %v1182
        %1193 = vst [vmem:[#allocation3 + $0xb8] sm:$0xf0] %v1183
        %1194 = vst.msk [vmem:[#allocation3 + $0xc0] sm:$0xf0] %vm527, %v1184
        %v1195 = vld [vmem:[#allocation2 + $0x4] sm:$0xff]
        %v1196 = vld [vmem:[#allocation2 + $0xc] sm:$0xff]
        %v1197 = vld [vmem:[#allocation2 + $0x14] sm:$0xff]
        %s1198 = scalar_lea.vmem %s6, 42
        %v1199 = vld [vmem:[%s1198] ss:$8 sm:$0xf]
        %v1200 = vld [vmem:[%s1198] ss:$8 sm:$0x10]
        %v1201 = vor.u32 %v1199, %v1200
        %v1203 = vlaneseq
        %v1204 = vshrl.u32 %v1203, 7
        %v1205 = vsub.s32 0, %v1204
        %v1206 = vrot.slane %v1201, %v1205
        %v1207 = vlaneseq
        %v1208 = vshrl.u32 %v1207, 7
        %v1209 = vsub.s32 1, %v1208
        %v1210 = vrot.slane %v1201, %v1209
        %v1211 = vlaneseq
        %v1212 = vshrl.u32 %v1211, 7
        %v1213 = vsub.s32 2, %v1212
        %v1214 = vrot.slane %v1201, %v1213
        %v1215 = vlaneseq
        %v1216 = vshrl.u32 %v1215, 7
        %v1217 = vsub.s32 3, %v1216
        %v1218 = vrot.slane %v1201, %v1217
        %v1219 = vlaneseq
        %v1220 = vshrl.u32 %v1219, 7
        %v1221 = vsub.s32 4, %v1220
        %v1222 = vrot.slane %v1201, %v1221
        %v1223 = vcombine.low %v1206, %v1210
        %v1224 = vcombine.low %v1214, %v1218
        %1225 = vrot.lane.b32.xlu0 %v1223, 121
        %v1226 = vpop.permute.xlu0 %1225
        %1227 = vrot.lane.b32.xlu0 %v1224, 121
        %v1228 = vpop.permute.xlu0 %1227
        %1229 = vrot.lane.b32.xlu0 %v1222, 121
        %v1230 = vpop.permute.xlu0 %1229
        %v1231 = vrot.slane %v1226, 4
        %v1232 = vrot.slane %v1228, 4
        %v1233 = vrot.slane %v1230, 4
        %vm1234 = vcmask 990208
        %v1235 = vsel %vm1234, %v1231, %v1226
        %v1236 = vsel %vm356, %v1231, %v1232
        %v1237 = vsel %vm1234, %v1236, %v1228
        %v1238 = vsel %vm356, %v1232, %v1233
        %v1239 = vsel %vm1234, %v1238, %v1230
        %v1243 = vmul.f32 %v1195, %v1235
        %v1244 = vmul.f32 %v1196, %v1237
        %v1245 = vmul.f32 %v1197, %v1239
        %v1249 = vcombine.high %v1243, %v1243
        %v1250 = vcombine.high %v1244, %v1244
        %v1251 = vcombine.high %v1245, %v1245
        %1252 = vrot.lane.b32.xlu0 %v1243, 7
        %v1253 = vpop.permute.xlu0 %1252
        %1254 = vrot.lane.b32.xlu0 %v1249, 7
        %v1255 = vpop.permute.xlu0 %1254
        %1256 = vrot.lane.b32.xlu0 %v1244, 7
        %v1257 = vpop.permute.xlu0 %1256
        %1258 = vrot.lane.b32.xlu0 %v1250, 7
        %v1259 = vpop.permute.xlu0 %1258
        %1260 = vrot.lane.b32.xlu0 %v1245, 7
        %v1261 = vpop.permute.xlu0 %1260
        %1262 = vrot.lane.b32.xlu0 %v1251, 7
        %v1263 = vpop.permute.xlu0 %1262
        %vm1264 = vcmask 56320
        %v1265 = vsel %vm1264, %v1253, %v1255
        %v1266 = vsel %vm1264, %v1255, %v1257
        %v1267 = vsel %vm1264, %v1257, %v1259
        %v1268 = vsel %vm1264, %v1259, %v1261
        %v1269 = vsel %vm1264, %v1261, %v1263
        %1275 = vst [vmem:[#allocation3 + $0xc8] sm:$0xf] %v1265
        %1276 = vst [vmem:[#allocation3 + $0xd0] sm:$0xf] %v1266
        %1277 = vst [vmem:[#allocation3 + $0xd8] sm:$0xf] %v1267
        %1278 = vst [vmem:[#allocation3 + $0xe0] sm:$0xf] %v1268
        %1279 = vst.msk [vmem:[#allocation3 + $0xe8] sm:$0xf] %vm446, %v1269
        %v1280 = vld [vmem:[#allocation2 + $0x4] sm:$0xff]
        %v1281 = vld [vmem:[#allocation2 + $0xc] sm:$0xff]
        %v1282 = vld [vmem:[#allocation2 + $0x14] sm:$0xff]
        %s1283 = scalar_lea.vmem %s6, 43
        %v1284 = vld [vmem:[%s1283] ss:$8 sm:$0xf]
        %v1285 = vld [vmem:[%s1283] ss:$8 sm:$0x10]
        %v1286 = vor.u32 %v1284, %v1285
        %v1288 = vlaneseq
        %v1289 = vshrl.u32 %v1288, 7
        %v1290 = vsub.s32 0, %v1289
        %v1291 = vrot.slane %v1286, %v1290
        %v1292 = vlaneseq
        %v1293 = vshrl.u32 %v1292, 7
        %v1294 = vsub.s32 1, %v1293
        %v1295 = vrot.slane %v1286, %v1294
        %v1296 = vlaneseq
        %v1297 = vshrl.u32 %v1296, 7
        %v1298 = vsub.s32 2, %v1297
        %v1299 = vrot.slane %v1286, %v1298
        %v1300 = vlaneseq
        %v1301 = vshrl.u32 %v1300, 7
        %v1302 = vsub.s32 3, %v1301
        %v1303 = vrot.slane %v1286, %v1302
        %v1304 = vlaneseq
        %v1305 = vshrl.u32 %v1304, 7
        %v1306 = vsub.s32 4, %v1305
        %v1307 = vrot.slane %v1286, %v1306
        %v1308 = vcombine.low %v1291, %v1295
        %v1309 = vcombine.low %v1299, %v1303
        %1310 = vrot.lane.b32.xlu0 %v1308, 122
        %v1311 = vpop.permute.xlu0 %1310
        %1312 = vrot.lane.b32.xlu0 %v1309, 122
        %v1313 = vpop.permute.xlu0 %1312
        %1314 = vrot.lane.b32.xlu0 %v1307, 122
        %v1315 = vpop.permute.xlu0 %1314
        %v1316 = vrot.slane %v1311, 4
        %v1317 = vrot.slane %v1313, 4
        %v1318 = vrot.slane %v1315, 4
        %vm1319 = vcmask 998400
        %v1320 = vsel %vm1319, %v1316, %v1311
        %v1321 = vsel %vm356, %v1316, %v1317
        %v1322 = vsel %vm1319, %v1321, %v1313
        %v1323 = vsel %vm356, %v1317, %v1318
        %v1324 = vsel %vm1319, %v1323, %v1315
        %v1328 = vmul.f32 %v1280, %v1320
        %v1329 = vmul.f32 %v1281, %v1322
        %v1330 = vmul.f32 %v1282, %v1324
        %v1334 = vcombine.low %v1328, %v1328
        %v1335 = vcombine.low %v1329, %v1329
        %v1336 = vcombine.low %v1330, %v1330
        %1337 = vrot.lane.b32.xlu0 %v1334, 6
        %v1338 = vpop.permute.xlu0 %1337
        %1339 = vrot.lane.b32.xlu0 %v1328, 6
        %v1340 = vpop.permute.xlu0 %1339
        %1341 = vrot.lane.b32.xlu0 %v1335, 6
        %v1342 = vpop.permute.xlu0 %1341
        %1343 = vrot.lane.b32.xlu0 %v1329, 6
        %v1344 = vpop.permute.xlu0 %1343
        %1345 = vrot.lane.b32.xlu0 %v1336, 6
        %v1346 = vpop.permute.xlu0 %1345
        %1347 = vrot.lane.b32.xlu0 %v1330, 6
        %v1348 = vpop.permute.xlu0 %1347
        %vm1349 = vcmask 48128
        %v1350 = vsel %vm1349, %v1338, %v1340
        %v1351 = vsel %vm1349, %v1340, %v1342
        %v1352 = vsel %vm1349, %v1342, %v1344
        %v1353 = vsel %vm1349, %v1344, %v1346
        %v1354 = vsel %vm1349, %v1346, %v1348
        %1360 = vst [vmem:[#allocation3 + $0xc8] sm:$0xf0] %v1350
        %1361 = vst [vmem:[#allocation3 + $0xd0] sm:$0xf0] %v1351
        %1362 = vst [vmem:[#allocation3 + $0xd8] sm:$0xf0] %v1352
        %1363 = vst [vmem:[#allocation3 + $0xe0] sm:$0xf0] %v1353
        %1364 = vst.msk [vmem:[#allocation3 + $0xe8] sm:$0xf0] %vm527, %v1354
        %v1365 = vld [vmem:[#allocation2 + $0x8] sm:$0xff]
        %v1366 = vld [vmem:[#allocation2 + $0x10] sm:$0xff]
        %v1367 = vld [vmem:[#allocation2 + $0x18] sm:$0xf]
        %s1368 = scalar_lea.vmem %s6, 44
        %v1369 = vld [vmem:[%s1368] ss:$8 sm:$0xf]
        %v1370 = vld [vmem:[%s1368] ss:$8 sm:$0x10]
        %v1371 = vor.u32 %v1369, %v1370
        %v1373 = vlaneseq
        %v1374 = vshrl.u32 %v1373, 7
        %v1375 = vsub.s32 0, %v1374
        %v1376 = vrot.slane %v1371, %v1375
        %v1377 = vlaneseq
        %v1378 = vshrl.u32 %v1377, 7
        %v1379 = vsub.s32 1, %v1378
        %v1380 = vrot.slane %v1371, %v1379
        %v1381 = vlaneseq
        %v1382 = vshrl.u32 %v1381, 7
        %v1383 = vsub.s32 2, %v1382
        %v1384 = vrot.slane %v1371, %v1383
        %v1385 = vlaneseq
        %v1386 = vshrl.u32 %v1385, 7
        %v1387 = vsub.s32 3, %v1386
        %v1388 = vrot.slane %v1371, %v1387
        %v1389 = vlaneseq
        %v1390 = vshrl.u32 %v1389, 7
        %v1391 = vsub.s32 4, %v1390
        %v1392 = vrot.slane %v1371, %v1391
        %v1394 = vcombine.low %v1376, %v1380
        %v1395 = vcombine.low %v1384, %v1388
        %v1398 = vmul.f32 %v1365, %v1394
        %v1399 = vmul.f32 %v1366, %v1395
        %v1400 = vmul.f32 %v1367, %v1392
        %v1403 = vcombine.high %v1398, %v1398
        %v1404 = vcombine.high %v1399, %v1399
        %1407 = vst [vmem:[#allocation3 + $0xf0] sm:$0xf] %v1398
        %1408 = vst [vmem:[#allocation3 + $0xf8] sm:$0xf] %v1403
        %1409 = vst [vmem:[#allocation3 + $0x100] sm:$0xf] %v1399
        %1410 = vst [vmem:[#allocation3 + $0x108] sm:$0xf] %v1404
        %1411 = vst.msk [vmem:[#allocation3 + $0x110] sm:$0xf] %vm446, %v1400
        %v1412 = vld [vmem:[#allocation2 + $0x8] sm:$0xff]
        %v1413 = vld [vmem:[#allocation2 + $0x10] sm:$0xff]
        %v1414 = vld [vmem:[#allocation2 + $0x18] sm:$0xf]
        %s1415 = scalar_lea.vmem %s6, 45
        %v1416 = vld [vmem:[%s1415] ss:$8 sm:$0xf]
        %v1417 = vld [vmem:[%s1415] ss:$8 sm:$0x10]
        %v1418 = vor.u32 %v1416, %v1417
        %v1420 = vlaneseq
        %v1421 = vshrl.u32 %v1420, 7
        %v1422 = vsub.s32 0, %v1421
        %v1423 = vrot.slane %v1418, %v1422
        %v1424 = vlaneseq
        %v1425 = vshrl.u32 %v1424, 7
        %v1426 = vsub.s32 1, %v1425
        %v1427 = vrot.slane %v1418, %v1426
        %v1428 = vlaneseq
        %v1429 = vshrl.u32 %v1428, 7
        %v1430 = vsub.s32 2, %v1429
        %v1431 = vrot.slane %v1418, %v1430
        %v1432 = vlaneseq
        %v1433 = vshrl.u32 %v1432, 7
        %v1434 = vsub.s32 3, %v1433
        %v1435 = vrot.slane %v1418, %v1434
        %v1436 = vlaneseq
        %v1437 = vshrl.u32 %v1436, 7
        %v1438 = vsub.s32 4, %v1437
        %v1439 = vrot.slane %v1418, %v1438
        %v1440 = vcombine.low %v1423, %v1427
        %v1441 = vcombine.low %v1431, %v1435
        %1442 = vrot.lane.b32.xlu0 %v1440, 1
        %v1443 = vpop.permute.xlu0 %1442
        %1444 = vrot.lane.b32.xlu0 %v1441, 1
        %v1445 = vpop.permute.xlu0 %1444
        %1446 = vrot.lane.b32.xlu0 %v1439, 1
        %v1447 = vpop.permute.xlu0 %1446
        %v1448 = vrot.slane %v1443, 4
        %v1449 = vrot.slane %v1445, 4
        %v1450 = vsel %vm354, %v1448, %v1443
        %v1451 = vsel %vm356, %v1448, %v1449
        %v1452 = vsel %vm354, %v1451, %v1445
        %v1453 = vsel %vm354, %v1449, %v1447
        %v1457 = vmul.f32 %v1412, %v1450
        %v1458 = vmul.f32 %v1413, %v1452
        %v1459 = vmul.f32 %v1414, %v1453
        %v1463 = vcombine.low %v1457, %v1457
        %v1464 = vcombine.low %v1458, %v1458
        %v1465 = vcombine.low %v1459, %v1459
        %1466 = vrot.lane.b32.xlu0 %v1463, 127
        %v1467 = vpop.permute.xlu0 %1466
        %1468 = vrot.lane.b32.xlu0 %v1457, 127
        %v1469 = vpop.permute.xlu0 %1468
        %1470 = vrot.lane.b32.xlu0 %v1464, 127
        %v1471 = vpop.permute.xlu0 %1470
        %1472 = vrot.lane.b32.xlu0 %v1458, 127
        %v1473 = vpop.permute.xlu0 %1472
        %1474 = vrot.lane.b32.xlu0 %v1465, 127
        %v1475 = vpop.permute.xlu0 %1474
        %vm1476 = vcmask 1039360
        %v1477 = vsel %vm1476, %v1467, %v1469
        %v1478 = vsel %vm1476, %v1469, %v1471
        %v1479 = vsel %vm1476, %v1471, %v1473
        %v1480 = vsel %vm1476, %v1473, %v1475
        %1486 = vst [vmem:[#allocation3 + $0xf0] sm:$0xf0] %v1477
        %1487 = vst [vmem:[#allocation3 + $0xf8] sm:$0xf0] %v1478
        %1488 = vst [vmem:[#allocation3 + $0x100] sm:$0xf0] %v1479
        %1489 = vst [vmem:[#allocation3 + $0x108] sm:$0xf0] %v1480
        %1490 = vst.msk [vmem:[#allocation3 + $0x110] sm:$0xf0] %vm527, %v1475
        %v1491 = vld [vmem:[#allocation2 + $0x8] sm:$0xff]
        %v1492 = vld [vmem:[#allocation2 + $0x10] sm:$0xff]
        %v1493 = vld [vmem:[#allocation2 + $0x18] sm:$0xf]
        %s1494 = scalar_lea.vmem %s6, 46
        %v1495 = vld [vmem:[%s1494] ss:$8 sm:$0xf]
        %v1496 = vld [vmem:[%s1494] ss:$8 sm:$0x10]
        %v1497 = vor.u32 %v1495, %v1496
        %v1499 = vlaneseq
        %v1500 = vshrl.u32 %v1499, 7
        %v1501 = vsub.s32 0, %v1500
        %v1502 = vrot.slane %v1497, %v1501
        %v1503 = vlaneseq
        %v1504 = vshrl.u32 %v1503, 7
        %v1505 = vsub.s32 1, %v1504
        %v1506 = vrot.slane %v1497, %v1505
        %v1507 = vlaneseq
        %v1508 = vshrl.u32 %v1507, 7
        %v1509 = vsub.s32 2, %v1508
        %v1510 = vrot.slane %v1497, %v1509
        %v1511 = vlaneseq
        %v1512 = vshrl.u32 %v1511, 7
        %v1513 = vsub.s32 3, %v1512
        %v1514 = vrot.slane %v1497, %v1513
        %v1515 = vlaneseq
        %v1516 = vshrl.u32 %v1515, 7
        %v1517 = vsub.s32 4, %v1516
        %v1518 = vrot.slane %v1497, %v1517
        %v1519 = vcombine.low %v1502, %v1506
        %v1520 = vcombine.low %v1510, %v1514
        %1521 = vrot.lane.b32.xlu0 %v1519, 2
        %v1522 = vpop.permute.xlu0 %1521
        %1523 = vrot.lane.b32.xlu0 %v1520, 2
        %v1524 = vpop.permute.xlu0 %1523
        %1525 = vrot.lane.b32.xlu0 %v1518, 2
        %v1526 = vpop.permute.xlu0 %1525
        %v1527 = vrot.slane %v1522, 4
        %v1528 = vrot.slane %v1524, 4
        %vm1529 = vcmask 15360
        %v1530 = vsel %vm1529, %v1527, %v1522
        %v1531 = vsel %vm356, %v1527, %v1528
        %v1532 = vsel %vm1529, %v1531, %v1524
        %v1533 = vsel %vm1529, %v1528, %v1526
        %v1537 = vmul.f32 %v1491, %v1530
        %v1538 = vmul.f32 %v1492, %v1532
        %v1539 = vmul.f32 %v1493, %v1533
        %v1543 = vcombine.high %v1537, %v1537
        %v1544 = vcombine.high %v1538, %v1538
        %1545 = vrot.lane.b32.xlu0 %v1537, 126
        %v1546 = vpop.permute.xlu0 %1545
        %1547 = vrot.lane.b32.xlu0 %v1543, 126
        %v1548 = vpop.permute.xlu0 %1547
        %1549 = vrot.lane.b32.xlu0 %v1538, 126
        %v1550 = vpop.permute.xlu0 %1549
        %1551 = vrot.lane.b32.xlu0 %v1544, 126
        %v1552 = vpop.permute.xlu0 %1551
        %1553 = vrot.lane.b32.xlu0 %v1539, 126
        %v1554 = vpop.permute.xlu0 %1553
        %vm1555 = vcmask 1031168
        %v1556 = vsel %vm1555, %v1546, %v1548
        %v1557 = vsel %vm1555, %v1548, %v1550
        %v1558 = vsel %vm1555, %v1550, %v1552
        %v1559 = vsel %vm1555, %v1552, %v1554
        %1565 = vst [vmem:[#allocation3 + $0x118] sm:$0xf] %v1556
        %1566 = vst [vmem:[#allocation3 + $0x120] sm:$0xf] %v1557
        %1567 = vst [vmem:[#allocation3 + $0x128] sm:$0xf] %v1558
        %1568 = vst [vmem:[#allocation3 + $0x130] sm:$0xf] %v1559
        %1569 = vst.msk [vmem:[#allocation3 + $0x138] sm:$0xf] %vm446, %v1554
        %v1570 = vld [vmem:[#allocation2 + $0x8] sm:$0xff]
        %v1571 = vld [vmem:[#allocation2 + $0x10] sm:$0xff]
        %v1572 = vld [vmem:[#allocation2 + $0x18] sm:$0xf]
        %s1573 = scalar_lea.vmem %s6, 47
        %v1574 = vld [vmem:[%s1573] ss:$8 sm:$0xf]
        %v1575 = vld [vmem:[%s1573] ss:$8 sm:$0x10]
        %v1576 = vor.u32 %v1574, %v1575
        %v1578 = vlaneseq
        %v1579 = vshrl.u32 %v1578, 7
        %v1580 = vsub.s32 0, %v1579
        %v1581 = vrot.slane %v1576, %v1580
        %v1582 = vlaneseq
        %v1583 = vshrl.u32 %v1582, 7
        %v1584 = vsub.s32 1, %v1583
        %v1585 = vrot.slane %v1576, %v1584
        %v1586 = vlaneseq
        %v1587 = vshrl.u32 %v1586, 7
        %v1588 = vsub.s32 2, %v1587
        %v1589 = vrot.slane %v1576, %v1588
        %v1590 = vlaneseq
        %v1591 = vshrl.u32 %v1590, 7
        %v1592 = vsub.s32 3, %v1591
        %v1593 = vrot.slane %v1576, %v1592
        %v1594 = vlaneseq
        %v1595 = vshrl.u32 %v1594, 7
        %v1596 = vsub.s32 4, %v1595
        %v1597 = vrot.slane %v1576, %v1596
        %v1598 = vcombine.low %v1581, %v1585
        %v1599 = vcombine.low %v1589, %v1593
        %1600 = vrot.lane.b32.xlu0 %v1598, 8
        %v1601 = vpop.permute.xlu0 %1600
        %1602 = vrot.lane.b32.xlu0 %v1599, 8
        %v1603 = vpop.permute.xlu0 %1602
        %1604 = vrot.lane.b32.xlu0 %v1597, 8
        %v1605 = vpop.permute.xlu0 %1604
        %v1606 = vrot.slane %v1601, 4
        %v1607 = vrot.slane %v1603, 4
        %v1608 = vsel %vm1179, %v1606, %v1601
        %v1609 = vsel %vm356, %v1606, %v1607
        %v1610 = vsel %vm1179, %v1609, %v1603
        %v1611 = vsel %vm1179, %v1607, %v1605
        %v1615 = vmul.f32 %v1570, %v1608
        %v1616 = vmul.f32 %v1571, %v1610
        %v1617 = vmul.f32 %v1572, %v1611
        %v1621 = vcombine.low %v1615, %v1615
        %v1622 = vcombine.low %v1616, %v1616
        %v1623 = vcombine.low %v1617, %v1617
        %1624 = vrot.lane.b32.xlu0 %v1621, 120
        %v1625 = vpop.permute.xlu0 %1624
        %1626 = vrot.lane.b32.xlu0 %v1615, 120
        %v1627 = vpop.permute.xlu0 %1626
        %1628 = vrot.lane.b32.xlu0 %v1622, 120
        %v1629 = vpop.permute.xlu0 %1628
        %1630 = vrot.lane.b32.xlu0 %v1616, 120
        %v1631 = vpop.permute.xlu0 %1630
        %1632 = vrot.lane.b32.xlu0 %v1623, 120
        %v1633 = vpop.permute.xlu0 %1632
        %v1634 = vsel %vm1149, %v1625, %v1627
        %v1635 = vsel %vm1149, %v1627, %v1629
        %v1636 = vsel %vm1149, %v1629, %v1631
        %v1637 = vsel %vm1149, %v1631, %v1633
        %1643 = vst [vmem:[#allocation3 + $0x118] sm:$0xf0] %v1634
        %1644 = vst [vmem:[#allocation3 + $0x120] sm:$0xf0] %v1635
        %1645 = vst [vmem:[#allocation3 + $0x128] sm:$0xf0] %v1636
        %1646 = vst [vmem:[#allocation3 + $0x130] sm:$0xf0] %v1637
        %1647 = vst.msk [vmem:[#allocation3 + $0x138] sm:$0xf0] %vm527, %v1633
        %v1648 = vld [vmem:[#allocation2 + $0x8] sm:$0xff]
        %v1649 = vld [vmem:[#allocation2 + $0x10] sm:$0xff]
        %v1650 = vld [vmem:[#allocation2 + $0x18] sm:$0xf]
        %s1651 = scalar_lea.vmem %s6, 80
        %v1652 = vld [vmem:[%s1651] ss:$8 sm:$0xf]
        %v1653 = vld [vmem:[%s1651] ss:$8 sm:$0x10]
        %v1654 = vor.u32 %v1652, %v1653
        %v1656 = vlaneseq
        %v1657 = vshrl.u32 %v1656, 7
        %v1658 = vsub.s32 0, %v1657
        %v1659 = vrot.slane %v1654, %v1658
        %v1660 = vlaneseq
        %v1661 = vshrl.u32 %v1660, 7
        %v1662 = vsub.s32 1, %v1661
        %v1663 = vrot.slane %v1654, %v1662
        %v1664 = vlaneseq
        %v1665 = vshrl.u32 %v1664, 7
        %v1666 = vsub.s32 2, %v1665
        %v1667 = vrot.slane %v1654, %v1666
        %v1668 = vlaneseq
        %v1669 = vshrl.u32 %v1668, 7
        %v1670 = vsub.s32 3, %v1669
        %v1671 = vrot.slane %v1654, %v1670
        %v1672 = vlaneseq
        %v1673 = vshrl.u32 %v1672, 7
        %v1674 = vsub.s32 4, %v1673
        %v1675 = vrot.slane %v1654, %v1674
        %v1676 = vcombine.low %v1659, %v1663
        %v1677 = vcombine.low %v1667, %v1671
        %1678 = vrot.lane.b32.xlu0 %v1676, 9
        %v1679 = vpop.permute.xlu0 %1678
        %1680 = vrot.lane.b32.xlu0 %v1677, 9
        %v1681 = vpop.permute.xlu0 %1680
        %1682 = vrot.lane.b32.xlu0 %v1675, 9
        %v1683 = vpop.permute.xlu0 %1682
        %v1684 = vrot.slane %v1679, 4
        %v1685 = vrot.slane %v1681, 4
        %vm1686 = vcmask 72704
        %v1687 = vsel %vm1686, %v1684, %v1679
        %v1688 = vsel %vm356, %v1684, %v1685
        %v1689 = vsel %vm1686, %v1688, %v1681
        %v1690 = vsel %vm1686, %v1685, %v1683
        %v1694 = vmul.f32 %v1648, %v1687
        %v1695 = vmul.f32 %v1649, %v1689
        %v1696 = vmul.f32 %v1650, %v1690
        %v1700 = vcombine.high %v1694, %v1694
        %v1701 = vcombine.high %v1695, %v1695
        %1702 = vrot.lane.b32.xlu0 %v1694, 119
        %v1703 = vpop.permute.xlu0 %1702
        %1704 = vrot.lane.b32.xlu0 %v1700, 119
        %v1705 = vpop.permute.xlu0 %1704
        %1706 = vrot.lane.b32.xlu0 %v1695, 119
        %v1707 = vpop.permute.xlu0 %1706
        %1708 = vrot.lane.b32.xlu0 %v1701, 119
        %v1709 = vpop.permute.xlu0 %1708
        %1710 = vrot.lane.b32.xlu0 %v1696, 119
        %v1711 = vpop.permute.xlu0 %1710
        %vm1712 = vcmask 973824
        %v1713 = vsel %vm1712, %v1703, %v1705
        %v1714 = vsel %vm1712, %v1705, %v1707
        %v1715 = vsel %vm1712, %v1707, %v1709
        %v1716 = vsel %vm1712, %v1709, %v1711
        %1722 = vst [vmem:[#allocation3 + $0x140] sm:$0xf] %v1713
        %1723 = vst [vmem:[#allocation3 + $0x148] sm:$0xf] %v1714
        %1724 = vst [vmem:[#allocation3 + $0x150] sm:$0xf] %v1715
        %1725 = vst [vmem:[#allocation3 + $0x158] sm:$0xf] %v1716
        %1726 = vst.msk [vmem:[#allocation3 + $0x160] sm:$0xf] %vm446, %v1711
        %v1727 = vld [vmem:[#allocation2 + $0x8] sm:$0xff]
        %v1728 = vld [vmem:[#allocation2 + $0x10] sm:$0xff]
        %v1729 = vld [vmem:[#allocation2 + $0x18] sm:$0xf]
        %s1730 = scalar_lea.vmem %s6, 81
        %v1731 = vld [vmem:[%s1730] ss:$8 sm:$0xf]
        %v1732 = vld [vmem:[%s1730] ss:$8 sm:$0x10]
        %v1733 = vor.u32 %v1731, %v1732
        %v1735 = vlaneseq
        %v1736 = vshrl.u32 %v1735, 7
        %v1737 = vsub.s32 0, %v1736
        %v1738 = vrot.slane %v1733, %v1737
        %v1739 = vlaneseq
        %v1740 = vshrl.u32 %v1739, 7
        %v1741 = vsub.s32 1, %v1740
        %v1742 = vrot.slane %v1733, %v1741
        %v1743 = vlaneseq
        %v1744 = vshrl.u32 %v1743, 7
        %v1745 = vsub.s32 2, %v1744
        %v1746 = vrot.slane %v1733, %v1745
        %v1747 = vlaneseq
        %v1748 = vshrl.u32 %v1747, 7
        %v1749 = vsub.s32 3, %v1748
        %v1750 = vrot.slane %v1733, %v1749
        %v1751 = vlaneseq
        %v1752 = vshrl.u32 %v1751, 7
        %v1753 = vsub.s32 4, %v1752
        %v1754 = vrot.slane %v1733, %v1753
        %v1755 = vcombine.low %v1738, %v1742
        %v1756 = vcombine.low %v1746, %v1750
        %1757 = vrot.lane.b32.xlu0 %v1755, 10
        %v1758 = vpop.permute.xlu0 %1757
        %1759 = vrot.lane.b32.xlu0 %v1756, 10
        %v1760 = vpop.permute.xlu0 %1759
        %1761 = vrot.lane.b32.xlu0 %v1754, 10
        %v1762 = vpop.permute.xlu0 %1761
        %v1763 = vrot.slane %v1758, 4
        %v1764 = vrot.slane %v1760, 4
        %vm1765 = vcmask 80896
        %v1766 = vsel %vm1765, %v1763, %v1758
        %v1767 = vsel %vm356, %v1763, %v1764
        %v1768 = vsel %vm1765, %v1767, %v1760
        %v1769 = vsel %vm1765, %v1764, %v1762
        %v1773 = vmul.f32 %v1727, %v1766
        %v1774 = vmul.f32 %v1728, %v1768
        %v1775 = vmul.f32 %v1729, %v1769
        %v1779 = vcombine.low %v1773, %v1773
        %v1780 = vcombine.low %v1774, %v1774
        %v1781 = vcombine.low %v1775, %v1775
        %1782 = vrot.lane.b32.xlu0 %v1779, 118
        %v1783 = vpop.permute.xlu0 %1782
        %1784 = vrot.lane.b32.xlu0 %v1773, 118
        %v1785 = vpop.permute.xlu0 %1784
        %1786 = vrot.lane.b32.xlu0 %v1780, 118
        %v1787 = vpop.permute.xlu0 %1786
        %1788 = vrot.lane.b32.xlu0 %v1774, 118
        %v1789 = vpop.permute.xlu0 %1788
        %1790 = vrot.lane.b32.xlu0 %v1781, 118
        %v1791 = vpop.permute.xlu0 %1790
        %vm1792 = vcmask 965632
        %v1793 = vsel %vm1792, %v1783, %v1785
        %v1794 = vsel %vm1792, %v1785, %v1787
        %v1795 = vsel %vm1792, %v1787, %v1789
        %v1796 = vsel %vm1792, %v1789, %v1791
        %1802 = vst [vmem:[#allocation3 + $0x140] sm:$0xf0] %v1793
        %1803 = vst [vmem:[#allocation3 + $0x148] sm:$0xf0] %v1794
        %1804 = vst [vmem:[#allocation3 + $0x150] sm:$0xf0] %v1795
        %1805 = vst [vmem:[#allocation3 + $0x158] sm:$0xf0] %v1796
        %1806 = vst.msk [vmem:[#allocation3 + $0x160] sm:$0xf0] %vm527, %v1791
        %v1807 = vld [vmem:[#allocation2 + $0x8] sm:$0xff]
        %v1808 = vld [vmem:[#allocation2 + $0x10] sm:$0xff]
        %v1809 = vld [vmem:[#allocation2 + $0x18] sm:$0xf]
        %s1810 = scalar_lea.vmem %s6, 82
        %v1811 = vld [vmem:[%s1810] ss:$8 sm:$0xf]
        %v1812 = vld [vmem:[%s1810] ss:$8 sm:$0x10]
        %v1813 = vor.u32 %v1811, %v1812
        %v1815 = vlaneseq
        %v1816 = vshrl.u32 %v1815, 7
        %v1817 = vsub.s32 0, %v1816
        %v1818 = vrot.slane %v1813, %v1817
        %v1819 = vlaneseq
        %v1820 = vshrl.u32 %v1819, 7
        %v1821 = vsub.s32 1, %v1820
        %v1822 = vrot.slane %v1813, %v1821
        %v1823 = vlaneseq
        %v1824 = vshrl.u32 %v1823, 7
        %v1825 = vsub.s32 2, %v1824
        %v1826 = vrot.slane %v1813, %v1825
        %v1827 = vlaneseq
        %v1828 = vshrl.u32 %v1827, 7
        %v1829 = vsub.s32 3, %v1828
        %v1830 = vrot.slane %v1813, %v1829
        %v1831 = vlaneseq
        %v1832 = vshrl.u32 %v1831, 7
        %v1833 = vsub.s32 4, %v1832
        %v1834 = vrot.slane %v1813, %v1833
        %v1835 = vcombine.low %v1818, %v1822
        %v1836 = vcombine.low %v1826, %v1830
        %1837 = vrot.lane.b32.xlu0 %v1835, 56
        %v1838 = vpop.permute.xlu0 %1837
        %1839 = vrot.lane.b32.xlu0 %v1836, 56
        %v1840 = vpop.permute.xlu0 %1839
        %1841 = vrot.lane.b32.xlu0 %v1834, 56
        %v1842 = vpop.permute.xlu0 %1841
        %v1843 = vrot.slane %v1838, 4
        %v1844 = vrot.slane %v1840, 4
        %v1845 = vsel %vm406, %v1843, %v1838
        %v1846 = vsel %vm356, %v1843, %v1844
        %v1847 = vsel %vm406, %v1846, %v1840
        %v1848 = vsel %vm406, %v1844, %v1842
        %v1852 = vmul.f32 %v1807, %v1845
        %v1853 = vmul.f32 %v1808, %v1847
        %v1854 = vmul.f32 %v1809, %v1848
        %v1858 = vcombine.high %v1852, %v1852
        %v1859 = vcombine.high %v1853, %v1853
        %1860 = vrot.lane.b32.xlu0 %v1852, 72
        %v1861 = vpop.permute.xlu0 %1860
        %1862 = vrot.lane.b32.xlu0 %v1858, 72
        %v1863 = vpop.permute.xlu0 %1862
        %1864 = vrot.lane.b32.xlu0 %v1853, 72
        %v1865 = vpop.permute.xlu0 %1864
        %1866 = vrot.lane.b32.xlu0 %v1859, 72
        %v1867 = vpop.permute.xlu0 %1866
        %1868 = vrot.lane.b32.xlu0 %v1854, 72
        %v1869 = vpop.permute.xlu0 %1868
        %v1870 = vsel %vm432, %v1861, %v1863
        %v1871 = vsel %vm432, %v1863, %v1865
        %v1872 = vsel %vm432, %v1865, %v1867
        %v1873 = vsel %vm432, %v1867, %v1869
        %1879 = vst [vmem:[#allocation3 + $0x168] sm:$0xf] %v1870
        %1880 = vst [vmem:[#allocation3 + $0x170] sm:$0xf] %v1871
        %1881 = vst [vmem:[#allocation3 + $0x178] sm:$0xf] %v1872
        %1882 = vst [vmem:[#allocation3 + $0x180] sm:$0xf] %v1873
        %1883 = vst.msk [vmem:[#allocation3 + $0x188] sm:$0xf] %vm446, %v1869
        %v1884 = vld [vmem:[#allocation2 + $0x8] sm:$0xff]
        %v1885 = vld [vmem:[#allocation2 + $0x10] sm:$0xff]
        %v1886 = vld [vmem:[#allocation2 + $0x18] sm:$0xf]
        %s1887 = scalar_lea.vmem %s6, 83
        %v1888 = vld [vmem:[%s1887] ss:$8 sm:$0xf]
        %v1889 = vld [vmem:[%s1887] ss:$8 sm:$0x10]
        %v1890 = vor.u32 %v1888, %v1889
        %v1892 = vlaneseq
        %v1893 = vshrl.u32 %v1892, 7
        %v1894 = vsub.s32 0, %v1893
        %v1895 = vrot.slane %v1890, %v1894
        %v1896 = vlaneseq
        %v1897 = vshrl.u32 %v1896, 7
        %v1898 = vsub.s32 1, %v1897
        %v1899 = vrot.slane %v1890, %v1898
        %v1900 = vlaneseq
        %v1901 = vshrl.u32 %v1900, 7
        %v1902 = vsub.s32 2, %v1901
        %v1903 = vrot.slane %v1890, %v1902
        %v1904 = vlaneseq
        %v1905 = vshrl.u32 %v1904, 7
        %v1906 = vsub.s32 3, %v1905
        %v1907 = vrot.slane %v1890, %v1906
        %v1908 = vlaneseq
        %v1909 = vshrl.u32 %v1908, 7
        %v1910 = vsub.s32 4, %v1909
        %v1911 = vrot.slane %v1890, %v1910
        %v1912 = vcombine.low %v1895, %v1899
        %v1913 = vcombine.low %v1903, %v1907
        %1914 = vrot.lane.b32.xlu0 %v1912, 57
        %v1915 = vpop.permute.xlu0 %1914
        %1916 = vrot.lane.b32.xlu0 %v1913, 57
        %v1917 = vpop.permute.xlu0 %1916
        %1918 = vrot.lane.b32.xlu0 %v1911, 57
        %v1919 = vpop.permute.xlu0 %1918
        %v1920 = vrot.slane %v1915, 4
        %v1921 = vrot.slane %v1917, 4
        %v1922 = vsel %vm486, %v1920, %v1915
        %v1923 = vsel %vm356, %v1920, %v1921
        %v1924 = vsel %vm486, %v1923, %v1917
        %v1925 = vsel %vm486, %v1921, %v1919
        %v1929 = vmul.f32 %v1884, %v1922
        %v1930 = vmul.f32 %v1885, %v1924
        %v1931 = vmul.f32 %v1886, %v1925
        %v1935 = vcombine.low %v1929, %v1929
        %v1936 = vcombine.low %v1930, %v1930
        %v1937 = vcombine.low %v1931, %v1931
        %1938 = vrot.lane.b32.xlu0 %v1935, 71
        %v1939 = vpop.permute.xlu0 %1938
        %1940 = vrot.lane.b32.xlu0 %v1929, 71
        %v1941 = vpop.permute.xlu0 %1940
        %1942 = vrot.lane.b32.xlu0 %v1936, 71
        %v1943 = vpop.permute.xlu0 %1942
        %1944 = vrot.lane.b32.xlu0 %v1930, 71
        %v1945 = vpop.permute.xlu0 %1944
        %1946 = vrot.lane.b32.xlu0 %v1937, 71
        %v1947 = vpop.permute.xlu0 %1946
        %v1948 = vsel %vm513, %v1939, %v1941
        %v1949 = vsel %vm513, %v1941, %v1943
        %v1950 = vsel %vm513, %v1943, %v1945
        %v1951 = vsel %vm513, %v1945, %v1947
        %1957 = vst [vmem:[#allocation3 + $0x168] sm:$0xf0] %v1948
        %1958 = vst [vmem:[#allocation3 + $0x170] sm:$0xf0] %v1949
        %1959 = vst [vmem:[#allocation3 + $0x178] sm:$0xf0] %v1950
        %1960 = vst [vmem:[#allocation3 + $0x180] sm:$0xf0] %v1951
        %1961 = vst.msk [vmem:[#allocation3 + $0x188] sm:$0xf0] %vm527, %v1947
        %v1962 = vld [vmem:[#allocation2 + $0x8] sm:$0xff]
        %v1963 = vld [vmem:[#allocation2 + $0x10] sm:$0xff]
        %v1964 = vld [vmem:[#allocation2 + $0x18] sm:$0xf]
        %s1965 = scalar_lea.vmem %s6, 84
        %v1966 = vld [vmem:[%s1965] ss:$8 sm:$0xf]
        %v1967 = vld [vmem:[%s1965] ss:$8 sm:$0x10]
        %v1968 = vor.u32 %v1966, %v1967
        %v1970 = vlaneseq
        %v1971 = vshrl.u32 %v1970, 7
        %v1972 = vsub.s32 0, %v1971
        %v1973 = vrot.slane %v1968, %v1972
        %v1974 = vlaneseq
        %v1975 = vshrl.u32 %v1974, 7
        %v1976 = vsub.s32 1, %v1975
        %v1977 = vrot.slane %v1968, %v1976
        %v1978 = vlaneseq
        %v1979 = vshrl.u32 %v1978, 7
        %v1980 = vsub.s32 2, %v1979
        %v1981 = vrot.slane %v1968, %v1980
        %v1982 = vlaneseq
        %v1983 = vshrl.u32 %v1982, 7
        %v1984 = vsub.s32 3, %v1983
        %v1985 = vrot.slane %v1968, %v1984
        %v1986 = vlaneseq
        %v1987 = vshrl.u32 %v1986, 7
        %v1988 = vsub.s32 4, %v1987
        %v1989 = vrot.slane %v1968, %v1988
        %v1990 = vcombine.low %v1973, %v1977
        %v1991 = vcombine.low %v1981, %v1985
        %1992 = vrot.lane.b32.xlu0 %v1990, 58
        %v1993 = vpop.permute.xlu0 %1992
        %1994 = vrot.lane.b32.xlu0 %v1991, 58
        %v1995 = vpop.permute.xlu0 %1994
        %1996 = vrot.lane.b32.xlu0 %v1989, 58
        %v1997 = vpop.permute.xlu0 %1996
        %v1998 = vrot.slane %v1993, 4
        %v1999 = vrot.slane %v1995, 4
        %v2000 = vsel %vm567, %v1998, %v1993
        %v2001 = vsel %vm356, %v1998, %v1999
        %v2002 = vsel %vm567, %v2001, %v1995
        %v2003 = vsel %vm567, %v1999, %v1997
        %v2007 = vmul.f32 %v1962, %v2000
        %v2008 = vmul.f32 %v1963, %v2002
        %v2009 = vmul.f32 %v1964, %v2003
        %v2013 = vcombine.high %v2007, %v2007
        %v2014 = vcombine.high %v2008, %v2008
        %2015 = vrot.lane.b32.xlu0 %v2007, 70
        %v2016 = vpop.permute.xlu0 %2015
        %2017 = vrot.lane.b32.xlu0 %v2013, 70
        %v2018 = vpop.permute.xlu0 %2017
        %2019 = vrot.lane.b32.xlu0 %v2008, 70
        %v2020 = vpop.permute.xlu0 %2019
        %2021 = vrot.lane.b32.xlu0 %v2014, 70
        %v2022 = vpop.permute.xlu0 %2021
        %2023 = vrot.lane.b32.xlu0 %v2009, 70
        %v2024 = vpop.permute.xlu0 %2023
        %v2025 = vsel %vm593, %v2016, %v2018
        %v2026 = vsel %vm593, %v2018, %v2020
        %v2027 = vsel %vm593, %v2020, %v2022
        %v2028 = vsel %vm593, %v2022, %v2024
        %2034 = vst [vmem:[#allocation3 + $0x190] sm:$0xf] %v2025
        %2035 = vst [vmem:[#allocation3 + $0x198] sm:$0xf] %v2026
        %2036 = vst [vmem:[#allocation3 + $0x1a0] sm:$0xf] %v2027
        %2037 = vst [vmem:[#allocation3 + $0x1a8] sm:$0xf] %v2028
        %2038 = vst.msk [vmem:[#allocation3 + $0x1b0] sm:$0xf] %vm446, %v2024
        %v2039 = vld [vmem:[#allocation2 + $0x8] sm:$0xff]
        %v2040 = vld [vmem:[#allocation2 + $0x10] sm:$0xff]
        %v2041 = vld [vmem:[#allocation2 + $0x18] sm:$0xf]
        %s2042 = scalar_lea.vmem %s6, 85
        %v2043 = vld [vmem:[%s2042] ss:$8 sm:$0xf]
        %v2044 = vld [vmem:[%s2042] ss:$8 sm:$0x10]
        %v2045 = vor.u32 %v2043, %v2044
        %v2047 = vlaneseq
        %v2048 = vshrl.u32 %v2047, 7
        %v2049 = vsub.s32 0, %v2048
        %v2050 = vrot.slane %v2045, %v2049
        %v2051 = vlaneseq
        %v2052 = vshrl.u32 %v2051, 7
        %v2053 = vsub.s32 1, %v2052
        %v2054 = vrot.slane %v2045, %v2053
        %v2055 = vlaneseq
        %v2056 = vshrl.u32 %v2055, 7
        %v2057 = vsub.s32 2, %v2056
        %v2058 = vrot.slane %v2045, %v2057
        %v2059 = vlaneseq
        %v2060 = vshrl.u32 %v2059, 7
        %v2061 = vsub.s32 3, %v2060
        %v2062 = vrot.slane %v2045, %v2061
        %v2063 = vlaneseq
        %v2064 = vshrl.u32 %v2063, 7
        %v2065 = vsub.s32 4, %v2064
        %v2066 = vrot.slane %v2045, %v2065
        %v2067 = vcombine.low %v2050, %v2054
        %v2068 = vcombine.low %v2058, %v2062
        %2069 = vrot.lane.b32.xlu0 %v2067, 64
        %v2070 = vpop.permute.xlu0 %2069
        %2071 = vrot.lane.b32.xlu0 %v2068, 64
        %v2072 = vpop.permute.xlu0 %2071
        %2073 = vrot.lane.b32.xlu0 %v2066, 64
        %v2074 = vpop.permute.xlu0 %2073
        %v2075 = vrot.slane %v2070, 4
        %v2076 = vrot.slane %v2072, 4
        %v2077 = vsel %vm646, %v2075, %v2070
        %v2078 = vsel %vm356, %v2075, %v2076
        %v2079 = vsel %vm646, %v2078, %v2072
        %v2080 = vsel %vm646, %v2076, %v2074
        %v2084 = vmul.f32 %v2039, %v2077
        %v2085 = vmul.f32 %v2040, %v2079
        %v2086 = vmul.f32 %v2041, %v2080
        %v2090 = vcombine.low %v2084, %v2084
        %v2091 = vcombine.low %v2085, %v2085
        %v2092 = vcombine.low %v2086, %v2086
        %2093 = vrot.lane.b32.xlu0 %v2090, 64
        %v2094 = vpop.permute.xlu0 %2093
        %2095 = vrot.lane.b32.xlu0 %v2084, 64
        %v2096 = vpop.permute.xlu0 %2095
        %2097 = vrot.lane.b32.xlu0 %v2091, 64
        %v2098 = vpop.permute.xlu0 %2097
        %2099 = vrot.lane.b32.xlu0 %v2085, 64
        %v2100 = vpop.permute.xlu0 %2099
        %2101 = vrot.lane.b32.xlu0 %v2092, 64
        %v2102 = vpop.permute.xlu0 %2101
        %v2103 = vsel %vm646, %v2094, %v2096
        %v2104 = vsel %vm646, %v2096, %v2098
        %v2105 = vsel %vm646, %v2098, %v2100
        %v2106 = vsel %vm646, %v2100, %v2102
        %2112 = vst [vmem:[#allocation3 + $0x190] sm:$0xf0] %v2103
        %2113 = vst [vmem:[#allocation3 + $0x198] sm:$0xf0] %v2104
        %2114 = vst [vmem:[#allocation3 + $0x1a0] sm:$0xf0] %v2105
        %2115 = vst [vmem:[#allocation3 + $0x1a8] sm:$0xf0] %v2106
        %2116 = vst.msk [vmem:[#allocation3 + $0x1b0] sm:$0xf0] %vm527, %v2102
        %v2117 = vld [vmem:[#allocation2 + $0x8] sm:$0xff]
        %v2118 = vld [vmem:[#allocation2 + $0x10] sm:$0xff]
        %v2119 = vld [vmem:[#allocation2 + $0x18] sm:$0xff]
        %s2120 = scalar_lea.vmem %s6, 86
        %v2121 = vld [vmem:[%s2120] ss:$8 sm:$0xf]
        %v2122 = vld [vmem:[%s2120] ss:$8 sm:$0x10]
        %v2123 = vor.u32 %v2121, %v2122
        %v2125 = vlaneseq
        %v2126 = vshrl.u32 %v2125, 7
        %v2127 = vsub.s32 0, %v2126
        %v2128 = vrot.slane %v2123, %v2127
        %v2129 = vlaneseq
        %v2130 = vshrl.u32 %v2129, 7
        %v2131 = vsub.s32 1, %v2130
        %v2132 = vrot.slane %v2123, %v2131
        %v2133 = vlaneseq
        %v2134 = vshrl.u32 %v2133, 7
        %v2135 = vsub.s32 2, %v2134
        %v2136 = vrot.slane %v2123, %v2135
        %v2137 = vlaneseq
        %v2138 = vshrl.u32 %v2137, 7
        %v2139 = vsub.s32 3, %v2138
        %v2140 = vrot.slane %v2123, %v2139
        %v2141 = vlaneseq
        %v2142 = vshrl.u32 %v2141, 7
        %v2143 = vsub.s32 4, %v2142
        %v2144 = vrot.slane %v2123, %v2143
        %v2145 = vcombine.low %v2128, %v2132
        %v2146 = vcombine.low %v2136, %v2140
        %2147 = vrot.lane.b32.xlu0 %v2145, 65
        %v2148 = vpop.permute.xlu0 %2147
        %2149 = vrot.lane.b32.xlu0 %v2146, 65
        %v2150 = vpop.permute.xlu0 %2149
        %2151 = vrot.lane.b32.xlu0 %v2144, 65
        %v2152 = vpop.permute.xlu0 %2151
        %v2153 = vrot.slane %v2148, 4
        %v2154 = vrot.slane %v2150, 4
        %v2155 = vrot.slane %v2152, 4
        %v2156 = vsel %vm726, %v2153, %v2148
        %v2157 = vsel %vm356, %v2153, %v2154
        %v2158 = vsel %vm726, %v2157, %v2150
        %v2159 = vsel %vm356, %v2154, %v2155
        %v2160 = vsel %vm726, %v2159, %v2152
        %v2164 = vmul.f32 %v2117, %v2156
        %v2165 = vmul.f32 %v2118, %v2158
        %v2166 = vmul.f32 %v2119, %v2160
        %v2170 = vcombine.high %v2164, %v2164
        %v2171 = vcombine.high %v2165, %v2165
        %v2172 = vcombine.high %v2166, %v2166
        %2173 = vrot.lane.b32.xlu0 %v2164, 63
        %v2174 = vpop.permute.xlu0 %2173
        %2175 = vrot.lane.b32.xlu0 %v2170, 63
        %v2176 = vpop.permute.xlu0 %2175
        %2177 = vrot.lane.b32.xlu0 %v2165, 63
        %v2178 = vpop.permute.xlu0 %2177
        %2179 = vrot.lane.b32.xlu0 %v2171, 63
        %v2180 = vpop.permute.xlu0 %2179
        %2181 = vrot.lane.b32.xlu0 %v2166, 63
        %v2182 = vpop.permute.xlu0 %2181
        %2183 = vrot.lane.b32.xlu0 %v2172, 63
        %v2184 = vpop.permute.xlu0 %2183
        %v2185 = vsel %vm756, %v2174, %v2176
        %v2186 = vsel %vm756, %v2176, %v2178
        %v2187 = vsel %vm756, %v2178, %v2180
        %v2188 = vsel %vm756, %v2180, %v2182
        %v2189 = vsel %vm756, %v2182, %v2184
        %2195 = vst [vmem:[#allocation3 + $0x1b8] sm:$0xf] %v2185
        %2196 = vst [vmem:[#allocation3 + $0x1c0] sm:$0xf] %v2186
        %2197 = vst [vmem:[#allocation3 + $0x1c8] sm:$0xf] %v2187
        %2198 = vst [vmem:[#allocation3 + $0x1d0] sm:$0xf] %v2188
        %2199 = vst.msk [vmem:[#allocation3 + $0x1d8] sm:$0xf] %vm446, %v2189
        %v2200 = vld [vmem:[#allocation2 + $0x8] sm:$0xff]
        %v2201 = vld [vmem:[#allocation2 + $0x10] sm:$0xff]
        %v2202 = vld [vmem:[#allocation2 + $0x18] sm:$0xff]
        %s2203 = scalar_lea.vmem %s6, 87
        %v2204 = vld [vmem:[%s2203] ss:$8 sm:$0xf]
        %v2205 = vld [vmem:[%s2203] ss:$8 sm:$0x10]
        %v2206 = vor.u32 %v2204, %v2205
        %v2208 = vlaneseq
        %v2209 = vshrl.u32 %v2208, 7
        %v2210 = vsub.s32 0, %v2209
        %v2211 = vrot.slane %v2206, %v2210
        %v2212 = vlaneseq
        %v2213 = vshrl.u32 %v2212, 7
        %v2214 = vsub.s32 1, %v2213
        %v2215 = vrot.slane %v2206, %v2214
        %v2216 = vlaneseq
        %v2217 = vshrl.u32 %v2216, 7
        %v2218 = vsub.s32 2, %v2217
        %v2219 = vrot.slane %v2206, %v2218
        %v2220 = vlaneseq
        %v2221 = vshrl.u32 %v2220, 7
        %v2222 = vsub.s32 3, %v2221
        %v2223 = vrot.slane %v2206, %v2222
        %v2224 = vlaneseq
        %v2225 = vshrl.u32 %v2224, 7
        %v2226 = vsub.s32 4, %v2225
        %v2227 = vrot.slane %v2206, %v2226
        %v2228 = vcombine.low %v2211, %v2215
        %v2229 = vcombine.low %v2219, %v2223
        %2230 = vrot.lane.b32.xlu0 %v2228, 66
        %v2231 = vpop.permute.xlu0 %2230
        %2232 = vrot.lane.b32.xlu0 %v2229, 66
        %v2233 = vpop.permute.xlu0 %2232
        %2234 = vrot.lane.b32.xlu0 %v2227, 66
        %v2235 = vpop.permute.xlu0 %2234
        %v2236 = vrot.slane %v2231, 4
        %v2237 = vrot.slane %v2233, 4
        %v2238 = vrot.slane %v2235, 4
        %v2239 = vsel %vm811, %v2236, %v2231
        %v2240 = vsel %vm356, %v2236, %v2237
        %v2241 = vsel %vm811, %v2240, %v2233
        %v2242 = vsel %vm356, %v2237, %v2238
        %v2243 = vsel %vm811, %v2242, %v2235
        %v2247 = vmul.f32 %v2200, %v2239
        %v2248 = vmul.f32 %v2201, %v2241
        %v2249 = vmul.f32 %v2202, %v2243
        %v2253 = vcombine.low %v2247, %v2247
        %v2254 = vcombine.low %v2248, %v2248
        %v2255 = vcombine.low %v2249, %v2249
        %2256 = vrot.lane.b32.xlu0 %v2253, 62
        %v2257 = vpop.permute.xlu0 %2256
        %2258 = vrot.lane.b32.xlu0 %v2247, 62
        %v2259 = vpop.permute.xlu0 %2258
        %2260 = vrot.lane.b32.xlu0 %v2254, 62
        %v2261 = vpop.permute.xlu0 %2260
        %2262 = vrot.lane.b32.xlu0 %v2248, 62
        %v2263 = vpop.permute.xlu0 %2262
        %2264 = vrot.lane.b32.xlu0 %v2255, 62
        %v2265 = vpop.permute.xlu0 %2264
        %2266 = vrot.lane.b32.xlu0 %v2249, 62
        %v2267 = vpop.permute.xlu0 %2266
        %v2268 = vsel %vm841, %v2257, %v2259
        %v2269 = vsel %vm841, %v2259, %v2261
        %v2270 = vsel %vm841, %v2261, %v2263
        %v2271 = vsel %vm841, %v2263, %v2265
        %v2272 = vsel %vm841, %v2265, %v2267
        %2278 = vst [vmem:[#allocation3 + $0x1b8] sm:$0xf0] %v2268
        %2279 = vst [vmem:[#allocation3 + $0x1c0] sm:$0xf0] %v2269
        %2280 = vst [vmem:[#allocation3 + $0x1c8] sm:$0xf0] %v2270
        %2281 = vst [vmem:[#allocation3 + $0x1d0] sm:$0xf0] %v2271
        %2282 = vst.msk [vmem:[#allocation3 + $0x1d8] sm:$0xf0] %vm527, %v2272
        %v2283 = vld [vmem:[#allocation2 + $0x8] sm:$0xff]
        %v2284 = vld [vmem:[#allocation2 + $0x10] sm:$0xff]
        %v2285 = vld [vmem:[#allocation2 + $0x18] sm:$0xff]
        %s2286 = scalar_lea.vmem %s6, 120
        %v2287 = vld [vmem:[%s2286] ss:$8 sm:$0xf]
        %v2288 = vld [vmem:[%s2286] ss:$8 sm:$0x10]
        %v2289 = vor.u32 %v2287, %v2288
        %v2291 = vlaneseq
        %v2292 = vshrl.u32 %v2291, 7
        %v2293 = vsub.s32 0, %v2292
        %v2294 = vrot.slane %v2289, %v2293
        %v2295 = vlaneseq
        %v2296 = vshrl.u32 %v2295, 7
        %v2297 = vsub.s32 1, %v2296
        %v2298 = vrot.slane %v2289, %v2297
        %v2299 = vlaneseq
        %v2300 = vshrl.u32 %v2299, 7
        %v2301 = vsub.s32 2, %v2300
        %v2302 = vrot.slane %v2289, %v2301
        %v2303 = vlaneseq
        %v2304 = vshrl.u32 %v2303, 7
        %v2305 = vsub.s32 3, %v2304
        %v2306 = vrot.slane %v2289, %v2305
        %v2307 = vlaneseq
        %v2308 = vshrl.u32 %v2307, 7
        %v2309 = vsub.s32 4, %v2308
        %v2310 = vrot.slane %v2289, %v2309
        %v2311 = vcombine.low %v2294, %v2298
        %v2312 = vcombine.low %v2302, %v2306
        %2313 = vrot.lane.b32.xlu0 %v2311, 72
        %v2314 = vpop.permute.xlu0 %2313
        %2315 = vrot.lane.b32.xlu0 %v2312, 72
        %v2316 = vpop.permute.xlu0 %2315
        %2317 = vrot.lane.b32.xlu0 %v2310, 72
        %v2318 = vpop.permute.xlu0 %2317
        %v2319 = vrot.slane %v2314, 4
        %v2320 = vrot.slane %v2316, 4
        %v2321 = vrot.slane %v2318, 4
        %v2322 = vsel %vm432, %v2319, %v2314
        %v2323 = vsel %vm356, %v2319, %v2320
        %v2324 = vsel %vm432, %v2323, %v2316
        %v2325 = vsel %vm356, %v2320, %v2321
        %v2326 = vsel %vm432, %v2325, %v2318
        %v2330 = vmul.f32 %v2283, %v2322
        %v2331 = vmul.f32 %v2284, %v2324
        %v2332 = vmul.f32 %v2285, %v2326
        %v2336 = vcombine.high %v2330, %v2330
        %v2337 = vcombine.high %v2331, %v2331
        %v2338 = vcombine.high %v2332, %v2332
        %2339 = vrot.lane.b32.xlu0 %v2330, 56
        %v2340 = vpop.permute.xlu0 %2339
        %2341 = vrot.lane.b32.xlu0 %v2336, 56
        %v2342 = vpop.permute.xlu0 %2341
        %2343 = vrot.lane.b32.xlu0 %v2331, 56
        %v2344 = vpop.permute.xlu0 %2343
        %2345 = vrot.lane.b32.xlu0 %v2337, 56
        %v2346 = vpop.permute.xlu0 %2345
        %2347 = vrot.lane.b32.xlu0 %v2332, 56
        %v2348 = vpop.permute.xlu0 %2347
        %2349 = vrot.lane.b32.xlu0 %v2338, 56
        %v2350 = vpop.permute.xlu0 %2349
        %v2351 = vsel %vm406, %v2340, %v2342
        %v2352 = vsel %vm406, %v2342, %v2344
        %v2353 = vsel %vm406, %v2344, %v2346
        %v2354 = vsel %vm406, %v2346, %v2348
        %v2355 = vsel %vm406, %v2348, %v2350
        %2361 = vst [vmem:[#allocation3 + $0x1e0] sm:$0xf] %v2351
        %2362 = vst [vmem:[#allocation3 + $0x1e8] sm:$0xf] %v2352
        %2363 = vst [vmem:[#allocation3 + $0x1f0] sm:$0xf] %v2353
        %2364 = vst [vmem:[#allocation3 + $0x1f8] sm:$0xf] %v2354
        %2365 = vst.msk [vmem:[#allocation3 + $0x200] sm:$0xf] %vm446, %v2355
        %v2366 = vld [vmem:[#allocation2 + $0x8] sm:$0xff]
        %v2367 = vld [vmem:[#allocation2 + $0x10] sm:$0xff]
        %v2368 = vld [vmem:[#allocation2 + $0x18] sm:$0xff]
        %s2369 = scalar_lea.vmem %s6, 121
        %v2370 = vld [vmem:[%s2369] ss:$8 sm:$0xf]
        %v2371 = vld [vmem:[%s2369] ss:$8 sm:$0x10]
        %v2372 = vor.u32 %v2370, %v2371
        %v2374 = vlaneseq
        %v2375 = vshrl.u32 %v2374, 7
        %v2376 = vsub.s32 0, %v2375
        %v2377 = vrot.slane %v2372, %v2376
        %v2378 = vlaneseq
        %v2379 = vshrl.u32 %v2378, 7
        %v2380 = vsub.s32 1, %v2379
        %v2381 = vrot.slane %v2372, %v2380
        %v2382 = vlaneseq
        %v2383 = vshrl.u32 %v2382, 7
        %v2384 = vsub.s32 2, %v2383
        %v2385 = vrot.slane %v2372, %v2384
        %v2386 = vlaneseq
        %v2387 = vshrl.u32 %v2386, 7
        %v2388 = vsub.s32 3, %v2387
        %v2389 = vrot.slane %v2372, %v2388
        %v2390 = vlaneseq
        %v2391 = vshrl.u32 %v2390, 7
        %v2392 = vsub.s32 4, %v2391
        %v2393 = vrot.slane %v2372, %v2392
        %v2394 = vcombine.low %v2377, %v2381
        %v2395 = vcombine.low %v2385, %v2389
        %2396 = vrot.lane.b32.xlu0 %v2394, 73
        %v2397 = vpop.permute.xlu0 %2396
        %2398 = vrot.lane.b32.xlu0 %v2395, 73
        %v2399 = vpop.permute.xlu0 %2398
        %2400 = vrot.lane.b32.xlu0 %v2393, 73
        %v2401 = vpop.permute.xlu0 %2400
        %v2402 = vrot.slane %v2397, 4
        %v2403 = vrot.slane %v2399, 4
        %v2404 = vrot.slane %v2401, 4
        %v2405 = vsel %vm979, %v2402, %v2397
        %v2406 = vsel %vm356, %v2402, %v2403
        %v2407 = vsel %vm979, %v2406, %v2399
        %v2408 = vsel %vm356, %v2403, %v2404
        %v2409 = vsel %vm979, %v2408, %v2401
        %v2413 = vmul.f32 %v2366, %v2405
        %v2414 = vmul.f32 %v2367, %v2407
        %v2415 = vmul.f32 %v2368, %v2409
        %v2419 = vcombine.low %v2413, %v2413
        %v2420 = vcombine.low %v2414, %v2414
        %v2421 = vcombine.low %v2415, %v2415
        %2422 = vrot.lane.b32.xlu0 %v2419, 55
        %v2423 = vpop.permute.xlu0 %2422
        %2424 = vrot.lane.b32.xlu0 %v2413, 55
        %v2425 = vpop.permute.xlu0 %2424
        %2426 = vrot.lane.b32.xlu0 %v2420, 55
        %v2427 = vpop.permute.xlu0 %2426
        %2428 = vrot.lane.b32.xlu0 %v2414, 55
        %v2429 = vpop.permute.xlu0 %2428
        %2430 = vrot.lane.b32.xlu0 %v2421, 55
        %v2431 = vpop.permute.xlu0 %2430
        %2432 = vrot.lane.b32.xlu0 %v2415, 55
        %v2433 = vpop.permute.xlu0 %2432
        %v2434 = vsel %vm1009, %v2423, %v2425
        %v2435 = vsel %vm1009, %v2425, %v2427
        %v2436 = vsel %vm1009, %v2427, %v2429
        %v2437 = vsel %vm1009, %v2429, %v2431
        %v2438 = vsel %vm1009, %v2431, %v2433
        %2444 = vst [vmem:[#allocation3 + $0x1e0] sm:$0xf0] %v2434
        %2445 = vst [vmem:[#allocation3 + $0x1e8] sm:$0xf0] %v2435
        %2446 = vst [vmem:[#allocation3 + $0x1f0] sm:$0xf0] %v2436
        %2447 = vst [vmem:[#allocation3 + $0x1f8] sm:$0xf0] %v2437
        %2448 = vst.msk [vmem:[#allocation3 + $0x200] sm:$0xf0] %vm527, %v2438
        %v2449 = vld [vmem:[#allocation2 + $0x8] sm:$0xff]
        %v2450 = vld [vmem:[#allocation2 + $0x10] sm:$0xff]
        %v2451 = vld [vmem:[#allocation2 + $0x18] sm:$0xff]
        %s2452 = scalar_lea.vmem %s6, 122
        %v2453 = vld [vmem:[%s2452] ss:$8 sm:$0xf]
        %v2454 = vld [vmem:[%s2452] ss:$8 sm:$0x10]
        %v2455 = vor.u32 %v2453, %v2454
        %v2457 = vlaneseq
        %v2458 = vshrl.u32 %v2457, 7
        %v2459 = vsub.s32 0, %v2458
        %v2460 = vrot.slane %v2455, %v2459
        %v2461 = vlaneseq
        %v2462 = vshrl.u32 %v2461, 7
        %v2463 = vsub.s32 1, %v2462
        %v2464 = vrot.slane %v2455, %v2463
        %v2465 = vlaneseq
        %v2466 = vshrl.u32 %v2465, 7
        %v2467 = vsub.s32 2, %v2466
        %v2468 = vrot.slane %v2455, %v2467
        %v2469 = vlaneseq
        %v2470 = vshrl.u32 %v2469, 7
        %v2471 = vsub.s32 3, %v2470
        %v2472 = vrot.slane %v2455, %v2471
        %v2473 = vlaneseq
        %v2474 = vshrl.u32 %v2473, 7
        %v2475 = vsub.s32 4, %v2474
        %v2476 = vrot.slane %v2455, %v2475
        %v2477 = vcombine.low %v2460, %v2464
        %v2478 = vcombine.low %v2468, %v2472
        %2479 = vrot.lane.b32.xlu0 %v2477, 74
        %v2480 = vpop.permute.xlu0 %2479
        %2481 = vrot.lane.b32.xlu0 %v2478, 74
        %v2482 = vpop.permute.xlu0 %2481
        %2483 = vrot.lane.b32.xlu0 %v2476, 74
        %v2484 = vpop.permute.xlu0 %2483
        %v2485 = vrot.slane %v2480, 4
        %v2486 = vrot.slane %v2482, 4
        %v2487 = vrot.slane %v2484, 4
        %v2488 = vsel %vm1064, %v2485, %v2480
        %v2489 = vsel %vm356, %v2485, %v2486
        %v2490 = vsel %vm1064, %v2489, %v2482
        %v2491 = vsel %vm356, %v2486, %v2487
        %v2492 = vsel %vm1064, %v2491, %v2484
        %v2496 = vmul.f32 %v2449, %v2488
        %v2497 = vmul.f32 %v2450, %v2490
        %v2498 = vmul.f32 %v2451, %v2492
        %v2502 = vcombine.high %v2496, %v2496
        %v2503 = vcombine.high %v2497, %v2497
        %v2504 = vcombine.high %v2498, %v2498
        %2505 = vrot.lane.b32.xlu0 %v2496, 54
        %v2506 = vpop.permute.xlu0 %2505
        %2507 = vrot.lane.b32.xlu0 %v2502, 54
        %v2508 = vpop.permute.xlu0 %2507
        %2509 = vrot.lane.b32.xlu0 %v2497, 54
        %v2510 = vpop.permute.xlu0 %2509
        %2511 = vrot.lane.b32.xlu0 %v2503, 54
        %v2512 = vpop.permute.xlu0 %2511
        %2513 = vrot.lane.b32.xlu0 %v2498, 54
        %v2514 = vpop.permute.xlu0 %2513
        %2515 = vrot.lane.b32.xlu0 %v2504, 54
        %v2516 = vpop.permute.xlu0 %2515
        %v2517 = vsel %vm1094, %v2506, %v2508
        %v2518 = vsel %vm1094, %v2508, %v2510
        %v2519 = vsel %vm1094, %v2510, %v2512
        %v2520 = vsel %vm1094, %v2512, %v2514
        %v2521 = vsel %vm1094, %v2514, %v2516
        %2527 = vst [vmem:[#allocation3 + $0x208] sm:$0xf] %v2517
        %2528 = vst [vmem:[#allocation3 + $0x210] sm:$0xf] %v2518
        %2529 = vst [vmem:[#allocation3 + $0x218] sm:$0xf] %v2519
        %2530 = vst [vmem:[#allocation3 + $0x220] sm:$0xf] %v2520
        %2531 = vst.msk [vmem:[#allocation3 + $0x228] sm:$0xf] %vm446, %v2521
        %v2532 = vld [vmem:[%s2] sm:$0xf]
        %v2533 = vld [vmem:[#allocation3] sm:$0xff]
        %v2534 = vld [vmem:[#allocation3 + $0x8] sm:$0xff]
        %v2535 = vld [vmem:[#allocation3 + $0x10] sm:$0xff]
        %v2536 = vld [vmem:[#allocation3 + $0x18] sm:$0xff]
        %v2537 = vld [vmem:[#allocation3 + $0x20] sm:$0xff]
        %v2538 = vld [vmem:[#allocation3 + $0x28] sm:$0xff]
        %v2539 = vld [vmem:[#allocation3 + $0x30] sm:$0xff]
        %v2540 = vld [vmem:[#allocation3 + $0x38] sm:$0xff]
        %v2541 = vld [vmem:[#allocation3 + $0x40] sm:$0xff]
        %v2542 = vld [vmem:[#allocation3 + $0x48] sm:$0xff]
        %v2543 = vld [vmem:[#allocation3 + $0x50] sm:$0xff]
        %v2544 = vld [vmem:[#allocation3 + $0x58] sm:$0xff]
        %v2545 = vld [vmem:[#allocation3 + $0x60] sm:$0xff]
        %v2546 = vld [vmem:[#allocation3 + $0x68] sm:$0xff]
        %v2547 = vld [vmem:[#allocation3 + $0x70] sm:$0xff]
        %v2548 = vld [vmem:[#allocation3 + $0x78] sm:$0xff]
        %v2549 = vld [vmem:[#allocation3 + $0x80] sm:$0xff]
        %v2550 = vld [vmem:[#allocation3 + $0x88] sm:$0xff]
        %v2551 = vld [vmem:[#allocation3 + $0x90] sm:$0xff]
        %v2552 = vld [vmem:[#allocation3 + $0x98] sm:$0xff]
        %v2553 = vld [vmem:[#allocation3 + $0xa0] sm:$0xff]
        %v2554 = vld [vmem:[#allocation3 + $0xa8] sm:$0xff]
        %v2555 = vld [vmem:[#allocation3 + $0xb0] sm:$0xff]
        %v2556 = vld [vmem:[#allocation3 + $0xb8] sm:$0xff]
        %v2557 = vld [vmem:[#allocation3 + $0xc0] sm:$0xff]
        %v2558 = vld [vmem:[#allocation3 + $0xc8] sm:$0xff]
        %v2559 = vld [vmem:[#allocation3 + $0xd0] sm:$0xff]
        %v2560 = vld [vmem:[#allocation3 + $0xd8] sm:$0xff]
        %v2561 = vld [vmem:[#allocation3 + $0xe0] sm:$0xff]
        %v2562 = vld [vmem:[#allocation3 + $0xe8] sm:$0xff]
        %v2563 = vld [vmem:[#allocation3 + $0xf0] sm:$0xff]
        %v2564 = vld [vmem:[#allocation3 + $0xf8] sm:$0xff]
        %v2565 = vld [vmem:[#allocation3 + $0x100] sm:$0xff]
        %v2566 = vld [vmem:[#allocation3 + $0x108] sm:$0xff]
        %v2567 = vld [vmem:[#allocation3 + $0x110] sm:$0xff]
        %v2568 = vld [vmem:[#allocation3 + $0x118] sm:$0xff]
        %v2569 = vld [vmem:[#allocation3 + $0x120] sm:$0xff]
        %v2570 = vld [vmem:[#allocation3 + $0x128] sm:$0xff]
        %v2571 = vld [vmem:[#allocation3 + $0x130] sm:$0xff]
        %v2572 = vld [vmem:[#allocation3 + $0x138] sm:$0xff]
        %v2573 = vld [vmem:[#allocation3 + $0x140] sm:$0xff]
        %v2574 = vld [vmem:[#allocation3 + $0x148] sm:$0xff]
        %v2575 = vld [vmem:[#allocation3 + $0x150] sm:$0xff]
        %v2576 = vld [vmem:[#allocation3 + $0x158] sm:$0xff]
        %v2577 = vld [vmem:[#allocation3 + $0x160] sm:$0xff]
        %v2578 = vld [vmem:[#allocation3 + $0x168] sm:$0xff]
        %v2579 = vld [vmem:[#allocation3 + $0x170] sm:$0xff]
        %v2580 = vld [vmem:[#allocation3 + $0x178] sm:$0xff]
        %v2581 = vld [vmem:[#allocation3 + $0x180] sm:$0xff]
        %v2582 = vld [vmem:[#allocation3 + $0x188] sm:$0xff]
        %v2583 = vld [vmem:[#allocation3 + $0x190] sm:$0xff]
        %v2584 = vld [vmem:[#allocation3 + $0x198] sm:$0xff]
        %v2585 = vld [vmem:[#allocation3 + $0x1a0] sm:$0xff]
        %v2586 = vld [vmem:[#allocation3 + $0x1a8] sm:$0xff]
        %v2587 = vld [vmem:[#allocation3 + $0x1b0] sm:$0xff]
        %v2588 = vld [vmem:[#allocation3 + $0x1b8] sm:$0xff]
        %v2589 = vld [vmem:[#allocation3 + $0x1c0] sm:$0xff]
        %v2590 = vld [vmem:[#allocation3 + $0x1c8] sm:$0xff]
        %v2591 = vld [vmem:[#allocation3 + $0x1d0] sm:$0xff]
        %v2592 = vld [vmem:[#allocation3 + $0x1d8] sm:$0xff]
        %v2593 = vld [vmem:[#allocation3 + $0x1e0] sm:$0xff]
        %v2594 = vld [vmem:[#allocation3 + $0x1e8] sm:$0xff]
        %v2595 = vld [vmem:[#allocation3 + $0x1f0] sm:$0xff]
        %v2596 = vld [vmem:[#allocation3 + $0x1f8] sm:$0xff]
        %v2597 = vld [vmem:[#allocation3 + $0x200] sm:$0xff]
        %v2598 = vld [vmem:[#allocation3 + $0x208] sm:$0xf]
        %v2599 = vld [vmem:[#allocation3 + $0x210] sm:$0xf]
        %v2600 = vld [vmem:[#allocation3 + $0x218] sm:$0xf]
        %v2601 = vld [vmem:[#allocation3 + $0x220] sm:$0xf]
        %v2602 = vld [vmem:[#allocation3 + $0x228] sm:$0xf]
        %v2603 = vld [vmem:[%s3] sm:$0xf]
        %2605 = vset.pattern.permute.xlu0 0
        %2606 = vperm.xlu0 %2605, %v2603
        %v2607 = vpop.permute.xlu0 %2606
        %vm2609 = vcmask 883712
        %v2611 = vsel %vm2609, %v2532, 0
        %v2614 = vsel %vm356, %v2598, 0
        %v2617 = vsel %vm356, %v2599, 0
        %v2620 = vsel %vm356, %v2600, 0
        %v2623 = vsel %vm356, %v2601, 0
        %v2626 = vsel %vm356, %v2602, 0
        %2628 = vmatprep.subr.mxu0 %v2534
        %2629 = vmatpush1.msra.mxu0 %v2533
        %2630 = vmatprep.subr.mxu0 %v2539
        %2631 = vmatpush1.msra.mxu0 %v2538
        %2632 = vmatprep.subr.mxu0 %v2544
        %2633 = vmatpush1.msra.mxu0 %v2543
        %2634 = vmatprep.subr.mxu0 %v2549
        %2635 = vmatpush1.msra.mxu0 %v2548
        %2636 = vmatprep.subr.mxu0 %v2554
        %2637 = vmatpush1.msra.mxu0 %v2553
        %2638 = vmatprep.subr.mxu0 %v2559
        %2639 = vmatpush1.msra.mxu0 %v2558
        %2640 = vmatprep.subr.mxu0 %v2564
        %2641 = vmatpush1.msra.mxu0 %v2563
        %2642 = vmatprep.subr.mxu0 %v2569
        %2643 = vmatpush1.msra.mxu0 %v2568
        %2644 = vmatprep.subr.mxu0 %v2574
        %2645 = vmatpush1.msra.mxu0 %v2573
        %2646 = vmatprep.subr.mxu0 %v2579
        %2647 = vmatpush1.msra.mxu0 %v2578
        %2648 = vmatprep.subr.mxu0 %v2584
        %2649 = vmatpush1.msra.mxu0 %v2583
        %2650 = vmatprep.subr.mxu0 %v2589
        %2651 = vmatpush1.msra.mxu0 %v2588
        %2652 = vmatprep.subr.mxu0 %v2594
        %2653 = vmatpush1.msra.mxu0 %v2593
        %2654 = vmatprep.subr.mxu0 %v2617
        %2655 = vmatpush1.msra.mxu0 %v2614
        %2656 = vmatprep.subr.mxu0 0.0
        %2657 = vmatpush1.msra.mxu0 0.0
        %2658 = vmatprep.subr.mxu0 0.0
        %2659 = vmatpush1.msra.mxu0 0.0
        %2660 = vmatprep.subr.mxu0 0.0
        %2661 = vmatpush1.msra.mxu0 0.0
        %2662 = vmatprep.subr.mxu0 0.0
        %2663 = vmatpush1.msra.mxu0 0.0
        %2664 = vmatprep.subr.mxu0 0.0
        %2665 = vmatpush1.msra.mxu0 0.0
        %2666 = vmatprep.subr.mxu0 0.0
        %2667 = vmatpush1.msra.mxu0 0.0
        %2668 = vmatprep.subr.mxu0 0.0
        %2669 = vmatpush1.msra.mxu0 0.0
        %2670 = vmatprep.subr.mxu0 0.0
        %2671 = vmatpush1.msra.mxu0 0.0
        %2672 = vmatprep.subr.mxu0 0.0
        %2673 = vmatpush1.msra.mxu0 0.0
        %2674 = vmatprep.subr.mxu0 0.0
        %2675 = vmatpush1.msra.mxu0 0.0
        %2676 = vmatprep.subr.mxu0 0.0
        %2677 = vmatpush1.msra.mxu0 0.0
        %2678 = vmatprep.subr.mxu0 0.0
        %2679 = vmatpush1.msra.mxu0 0.0
        %2680 = vmatprep.subr.mxu0 0.0
        %2681 = vmatpush1.msra.mxu0 0.0
        %2682 = vmatprep.subr.mxu0 0.0
        %2683 = vmatpush1.msra.mxu0 0.0
        %2684 = vmatprep.subr.mxu0 0.0
        %2685 = vmatpush1.msra.mxu0 0.0
        %2686 = vmatprep.subr.mxu0 0.0
        %2687 = vmatpush1.msra.mxu0 0.0
        %2688 = vmatprep.subr.mxu0 0.0
        %2689 = vmatpush1.msra.mxu0 0.0
        %2690 = vmatprep.subr.mxu0 0.0
        %2691 = vmatpush1.msra.mxu0 0.0
        %2692 = vmatprep.mubr.f32.mxu0 0.0
        %2693 = vmatmul.mubr.f32.gmra.mrb[0].mxu0 %v2611
        %v2694 = vpop.f32.mrb[0].mxu0
        %v2695 = vadd.f32 %v2607, %v2694
        %v2696 = vpop.f32.mrb[0].mxu0
        %v2697 = vadd.f32 %v2607, %v2696
        %2698 = vdwg.mxu0
        %2699 = vmatprep.subr.mxu0 %v2536
        %2700 = vmatpush1.msra.mxu0 %v2535
        %2701 = vmatprep.subr.mxu0 %v2541
        %2702 = vmatpush1.msra.mxu0 %v2540
        %2703 = vmatprep.subr.mxu0 %v2546
        %2704 = vmatpush1.msra.mxu0 %v2545
        %2705 = vmatprep.subr.mxu0 %v2551
        %2706 = vmatpush1.msra.mxu0 %v2550
        %2707 = vmatprep.subr.mxu0 %v2556
        %2708 = vmatpush1.msra.mxu0 %v2555
        %2709 = vmatprep.subr.mxu0 %v2561
        %2710 = vmatpush1.msra.mxu0 %v2560
        %2711 = vmatprep.subr.mxu0 %v2566
        %2712 = vmatpush1.msra.mxu0 %v2565
        %2713 = vmatprep.subr.mxu0 %v2571
        %2714 = vmatpush1.msra.mxu0 %v2570
        %2715 = vmatprep.subr.mxu0 %v2576
        %2716 = vmatpush1.msra.mxu0 %v2575
        %2717 = vmatprep.subr.mxu0 %v2581
        %2718 = vmatpush1.msra.mxu0 %v2580
        %2719 = vmatprep.subr.mxu0 %v2586
        %2720 = vmatpush1.msra.mxu0 %v2585
        %2721 = vmatprep.subr.mxu0 %v2591
        %2722 = vmatpush1.msra.mxu0 %v2590
        %2723 = vmatprep.subr.mxu0 %v2596
        %2724 = vmatpush1.msra.mxu0 %v2595
        %2725 = vmatprep.subr.mxu0 %v2623
        %2726 = vmatpush1.msra.mxu0 %v2620
        %2727 = vmatprep.subr.mxu0 0.0
        %2728 = vmatpush1.msra.mxu0 0.0
        %2729 = vmatprep.subr.mxu0 0.0
        %2730 = vmatpush1.msra.mxu0 0.0
        %2731 = vmatprep.subr.mxu0 0.0
        %2732 = vmatpush1.msra.mxu0 0.0
        %2733 = vmatprep.subr.mxu0 0.0
        %2734 = vmatpush1.msra.mxu0 0.0
        %2735 = vmatprep.subr.mxu0 0.0
        %2736 = vmatpush1.msra.mxu0 0.0
        %2737 = vmatprep.subr.mxu0 0.0
        %2738 = vmatpush1.msra.mxu0 0.0
        %2739 = vmatprep.subr.mxu0 0.0
        %2740 = vmatpush1.msra.mxu0 0.0
        %2741 = vmatprep.subr.mxu0 0.0
        %2742 = vmatpush1.msra.mxu0 0.0
        %2743 = vmatprep.subr.mxu0 0.0
        %2744 = vmatpush1.msra.mxu0 0.0
        %2745 = vmatprep.subr.mxu0 0.0
        %2746 = vmatpush1.msra.mxu0 0.0
        %2747 = vmatprep.subr.mxu0 0.0
        %2748 = vmatpush1.msra.mxu0 0.0
        %2749 = vmatprep.subr.mxu0 0.0
        %2750 = vmatpush1.msra.mxu0 0.0
        %2751 = vmatprep.subr.mxu0 0.0
        %2752 = vmatpush1.msra.mxu0 0.0
        %2753 = vmatprep.subr.mxu0 0.0
        %2754 = vmatpush1.msra.mxu0 0.0
        %2755 = vmatprep.subr.mxu0 0.0
        %2756 = vmatpush1.msra.mxu0 0.0
        %2757 = vmatprep.subr.mxu0 0.0
        %2758 = vmatpush1.msra.mxu0 0.0
        %2759 = vmatprep.subr.mxu0 0.0
        %2760 = vmatpush1.msra.mxu0 0.0
        %2761 = vmatprep.subr.mxu0 0.0
        %2762 = vmatpush1.msra.mxu0 0.0
        %2763 = vmatprep.mubr.f32.mxu0 0.0
        %2764 = vmatmul.mubr.f32.gmra.mrb[0].mxu0 %v2611
        %v2765 = vpop.f32.mrb[0].mxu0
        %v2766 = vadd.f32 %v2607, %v2765
        %v2767 = vpop.f32.mrb[0].mxu0
        %v2768 = vadd.f32 %v2607, %v2767
        %2769 = vdwg.mxu0
        %2770 = vmatprep.subr.mxu0 0.0
        %2771 = vmatpush1.msra.mxu0 %v2537
        %2772 = vmatprep.subr.mxu0 0.0
        %2773 = vmatpush1.msra.mxu0 %v2542
        %2774 = vmatprep.subr.mxu0 0.0
        %2775 = vmatpush1.msra.mxu0 %v2547
        %2776 = vmatprep.subr.mxu0 0.0
        %2777 = vmatpush1.msra.mxu0 %v2552
        %2778 = vmatprep.subr.mxu0 0.0
        %2779 = vmatpush1.msra.mxu0 %v2557
        %2780 = vmatprep.subr.mxu0 0.0
        %2781 = vmatpush1.msra.mxu0 %v2562
        %2782 = vmatprep.subr.mxu0 0.0
        %2783 = vmatpush1.msra.mxu0 %v2567
        %2784 = vmatprep.subr.mxu0 0.0
        %2785 = vmatpush1.msra.mxu0 %v2572
        %2786 = vmatprep.subr.mxu0 0.0
        %2787 = vmatpush1.msra.mxu0 %v2577
        %2788 = vmatprep.subr.mxu0 0.0
        %2789 = vmatpush1.msra.mxu0 %v2582
        %2790 = vmatprep.subr.mxu0 0.0
        %2791 = vmatpush1.msra.mxu0 %v2587
        %2792 = vmatprep.subr.mxu0 0.0
        %2793 = vmatpush1.msra.mxu0 %v2592
        %2794 = vmatprep.subr.mxu0 0.0
        %2795 = vmatpush1.msra.mxu0 %v2597
        %2796 = vmatprep.subr.mxu0 0.0
        %2797 = vmatpush1.msra.mxu0 %v2626
        %2798 = vmatprep.subr.mxu0 0.0
        %2799 = vmatpush1.msra.mxu0 0.0
        %2800 = vmatprep.subr.mxu0 0.0
        %2801 = vmatpush1.msra.mxu0 0.0
        %2802 = vmatprep.subr.mxu0 0.0
        %2803 = vmatpush1.msra.mxu0 0.0
        %2804 = vmatprep.subr.mxu0 0.0
        %2805 = vmatpush1.msra.mxu0 0.0
        %2806 = vmatprep.subr.mxu0 0.0
        %2807 = vmatpush1.msra.mxu0 0.0
        %2808 = vmatprep.subr.mxu0 0.0
        %2809 = vmatpush1.msra.mxu0 0.0
        %2810 = vmatprep.subr.mxu0 0.0
        %2811 = vmatpush1.msra.mxu0 0.0
        %2812 = vmatprep.subr.mxu0 0.0
        %2813 = vmatpush1.msra.mxu0 0.0
        %2814 = vmatprep.subr.mxu0 0.0
        %2815 = vmatpush1.msra.mxu0 0.0
        %2816 = vmatprep.subr.mxu0 0.0
        %2817 = vmatpush1.msra.mxu0 0.0
        %2818 = vmatprep.subr.mxu0 0.0
        %2819 = vmatpush1.msra.mxu0 0.0
        %2820 = vmatprep.subr.mxu0 0.0
        %2821 = vmatpush1.msra.mxu0 0.0
        %2822 = vmatprep.subr.mxu0 0.0
        %2823 = vmatpush1.msra.mxu0 0.0
        %2824 = vmatprep.subr.mxu0 0.0
        %2825 = vmatpush1.msra.mxu0 0.0
        %2826 = vmatprep.subr.mxu0 0.0
        %2827 = vmatpush1.msra.mxu0 0.0
        %2828 = vmatprep.subr.mxu0 0.0
        %2829 = vmatpush1.msra.mxu0 0.0
        %2830 = vmatprep.subr.mxu0 0.0
        %2831 = vmatpush1.msra.mxu0 0.0
        %2832 = vmatprep.subr.mxu0 0.0
        %2833 = vmatpush1.msra.mxu0 0.0
        %2834 = vmatprep.mubr.f32.mxu0 0.0
        %2835 = vmatmul.mubr.f32.gmra.mrb[0].mxu0 %v2611
        %v2836 = vpop.f32.mrb[0].mxu0
        %v2837 = vadd.f32 %v2607, %v2836
        %v2838 = vpop.f32.mrb[0].mxu0
        %2839 = vdwg.mxu0
        %vm2840 = vcmp.gt.f32.partialorder %v2695, 0.0
        %vm2841 = vcmp.gt.f32.partialorder %v2697, 0.0
        %vm2842 = vcmp.gt.f32.partialorder %v2766, 0.0
        %vm2843 = vcmp.gt.f32.partialorder %v2768, 0.0
        %vm2844 = vcmp.gt.f32.partialorder %v2837, 0.0
        %s2845 = sld [smem:[#allocation4 + $0x1]]
        %v2846 = vstv %s2845
        %v2847 = vmul.f32 %v2846, %v2695
        %v2848 = vmul.f32 %v2846, %v2697
        %v2849 = vmul.f32 %v2846, %v2766
        %v2850 = vmul.f32 %v2846, %v2768
        %v2851 = vmul.f32 %v2846, %v2837
        %v2852 = vsel %vm2840, %v2695, %v2847
        %v2853 = vsel %vm2841, %v2697, %v2848
        %v2854 = vsel %vm2842, %v2766, %v2849
        %v2855 = vsel %vm2843, %v2768, %v2850
        %v2856 = vsel %vm2844, %v2837, %v2851
        %v2862 = vcombine.low %v2852, %v2853
        %v2863 = vcombine.low %v2854, %v2855
        %2864 = vrot.lane.b32.xlu0 %v2862, 1
        %v2865 = vpop.permute.xlu0 %2864
        %2866 = vrot.lane.b32.xlu0 %v2863, 1
        %v2867 = vpop.permute.xlu0 %2866
        %2868 = vrot.lane.b32.xlu0 %v2856, 1
        %v2869 = vpop.permute.xlu0 %2868
        %v2870 = vrot.slane %v2865, 4
        %v2871 = vrot.slane %v2867, 4
        %v2872 = vsel %vm354, %v2870, %v2865
        %v2873 = vsel %vm356, %v2870, %v2871
        %v2874 = vsel %vm354, %v2873, %v2867
        %v2875 = vsel %vm354, %v2871, %v2869
        %2879 = vst.msk [vmem:[#allocation2 + $0x8] sm:$0xff] %vm364, %v2872
        %2880 = vst [vmem:[#allocation2 + $0x10] sm:$0xff] %v2874
        %2881 = vst.msk [vmem:[#allocation2 + $0x18] sm:$0xf] %vm367, %v2875
        %v2882 = vld [vmem:[#allocation2] sm:$0xff]
        %v2883 = vld [vmem:[#allocation2 + $0x8] sm:$0xff]
        %v2884 = vld [vmem:[#allocation2 + $0x10] sm:$0xf]
        %v2885 = vld [vmem:[%s7] ss:$8 sm:$0xf]
        %v2886 = vld [vmem:[%s7] ss:$8 sm:$0x10]
        %v2887 = vor.u32 %v2885, %v2886
        %v2889 = vlaneseq
        %v2890 = vshrl.u32 %v2889, 7
        %v2891 = vsub.s32 0, %v2890
        %v2892 = vrot.slane %v2887, %v2891
        %v2893 = vlaneseq
        %v2894 = vshrl.u32 %v2893, 7
        %v2895 = vsub.s32 1, %v2894
        %v2896 = vrot.slane %v2887, %v2895
        %v2897 = vlaneseq
        %v2898 = vshrl.u32 %v2897, 7
        %v2899 = vsub.s32 2, %v2898
        %v2900 = vrot.slane %v2887, %v2899
        %v2901 = vlaneseq
        %v2902 = vshrl.u32 %v2901, 7
        %v2903 = vsub.s32 3, %v2902
        %v2904 = vrot.slane %v2887, %v2903
        %v2905 = vlaneseq
        %v2906 = vshrl.u32 %v2905, 7
        %v2907 = vsub.s32 4, %v2906
        %v2908 = vrot.slane %v2887, %v2907
        %v2910 = vcombine.low %v2892, %v2896
        %v2911 = vcombine.low %v2900, %v2904
        %v2914 = vmul.f32 %v2882, %v2910
        %v2915 = vmul.f32 %v2883, %v2911
        %v2916 = vmul.f32 %v2884, %v2908
        %v2919 = vcombine.high %v2914, %v2914
        %v2920 = vcombine.high %v2915, %v2915
        %2923 = vst [vmem:[#allocation3] sm:$0xf] %v2914
        %2924 = vst [vmem:[#allocation3 + $0x8] sm:$0xf] %v2919
        %2925 = vst [vmem:[#allocation3 + $0x10] sm:$0xf] %v2915
        %2926 = vst [vmem:[#allocation3 + $0x18] sm:$0xf] %v2920
        %2927 = vst.msk [vmem:[#allocation3 + $0x20] sm:$0xf] %vm446, %v2916
        %v2928 = vld [vmem:[#allocation2] sm:$0xff]
        %v2929 = vld [vmem:[#allocation2 + $0x8] sm:$0xff]
        %v2930 = vld [vmem:[#allocation2 + $0x10] sm:$0xf]
        %s2931 = scalar_lea.vmem %s7, 1
        %v2932 = vld [vmem:[%s2931] ss:$8 sm:$0xf]
        %v2933 = vld [vmem:[%s2931] ss:$8 sm:$0x10]
        %v2934 = vor.u32 %v2932, %v2933
        %v2936 = vlaneseq
        %v2937 = vshrl.u32 %v2936, 7
        %v2938 = vsub.s32 0, %v2937
        %v2939 = vrot.slane %v2934, %v2938
        %v2940 = vlaneseq
        %v2941 = vshrl.u32 %v2940, 7
        %v2942 = vsub.s32 1, %v2941
        %v2943 = vrot.slane %v2934, %v2942
        %v2944 = vlaneseq
        %v2945 = vshrl.u32 %v2944, 7
        %v2946 = vsub.s32 2, %v2945
        %v2947 = vrot.slane %v2934, %v2946
        %v2948 = vlaneseq
        %v2949 = vshrl.u32 %v2948, 7
        %v2950 = vsub.s32 3, %v2949
        %v2951 = vrot.slane %v2934, %v2950
        %v2952 = vlaneseq
        %v2953 = vshrl.u32 %v2952, 7
        %v2954 = vsub.s32 4, %v2953
        %v2955 = vrot.slane %v2934, %v2954
        %v2956 = vcombine.low %v2939, %v2943
        %v2957 = vcombine.low %v2947, %v2951
        %2958 = vrot.lane.b32.xlu0 %v2956, 64
        %v2959 = vpop.permute.xlu0 %2958
        %2960 = vrot.lane.b32.xlu0 %v2957, 64
        %v2961 = vpop.permute.xlu0 %2960
        %2962 = vrot.lane.b32.xlu0 %v2955, 64
        %v2963 = vpop.permute.xlu0 %2962
        %v2964 = vrot.slane %v2959, 4
        %v2965 = vrot.slane %v2961, 4
        %v2966 = vsel %vm646, %v2964, %v2959
        %v2967 = vsel %vm356, %v2964, %v2965
        %v2968 = vsel %vm646, %v2967, %v2961
        %v2969 = vsel %vm646, %v2965, %v2963
        %v2973 = vmul.f32 %v2928, %v2966
        %v2974 = vmul.f32 %v2929, %v2968
        %v2975 = vmul.f32 %v2930, %v2969
        %v2979 = vcombine.low %v2973, %v2973
        %v2980 = vcombine.low %v2974, %v2974
        %v2981 = vcombine.low %v2975, %v2975
        %2982 = vrot.lane.b32.xlu0 %v2979, 64
        %v2983 = vpop.permute.xlu0 %2982
        %2984 = vrot.lane.b32.xlu0 %v2973, 64
        %v2985 = vpop.permute.xlu0 %2984
        %2986 = vrot.lane.b32.xlu0 %v2980, 64
        %v2987 = vpop.permute.xlu0 %2986
        %2988 = vrot.lane.b32.xlu0 %v2974, 64
        %v2989 = vpop.permute.xlu0 %2988
        %2990 = vrot.lane.b32.xlu0 %v2981, 64
        %v2991 = vpop.permute.xlu0 %2990
        %v2992 = vsel %vm646, %v2983, %v2985
        %v2993 = vsel %vm646, %v2985, %v2987
        %v2994 = vsel %vm646, %v2987, %v2989
        %v2995 = vsel %vm646, %v2989, %v2991
        %3001 = vst [vmem:[#allocation3] sm:$0xf0] %v2992
        %3002 = vst [vmem:[#allocation3 + $0x8] sm:$0xf0] %v2993
        %3003 = vst [vmem:[#allocation3 + $0x10] sm:$0xf0] %v2994
        %3004 = vst [vmem:[#allocation3 + $0x18] sm:$0xf0] %v2995
        %3005 = vst.msk [vmem:[#allocation3 + $0x20] sm:$0xf0] %vm527, %v2991
        %v3006 = vld [vmem:[#allocation2 + $0x4] sm:$0xff]
        %v3007 = vld [vmem:[#allocation2 + $0xc] sm:$0xff]
        %v3008 = vld [vmem:[#allocation2 + $0x14] sm:$0xf]
        %s3009 = scalar_lea.vmem %s7, 2
        %v3010 = vld [vmem:[%s3009] ss:$8 sm:$0xf]
        %v3011 = vld [vmem:[%s3009] ss:$8 sm:$0x10]
        %v3012 = vor.u32 %v3010, %v3011
        %v3014 = vlaneseq
        %v3015 = vshrl.u32 %v3014, 7
        %v3016 = vsub.s32 0, %v3015
        %v3017 = vrot.slane %v3012, %v3016
        %v3018 = vlaneseq
        %v3019 = vshrl.u32 %v3018, 7
        %v3020 = vsub.s32 1, %v3019
        %v3021 = vrot.slane %v3012, %v3020
        %v3022 = vlaneseq
        %v3023 = vshrl.u32 %v3022, 7
        %v3024 = vsub.s32 2, %v3023
        %v3025 = vrot.slane %v3012, %v3024
        %v3026 = vlaneseq
        %v3027 = vshrl.u32 %v3026, 7
        %v3028 = vsub.s32 3, %v3027
        %v3029 = vrot.slane %v3012, %v3028
        %v3030 = vlaneseq
        %v3031 = vshrl.u32 %v3030, 7
        %v3032 = vsub.s32 4, %v3031
        %v3033 = vrot.slane %v3012, %v3032
        %v3035 = vcombine.low %v3017, %v3021
        %v3036 = vcombine.low %v3025, %v3029
        %v3039 = vmul.f32 %v3006, %v3035
        %v3040 = vmul.f32 %v3007, %v3036
        %v3041 = vmul.f32 %v3008, %v3033
        %v3044 = vcombine.high %v3039, %v3039
        %v3045 = vcombine.high %v3040, %v3040
        %3048 = vst [vmem:[#allocation3 + $0x28] sm:$0xf] %v3039
        %3049 = vst [vmem:[#allocation3 + $0x30] sm:$0xf] %v3044
        %3050 = vst [vmem:[#allocation3 + $0x38] sm:$0xf] %v3040
        %3051 = vst [vmem:[#allocation3 + $0x40] sm:$0xf] %v3045
        %3052 = vst.msk [vmem:[#allocation3 + $0x48] sm:$0xf] %vm446, %v3041
        %v3053 = vld [vmem:[#allocation2 + $0x4] sm:$0xff]
        %v3054 = vld [vmem:[#allocation2 + $0xc] sm:$0xff]
        %v3055 = vld [vmem:[#allocation2 + $0x14] sm:$0xf]
        %s3056 = scalar_lea.vmem %s7, 3
        %v3057 = vld [vmem:[%s3056] ss:$8 sm:$0xf]
        %v3058 = vld [vmem:[%s3056] ss:$8 sm:$0x10]
        %v3059 = vor.u32 %v3057, %v3058
        %v3061 = vlaneseq
        %v3062 = vshrl.u32 %v3061, 7
        %v3063 = vsub.s32 0, %v3062
        %v3064 = vrot.slane %v3059, %v3063
        %v3065 = vlaneseq
        %v3066 = vshrl.u32 %v3065, 7
        %v3067 = vsub.s32 1, %v3066
        %v3068 = vrot.slane %v3059, %v3067
        %v3069 = vlaneseq
        %v3070 = vshrl.u32 %v3069, 7
        %v3071 = vsub.s32 2, %v3070
        %v3072 = vrot.slane %v3059, %v3071
        %v3073 = vlaneseq
        %v3074 = vshrl.u32 %v3073, 7
        %v3075 = vsub.s32 3, %v3074
        %v3076 = vrot.slane %v3059, %v3075
        %v3077 = vlaneseq
        %v3078 = vshrl.u32 %v3077, 7
        %v3079 = vsub.s32 4, %v3078
        %v3080 = vrot.slane %v3059, %v3079
        %v3081 = vcombine.low %v3064, %v3068
        %v3082 = vcombine.low %v3072, %v3076
        %3083 = vrot.lane.b32.xlu0 %v3081, 64
        %v3084 = vpop.permute.xlu0 %3083
        %3085 = vrot.lane.b32.xlu0 %v3082, 64
        %v3086 = vpop.permute.xlu0 %3085
        %3087 = vrot.lane.b32.xlu0 %v3080, 64
        %v3088 = vpop.permute.xlu0 %3087
        %v3089 = vrot.slane %v3084, 4
        %v3090 = vrot.slane %v3086, 4
        %v3091 = vsel %vm646, %v3089, %v3084
        %v3092 = vsel %vm356, %v3089, %v3090
        %v3093 = vsel %vm646, %v3092, %v3086
        %v3094 = vsel %vm646, %v3090, %v3088
        %v3098 = vmul.f32 %v3053, %v3091
        %v3099 = vmul.f32 %v3054, %v3093
        %v3100 = vmul.f32 %v3055, %v3094
        %v3104 = vcombine.low %v3098, %v3098
        %v3105 = vcombine.low %v3099, %v3099
        %v3106 = vcombine.low %v3100, %v3100
        %3107 = vrot.lane.b32.xlu0 %v3104, 64
        %v3108 = vpop.permute.xlu0 %3107
        %3109 = vrot.lane.b32.xlu0 %v3098, 64
        %v3110 = vpop.permute.xlu0 %3109
        %3111 = vrot.lane.b32.xlu0 %v3105, 64
        %v3112 = vpop.permute.xlu0 %3111
        %3113 = vrot.lane.b32.xlu0 %v3099, 64
        %v3114 = vpop.permute.xlu0 %3113
        %3115 = vrot.lane.b32.xlu0 %v3106, 64
        %v3116 = vpop.permute.xlu0 %3115
        %v3117 = vsel %vm646, %v3108, %v3110
        %v3118 = vsel %vm646, %v3110, %v3112
        %v3119 = vsel %vm646, %v3112, %v3114
        %v3120 = vsel %vm646, %v3114, %v3116
        %3126 = vst [vmem:[#allocation3 + $0x28] sm:$0xf0] %v3117
        %3127 = vst [vmem:[#allocation3 + $0x30] sm:$0xf0] %v3118
        %3128 = vst [vmem:[#allocation3 + $0x38] sm:$0xf0] %v3119
        %3129 = vst [vmem:[#allocation3 + $0x40] sm:$0xf0] %v3120
        %3130 = vst.msk [vmem:[#allocation3 + $0x48] sm:$0xf0] %vm527, %v3116
        %v3131 = vld [vmem:[#allocation2 + $0x8] sm:$0xff]
        %v3132 = vld [vmem:[#allocation2 + $0x10] sm:$0xff]
        %v3133 = vld [vmem:[#allocation2 + $0x18] sm:$0xf]
        %s3134 = scalar_lea.vmem %s7, 4
        %v3135 = vld [vmem:[%s3134] ss:$8 sm:$0xf]
        %v3136 = vld [vmem:[%s3134] ss:$8 sm:$0x10]
        %v3137 = vor.u32 %v3135, %v3136
        %v3139 = vlaneseq
        %v3140 = vshrl.u32 %v3139, 7
        %v3141 = vsub.s32 0, %v3140
        %v3142 = vrot.slane %v3137, %v3141
        %v3143 = vlaneseq
        %v3144 = vshrl.u32 %v3143, 7
        %v3145 = vsub.s32 1, %v3144
        %v3146 = vrot.slane %v3137, %v3145
        %v3147 = vlaneseq
        %v3148 = vshrl.u32 %v3147, 7
        %v3149 = vsub.s32 2, %v3148
        %v3150 = vrot.slane %v3137, %v3149
        %v3151 = vlaneseq
        %v3152 = vshrl.u32 %v3151, 7
        %v3153 = vsub.s32 3, %v3152
        %v3154 = vrot.slane %v3137, %v3153
        %v3155 = vlaneseq
        %v3156 = vshrl.u32 %v3155, 7
        %v3157 = vsub.s32 4, %v3156
        %v3158 = vrot.slane %v3137, %v3157
        %v3160 = vcombine.low %v3142, %v3146
        %v3161 = vcombine.low %v3150, %v3154
        %v3164 = vmul.f32 %v3131, %v3160
        %v3165 = vmul.f32 %v3132, %v3161
        %v3166 = vmul.f32 %v3133, %v3158
        %v3169 = vcombine.high %v3164, %v3164
        %v3170 = vcombine.high %v3165, %v3165
        %3173 = vst [vmem:[#allocation3 + $0x50] sm:$0xf] %v3164
        %3174 = vst [vmem:[#allocation3 + $0x58] sm:$0xf] %v3169
        %3175 = vst [vmem:[#allocation3 + $0x60] sm:$0xf] %v3165
        %3176 = vst [vmem:[#allocation3 + $0x68] sm:$0xf] %v3170
        %3177 = vst.msk [vmem:[#allocation3 + $0x70] sm:$0xf] %vm446, %v3166
        %v3178 = vld [vmem:[#allocation2 + $0x8] sm:$0xff]
        %v3179 = vld [vmem:[#allocation2 + $0x10] sm:$0xff]
        %v3180 = vld [vmem:[#allocation2 + $0x18] sm:$0xf]
        %s3181 = scalar_lea.vmem %s7, 5
        %v3182 = vld [vmem:[%s3181] ss:$8 sm:$0xf]
        %v3183 = vld [vmem:[%s3181] ss:$8 sm:$0x10]
        %v3184 = vor.u32 %v3182, %v3183
        %v3186 = vlaneseq
        %v3187 = vshrl.u32 %v3186, 7
        %v3188 = vsub.s32 0, %v3187
        %v3189 = vrot.slane %v3184, %v3188
        %v3190 = vlaneseq
        %v3191 = vshrl.u32 %v3190, 7
        %v3192 = vsub.s32 1, %v3191
        %v3193 = vrot.slane %v3184, %v3192
        %v3194 = vlaneseq
        %v3195 = vshrl.u32 %v3194, 7
        %v3196 = vsub.s32 2, %v3195
        %v3197 = vrot.slane %v3184, %v3196
        %v3198 = vlaneseq
        %v3199 = vshrl.u32 %v3198, 7
        %v3200 = vsub.s32 3, %v3199
        %v3201 = vrot.slane %v3184, %v3200
        %v3202 = vlaneseq
        %v3203 = vshrl.u32 %v3202, 7
        %v3204 = vsub.s32 4, %v3203
        %v3205 = vrot.slane %v3184, %v3204
        %v3206 = vcombine.low %v3189, %v3193
        %v3207 = vcombine.low %v3197, %v3201
        %3208 = vrot.lane.b32.xlu0 %v3206, 64
        %v3209 = vpop.permute.xlu0 %3208
        %3210 = vrot.lane.b32.xlu0 %v3207, 64
        %v3211 = vpop.permute.xlu0 %3210
        %3212 = vrot.lane.b32.xlu0 %v3205, 64
        %v3213 = vpop.permute.xlu0 %3212
        %v3214 = vrot.slane %v3209, 4
        %v3215 = vrot.slane %v3211, 4
        %v3216 = vsel %vm646, %v3214, %v3209
        %v3217 = vsel %vm356, %v3214, %v3215
        %v3218 = vsel %vm646, %v3217, %v3211
        %v3219 = vsel %vm646, %v3215, %v3213
        %v3223 = vmul.f32 %v3178, %v3216
        %v3224 = vmul.f32 %v3179, %v3218
        %v3225 = vmul.f32 %v3180, %v3219
        %v3229 = vcombine.low %v3223, %v3223
        %v3230 = vcombine.low %v3224, %v3224
        %v3231 = vcombine.low %v3225, %v3225
        %3232 = vrot.lane.b32.xlu0 %v3229, 64
        %v3233 = vpop.permute.xlu0 %3232
        %3234 = vrot.lane.b32.xlu0 %v3223, 64
        %v3235 = vpop.permute.xlu0 %3234
        %3236 = vrot.lane.b32.xlu0 %v3230, 64
        %v3237 = vpop.permute.xlu0 %3236
        %3238 = vrot.lane.b32.xlu0 %v3224, 64
        %v3239 = vpop.permute.xlu0 %3238
        %3240 = vrot.lane.b32.xlu0 %v3231, 64
        %v3241 = vpop.permute.xlu0 %3240
        %v3242 = vsel %vm646, %v3233, %v3235
        %v3243 = vsel %vm646, %v3235, %v3237
        %v3244 = vsel %vm646, %v3237, %v3239
        %v3245 = vsel %vm646, %v3239, %v3241
        %3251 = vst [vmem:[#allocation3 + $0x50] sm:$0xf0] %v3242
        %3252 = vst [vmem:[#allocation3 + $0x58] sm:$0xf0] %v3243
        %3253 = vst [vmem:[#allocation3 + $0x60] sm:$0xf0] %v3244
        %3254 = vst [vmem:[#allocation3 + $0x68] sm:$0xf0] %v3245
        %3255 = vst.msk [vmem:[#allocation3 + $0x70] sm:$0xf0] %vm527, %v3241
        %v3256 = vld [vmem:[#allocation2 + $0xc] sm:$0xff]
        %v3257 = vld [vmem:[#allocation2 + $0x14] sm:$0xff]
        %v3258 = vld [vmem:[#allocation2 + $0x1c] sm:$0xf]
        %s3259 = scalar_lea.vmem %s7, 6
        %v3260 = vld [vmem:[%s3259] ss:$8 sm:$0xf]
        %v3261 = vld [vmem:[%s3259] ss:$8 sm:$0x10]
        %v3262 = vor.u32 %v3260, %v3261
        %v3264 = vlaneseq
        %v3265 = vshrl.u32 %v3264, 7
        %v3266 = vsub.s32 0, %v3265
        %v3267 = vrot.slane %v3262, %v3266
        %v3268 = vlaneseq
        %v3269 = vshrl.u32 %v3268, 7
        %v3270 = vsub.s32 1, %v3269
        %v3271 = vrot.slane %v3262, %v3270
        %v3272 = vlaneseq
        %v3273 = vshrl.u32 %v3272, 7
        %v3274 = vsub.s32 2, %v3273
        %v3275 = vrot.slane %v3262, %v3274
        %v3276 = vlaneseq
        %v3277 = vshrl.u32 %v3276, 7
        %v3278 = vsub.s32 3, %v3277
        %v3279 = vrot.slane %v3262, %v3278
        %v3280 = vlaneseq
        %v3281 = vshrl.u32 %v3280, 7
        %v3282 = vsub.s32 4, %v3281
        %v3283 = vrot.slane %v3262, %v3282
        %v3285 = vcombine.low %v3267, %v3271
        %v3286 = vcombine.low %v3275, %v3279
        %v3289 = vmul.f32 %v3256, %v3285
        %v3290 = vmul.f32 %v3257, %v3286
        %v3291 = vmul.f32 %v3258, %v3283
        %v3294 = vcombine.high %v3289, %v3289
        %v3295 = vcombine.high %v3290, %v3290
        %3298 = vst [vmem:[#allocation3 + $0x78] sm:$0xf] %v3289
        %3299 = vst [vmem:[#allocation3 + $0x80] sm:$0xf] %v3294
        %3300 = vst [vmem:[#allocation3 + $0x88] sm:$0xf] %v3290
        %3301 = vst [vmem:[#allocation3 + $0x90] sm:$0xf] %v3295
        %3302 = vst.msk [vmem:[#allocation3 + $0x98] sm:$0xf] %vm446, %v3291
        %v3303 = vld [vmem:[#allocation2 + $0xc] sm:$0xff]
        %v3304 = vld [vmem:[#allocation2 + $0x14] sm:$0xff]
        %v3305 = vld [vmem:[#allocation2 + $0x1c] sm:$0xf]
        %s3306 = scalar_lea.vmem %s7, 7
        %v3307 = vld [vmem:[%s3306] ss:$8 sm:$0xf]
        %v3308 = vld [vmem:[%s3306] ss:$8 sm:$0x10]
        %v3309 = vor.u32 %v3307, %v3308
        %v3311 = vlaneseq
        %v3312 = vshrl.u32 %v3311, 7
        %v3313 = vsub.s32 0, %v3312
        %v3314 = vrot.slane %v3309, %v3313
        %v3315 = vlaneseq
        %v3316 = vshrl.u32 %v3315, 7
        %v3317 = vsub.s32 1, %v3316
        %v3318 = vrot.slane %v3309, %v3317
        %v3319 = vlaneseq
        %v3320 = vshrl.u32 %v3319, 7
        %v3321 = vsub.s32 2, %v3320
        %v3322 = vrot.slane %v3309, %v3321
        %v3323 = vlaneseq
        %v3324 = vshrl.u32 %v3323, 7
        %v3325 = vsub.s32 3, %v3324
        %v3326 = vrot.slane %v3309, %v3325
        %v3327 = vlaneseq
        %v3328 = vshrl.u32 %v3327, 7
        %v3329 = vsub.s32 4, %v3328
        %v3330 = vrot.slane %v3309, %v3329
        %v3331 = vcombine.low %v3314, %v3318
        %v3332 = vcombine.low %v3322, %v3326
        %3333 = vrot.lane.b32.xlu0 %v3331, 64
        %v3334 = vpop.permute.xlu0 %3333
        %3335 = vrot.lane.b32.xlu0 %v3332, 64
        %v3336 = vpop.permute.xlu0 %3335
        %3337 = vrot.lane.b32.xlu0 %v3330, 64
        %v3338 = vpop.permute.xlu0 %3337
        %v3339 = vrot.slane %v3334, 4
        %v3340 = vrot.slane %v3336, 4
        %v3341 = vsel %vm646, %v3339, %v3334
        %v3342 = vsel %vm356, %v3339, %v3340
        %v3343 = vsel %vm646, %v3342, %v3336
        %v3344 = vsel %vm646, %v3340, %v3338
        %v3348 = vmul.f32 %v3303, %v3341
        %v3349 = vmul.f32 %v3304, %v3343
        %v3350 = vmul.f32 %v3305, %v3344
        %v3354 = vcombine.low %v3348, %v3348
        %v3355 = vcombine.low %v3349, %v3349
        %v3356 = vcombine.low %v3350, %v3350
        %3357 = vrot.lane.b32.xlu0 %v3354, 64
        %v3358 = vpop.permute.xlu0 %3357
        %3359 = vrot.lane.b32.xlu0 %v3348, 64
        %v3360 = vpop.permute.xlu0 %3359
        %3361 = vrot.lane.b32.xlu0 %v3355, 64
        %v3362 = vpop.permute.xlu0 %3361
        %3363 = vrot.lane.b32.xlu0 %v3349, 64
        %v3364 = vpop.permute.xlu0 %3363
        %3365 = vrot.lane.b32.xlu0 %v3356, 64
        %v3366 = vpop.permute.xlu0 %3365
        %v3367 = vsel %vm646, %v3358, %v3360
        %v3368 = vsel %vm646, %v3360, %v3362
        %v3369 = vsel %vm646, %v3362, %v3364
        %v3370 = vsel %vm646, %v3364, %v3366
        %3376 = vst [vmem:[#allocation3 + $0x78] sm:$0xf0] %v3367
        %3377 = vst [vmem:[#allocation3 + $0x80] sm:$0xf0] %v3368
        %3378 = vst [vmem:[#allocation3 + $0x88] sm:$0xf0] %v3369
        %3379 = vst [vmem:[#allocation3 + $0x90] sm:$0xf0] %v3370
        %3380 = vst.msk [vmem:[#allocation3 + $0x98] sm:$0xf0] %vm527, %v3366
        %v3381 = vld [vmem:[#allocation2 + $0x10] sm:$0xff]
        %v3382 = vld [vmem:[#allocation2 + $0x18] sm:$0xff]
        %v3383 = vld [vmem:[#allocation2 + $0x20] sm:$0xf]
        %s3384 = scalar_lea.vmem %s7, 40
        %v3385 = vld [vmem:[%s3384] ss:$8 sm:$0xf]
        %v3386 = vld [vmem:[%s3384] ss:$8 sm:$0x10]
        %v3387 = vor.u32 %v3385, %v3386
        %v3389 = vlaneseq
        %v3390 = vshrl.u32 %v3389, 7
        %v3391 = vsub.s32 0, %v3390
        %v3392 = vrot.slane %v3387, %v3391
        %v3393 = vlaneseq
        %v3394 = vshrl.u32 %v3393, 7
        %v3395 = vsub.s32 1, %v3394
        %v3396 = vrot.slane %v3387, %v3395
        %v3397 = vlaneseq
        %v3398 = vshrl.u32 %v3397, 7
        %v3399 = vsub.s32 2, %v3398
        %v3400 = vrot.slane %v3387, %v3399
        %v3401 = vlaneseq
        %v3402 = vshrl.u32 %v3401, 7
        %v3403 = vsub.s32 3, %v3402
        %v3404 = vrot.slane %v3387, %v3403
        %v3405 = vlaneseq
        %v3406 = vshrl.u32 %v3405, 7
        %v3407 = vsub.s32 4, %v3406
        %v3408 = vrot.slane %v3387, %v3407
        %v3410 = vcombine.low %v3392, %v3396
        %v3411 = vcombine.low %v3400, %v3404
        %v3414 = vmul.f32 %v3381, %v3410
        %v3415 = vmul.f32 %v3382, %v3411
        %v3416 = vmul.f32 %v3383, %v3408
        %v3419 = vcombine.high %v3414, %v3414
        %v3420 = vcombine.high %v3415, %v3415
        %3423 = vst [vmem:[#allocation3 + $0xa0] sm:$0xf] %v3414
        %3424 = vst [vmem:[#allocation3 + $0xa8] sm:$0xf] %v3419
        %3425 = vst [vmem:[#allocation3 + $0xb0] sm:$0xf] %v3415
        %3426 = vst [vmem:[#allocation3 + $0xb8] sm:$0xf] %v3420
        %3427 = vst.msk [vmem:[#allocation3 + $0xc0] sm:$0xf] %vm446, %v3416
        %v3428 = vld [vmem:[#allocation2] sm:$0xff]
        %v3429 = vld [vmem:[#allocation2 + $0x8] sm:$0xff]
        %v3430 = vld [vmem:[#allocation2 + $0x10] sm:$0xf]
        %s3431 = scalar_lea.vmem %s7, 41
        %v3432 = vld [vmem:[%s3431] ss:$8 sm:$0xf]
        %v3433 = vld [vmem:[%s3431] ss:$8 sm:$0x10]
        %v3434 = vor.u32 %v3432, %v3433
        %v3436 = vlaneseq
        %v3437 = vshrl.u32 %v3436, 7
        %v3438 = vsub.s32 0, %v3437
        %v3439 = vrot.slane %v3434, %v3438
        %v3440 = vlaneseq
        %v3441 = vshrl.u32 %v3440, 7
        %v3442 = vsub.s32 1, %v3441
        %v3443 = vrot.slane %v3434, %v3442
        %v3444 = vlaneseq
        %v3445 = vshrl.u32 %v3444, 7
        %v3446 = vsub.s32 2, %v3445
        %v3447 = vrot.slane %v3434, %v3446
        %v3448 = vlaneseq
        %v3449 = vshrl.u32 %v3448, 7
        %v3450 = vsub.s32 3, %v3449
        %v3451 = vrot.slane %v3434, %v3450
        %v3452 = vlaneseq
        %v3453 = vshrl.u32 %v3452, 7
        %v3454 = vsub.s32 4, %v3453
        %v3455 = vrot.slane %v3434, %v3454
        %v3456 = vcombine.low %v3439, %v3443
        %v3457 = vcombine.low %v3447, %v3451
        %3458 = vrot.lane.b32.xlu0 %v3456, 1
        %v3459 = vpop.permute.xlu0 %3458
        %3460 = vrot.lane.b32.xlu0 %v3457, 1
        %v3461 = vpop.permute.xlu0 %3460
        %3462 = vrot.lane.b32.xlu0 %v3455, 1
        %v3463 = vpop.permute.xlu0 %3462
        %v3464 = vrot.slane %v3459, 4
        %v3465 = vrot.slane %v3461, 4
        %v3466 = vsel %vm354, %v3464, %v3459
        %v3467 = vsel %vm356, %v3464, %v3465
        %v3468 = vsel %vm354, %v3467, %v3461
        %v3469 = vsel %vm354, %v3465, %v3463
        %v3473 = vmul.f32 %v3428, %v3466
        %v3474 = vmul.f32 %v3429, %v3468
        %v3475 = vmul.f32 %v3430, %v3469
        %v3479 = vcombine.low %v3473, %v3473
        %v3480 = vcombine.low %v3474, %v3474
        %v3481 = vcombine.low %v3475, %v3475
        %3482 = vrot.lane.b32.xlu0 %v3479, 127
        %v3483 = vpop.permute.xlu0 %3482
        %3484 = vrot.lane.b32.xlu0 %v3473, 127
        %v3485 = vpop.permute.xlu0 %3484
        %3486 = vrot.lane.b32.xlu0 %v3480, 127
        %v3487 = vpop.permute.xlu0 %3486
        %3488 = vrot.lane.b32.xlu0 %v3474, 127
        %v3489 = vpop.permute.xlu0 %3488
        %3490 = vrot.lane.b32.xlu0 %v3481, 127
        %v3491 = vpop.permute.xlu0 %3490
        %v3492 = vsel %vm1476, %v3483, %v3485
        %v3493 = vsel %vm1476, %v3485, %v3487
        %v3494 = vsel %vm1476, %v3487, %v3489
        %v3495 = vsel %vm1476, %v3489, %v3491
        %3501 = vst [vmem:[#allocation3 + $0xa0] sm:$0xf0] %v3492
        %3502 = vst [vmem:[#allocation3 + $0xa8] sm:$0xf0] %v3493
        %3503 = vst [vmem:[#allocation3 + $0xb0] sm:$0xf0] %v3494
        %3504 = vst [vmem:[#allocation3 + $0xb8] sm:$0xf0] %v3495
        %3505 = vst.msk [vmem:[#allocation3 + $0xc0] sm:$0xf0] %vm527, %v3491
        %v3506 = vld [vmem:[#allocation2] sm:$0xff]
        %v3507 = vld [vmem:[#allocation2 + $0x8] sm:$0xff]
        %v3508 = vld [vmem:[#allocation2 + $0x10] sm:$0xff]
        %s3509 = scalar_lea.vmem %s7, 42
        %v3510 = vld [vmem:[%s3509] ss:$8 sm:$0xf]
        %v3511 = vld [vmem:[%s3509] ss:$8 sm:$0x10]
        %v3512 = vor.u32 %v3510, %v3511
        %v3514 = vlaneseq
        %v3515 = vshrl.u32 %v3514, 7
        %v3516 = vsub.s32 0, %v3515
        %v3517 = vrot.slane %v3512, %v3516
        %v3518 = vlaneseq
        %v3519 = vshrl.u32 %v3518, 7
        %v3520 = vsub.s32 1, %v3519
        %v3521 = vrot.slane %v3512, %v3520
        %v3522 = vlaneseq
        %v3523 = vshrl.u32 %v3522, 7
        %v3524 = vsub.s32 2, %v3523
        %v3525 = vrot.slane %v3512, %v3524
        %v3526 = vlaneseq
        %v3527 = vshrl.u32 %v3526, 7
        %v3528 = vsub.s32 3, %v3527
        %v3529 = vrot.slane %v3512, %v3528
        %v3530 = vlaneseq
        %v3531 = vshrl.u32 %v3530, 7
        %v3532 = vsub.s32 4, %v3531
        %v3533 = vrot.slane %v3512, %v3532
        %v3534 = vcombine.low %v3517, %v3521
        %v3535 = vcombine.low %v3525, %v3529
        %3536 = vrot.lane.b32.xlu0 %v3534, 65
        %v3537 = vpop.permute.xlu0 %3536
        %3538 = vrot.lane.b32.xlu0 %v3535, 65
        %v3539 = vpop.permute.xlu0 %3538
        %3540 = vrot.lane.b32.xlu0 %v3533, 65
        %v3541 = vpop.permute.xlu0 %3540
        %v3542 = vrot.slane %v3537, 4
        %v3543 = vrot.slane %v3539, 4
        %v3544 = vrot.slane %v3541, 4
        %v3545 = vsel %vm726, %v3542, %v3537
        %v3546 = vsel %vm356, %v3542, %v3543
        %v3547 = vsel %vm726, %v3546, %v3539
        %v3548 = vsel %vm356, %v3543, %v3544
        %v3549 = vsel %vm726, %v3548, %v3541
        %v3553 = vmul.f32 %v3506, %v3545
        %v3554 = vmul.f32 %v3507, %v3547
        %v3555 = vmul.f32 %v3508, %v3549
        %v3559 = vcombine.high %v3553, %v3553
        %v3560 = vcombine.high %v3554, %v3554
        %v3561 = vcombine.high %v3555, %v3555
        %3562 = vrot.lane.b32.xlu0 %v3553, 63
        %v3563 = vpop.permute.xlu0 %3562
        %3564 = vrot.lane.b32.xlu0 %v3559, 63
        %v3565 = vpop.permute.xlu0 %3564
        %3566 = vrot.lane.b32.xlu0 %v3554, 63
        %v3567 = vpop.permute.xlu0 %3566
        %3568 = vrot.lane.b32.xlu0 %v3560, 63
        %v3569 = vpop.permute.xlu0 %3568
        %3570 = vrot.lane.b32.xlu0 %v3555, 63
        %v3571 = vpop.permute.xlu0 %3570
        %3572 = vrot.lane.b32.xlu0 %v3561, 63
        %v3573 = vpop.permute.xlu0 %3572
        %v3574 = vsel %vm756, %v3563, %v3565
        %v3575 = vsel %vm756, %v3565, %v3567
        %v3576 = vsel %vm756, %v3567, %v3569
        %v3577 = vsel %vm756, %v3569, %v3571
        %v3578 = vsel %vm756, %v3571, %v3573
        %3584 = vst [vmem:[#allocation3 + $0xc8] sm:$0xf] %v3574
        %3585 = vst [vmem:[#allocation3 + $0xd0] sm:$0xf] %v3575
        %3586 = vst [vmem:[#allocation3 + $0xd8] sm:$0xf] %v3576
        %3587 = vst [vmem:[#allocation3 + $0xe0] sm:$0xf] %v3577
        %3588 = vst.msk [vmem:[#allocation3 + $0xe8] sm:$0xf] %vm446, %v3578
        %v3589 = vld [vmem:[#allocation2 + $0x4] sm:$0xff]
        %v3590 = vld [vmem:[#allocation2 + $0xc] sm:$0xff]
        %v3591 = vld [vmem:[#allocation2 + $0x14] sm:$0xf]
        %s3592 = scalar_lea.vmem %s7, 43
        %v3593 = vld [vmem:[%s3592] ss:$8 sm:$0xf]
        %v3594 = vld [vmem:[%s3592] ss:$8 sm:$0x10]
        %v3595 = vor.u32 %v3593, %v3594
        %v3597 = vlaneseq
        %v3598 = vshrl.u32 %v3597, 7
        %v3599 = vsub.s32 0, %v3598
        %v3600 = vrot.slane %v3595, %v3599
        %v3601 = vlaneseq
        %v3602 = vshrl.u32 %v3601, 7
        %v3603 = vsub.s32 1, %v3602
        %v3604 = vrot.slane %v3595, %v3603
        %v3605 = vlaneseq
        %v3606 = vshrl.u32 %v3605, 7
        %v3607 = vsub.s32 2, %v3606
        %v3608 = vrot.slane %v3595, %v3607
        %v3609 = vlaneseq
        %v3610 = vshrl.u32 %v3609, 7
        %v3611 = vsub.s32 3, %v3610
        %v3612 = vrot.slane %v3595, %v3611
        %v3613 = vlaneseq
        %v3614 = vshrl.u32 %v3613, 7
        %v3615 = vsub.s32 4, %v3614
        %v3616 = vrot.slane %v3595, %v3615
        %v3617 = vcombine.low %v3600, %v3604
        %v3618 = vcombine.low %v3608, %v3612
        %3619 = vrot.lane.b32.xlu0 %v3617, 1
        %v3620 = vpop.permute.xlu0 %3619
        %3621 = vrot.lane.b32.xlu0 %v3618, 1
        %v3622 = vpop.permute.xlu0 %3621
        %3623 = vrot.lane.b32.xlu0 %v3616, 1
        %v3624 = vpop.permute.xlu0 %3623
        %v3625 = vrot.slane %v3620, 4
        %v3626 = vrot.slane %v3622, 4
        %v3627 = vsel %vm354, %v3625, %v3620
        %v3628 = vsel %vm356, %v3625, %v3626
        %v3629 = vsel %vm354, %v3628, %v3622
        %v3630 = vsel %vm354, %v3626, %v3624
        %v3634 = vmul.f32 %v3589, %v3627
        %v3635 = vmul.f32 %v3590, %v3629
        %v3636 = vmul.f32 %v3591, %v3630
        %v3640 = vcombine.low %v3634, %v3634
        %v3641 = vcombine.low %v3635, %v3635
        %v3642 = vcombine.low %v3636, %v3636
        %3643 = vrot.lane.b32.xlu0 %v3640, 127
        %v3644 = vpop.permute.xlu0 %3643
        %3645 = vrot.lane.b32.xlu0 %v3634, 127
        %v3646 = vpop.permute.xlu0 %3645
        %3647 = vrot.lane.b32.xlu0 %v3641, 127
        %v3648 = vpop.permute.xlu0 %3647
        %3649 = vrot.lane.b32.xlu0 %v3635, 127
        %v3650 = vpop.permute.xlu0 %3649
        %3651 = vrot.lane.b32.xlu0 %v3642, 127
        %v3652 = vpop.permute.xlu0 %3651
        %v3653 = vsel %vm1476, %v3644, %v3646
        %v3654 = vsel %vm1476, %v3646, %v3648
        %v3655 = vsel %vm1476, %v3648, %v3650
        %v3656 = vsel %vm1476, %v3650, %v3652
        %3662 = vst [vmem:[#allocation3 + $0xc8] sm:$0xf0] %v3653
        %3663 = vst [vmem:[#allocation3 + $0xd0] sm:$0xf0] %v3654
        %3664 = vst [vmem:[#allocation3 + $0xd8] sm:$0xf0] %v3655
        %3665 = vst [vmem:[#allocation3 + $0xe0] sm:$0xf0] %v3656
        %3666 = vst.msk [vmem:[#allocation3 + $0xe8] sm:$0xf0] %vm527, %v3652
        %v3667 = vld [vmem:[#allocation2 + $0x4] sm:$0xff]
        %v3668 = vld [vmem:[#allocation2 + $0xc] sm:$0xff]
        %v3669 = vld [vmem:[#allocation2 + $0x14] sm:$0xff]
        %s3670 = scalar_lea.vmem %s7, 44
        %v3671 = vld [vmem:[%s3670] ss:$8 sm:$0xf]
        %v3672 = vld [vmem:[%s3670] ss:$8 sm:$0x10]
        %v3673 = vor.u32 %v3671, %v3672
        %v3675 = vlaneseq
        %v3676 = vshrl.u32 %v3675, 7
        %v3677 = vsub.s32 0, %v3676
        %v3678 = vrot.slane %v3673, %v3677
        %v3679 = vlaneseq
        %v3680 = vshrl.u32 %v3679, 7
        %v3681 = vsub.s32 1, %v3680
        %v3682 = vrot.slane %v3673, %v3681
        %v3683 = vlaneseq
        %v3684 = vshrl.u32 %v3683, 7
        %v3685 = vsub.s32 2, %v3684
        %v3686 = vrot.slane %v3673, %v3685
        %v3687 = vlaneseq
        %v3688 = vshrl.u32 %v3687, 7
        %v3689 = vsub.s32 3, %v3688
        %v3690 = vrot.slane %v3673, %v3689
        %v3691 = vlaneseq
        %v3692 = vshrl.u32 %v3691, 7
        %v3693 = vsub.s32 4, %v3692
        %v3694 = vrot.slane %v3673, %v3693
        %v3695 = vcombine.low %v3678, %v3682
        %v3696 = vcombine.low %v3686, %v3690
        %3697 = vrot.lane.b32.xlu0 %v3695, 65
        %v3698 = vpop.permute.xlu0 %3697
        %3699 = vrot.lane.b32.xlu0 %v3696, 65
        %v3700 = vpop.permute.xlu0 %3699
        %3701 = vrot.lane.b32.xlu0 %v3694, 65
        %v3702 = vpop.permute.xlu0 %3701
        %v3703 = vrot.slane %v3698, 4
        %v3704 = vrot.slane %v3700, 4
        %v3705 = vrot.slane %v3702, 4
        %v3706 = vsel %vm726, %v3703, %v3698
        %v3707 = vsel %vm356, %v3703, %v3704
        %v3708 = vsel %vm726, %v3707, %v3700
        %v3709 = vsel %vm356, %v3704, %v3705
        %v3710 = vsel %vm726, %v3709, %v3702
        %v3714 = vmul.f32 %v3667, %v3706
        %v3715 = vmul.f32 %v3668, %v3708
        %v3716 = vmul.f32 %v3669, %v3710
        %v3720 = vcombine.high %v3714, %v3714
        %v3721 = vcombine.high %v3715, %v3715
        %v3722 = vcombine.high %v3716, %v3716
        %3723 = vrot.lane.b32.xlu0 %v3714, 63
        %v3724 = vpop.permute.xlu0 %3723
        %3725 = vrot.lane.b32.xlu0 %v3720, 63
        %v3726 = vpop.permute.xlu0 %3725
        %3727 = vrot.lane.b32.xlu0 %v3715, 63
        %v3728 = vpop.permute.xlu0 %3727
        %3729 = vrot.lane.b32.xlu0 %v3721, 63
        %v3730 = vpop.permute.xlu0 %3729
        %3731 = vrot.lane.b32.xlu0 %v3716, 63
        %v3732 = vpop.permute.xlu0 %3731
        %3733 = vrot.lane.b32.xlu0 %v3722, 63
        %v3734 = vpop.permute.xlu0 %3733
        %v3735 = vsel %vm756, %v3724, %v3726
        %v3736 = vsel %vm756, %v3726, %v3728
        %v3737 = vsel %vm756, %v3728, %v3730
        %v3738 = vsel %vm756, %v3730, %v3732
        %v3739 = vsel %vm756, %v3732, %v3734
        %3745 = vst [vmem:[#allocation3 + $0xf0] sm:$0xf] %v3735
        %3746 = vst [vmem:[#allocation3 + $0xf8] sm:$0xf] %v3736
        %3747 = vst [vmem:[#allocation3 + $0x100] sm:$0xf] %v3737
        %3748 = vst [vmem:[#allocation3 + $0x108] sm:$0xf] %v3738
        %3749 = vst.msk [vmem:[#allocation3 + $0x110] sm:$0xf] %vm446, %v3739
        %v3750 = vld [vmem:[#allocation2 + $0x8] sm:$0xff]
        %v3751 = vld [vmem:[#allocation2 + $0x10] sm:$0xff]
        %v3752 = vld [vmem:[#allocation2 + $0x18] sm:$0xf]
        %s3753 = scalar_lea.vmem %s7, 45
        %v3754 = vld [vmem:[%s3753] ss:$8 sm:$0xf]
        %v3755 = vld [vmem:[%s3753] ss:$8 sm:$0x10]
        %v3756 = vor.u32 %v3754, %v3755
        %v3758 = vlaneseq
        %v3759 = vshrl.u32 %v3758, 7
        %v3760 = vsub.s32 0, %v3759
        %v3761 = vrot.slane %v3756, %v3760
        %v3762 = vlaneseq
        %v3763 = vshrl.u32 %v3762, 7
        %v3764 = vsub.s32 1, %v3763
        %v3765 = vrot.slane %v3756, %v3764
        %v3766 = vlaneseq
        %v3767 = vshrl.u32 %v3766, 7
        %v3768 = vsub.s32 2, %v3767
        %v3769 = vrot.slane %v3756, %v3768
        %v3770 = vlaneseq
        %v3771 = vshrl.u32 %v3770, 7
        %v3772 = vsub.s32 3, %v3771
        %v3773 = vrot.slane %v3756, %v3772
        %v3774 = vlaneseq
        %v3775 = vshrl.u32 %v3774, 7
        %v3776 = vsub.s32 4, %v3775
        %v3777 = vrot.slane %v3756, %v3776
        %v3778 = vcombine.low %v3761, %v3765
        %v3779 = vcombine.low %v3769, %v3773
        %3780 = vrot.lane.b32.xlu0 %v3778, 1
        %v3781 = vpop.permute.xlu0 %3780
        %3782 = vrot.lane.b32.xlu0 %v3779, 1
        %v3783 = vpop.permute.xlu0 %3782
        %3784 = vrot.lane.b32.xlu0 %v3777, 1
        %v3785 = vpop.permute.xlu0 %3784
        %v3786 = vrot.slane %v3781, 4
        %v3787 = vrot.slane %v3783, 4
        %v3788 = vsel %vm354, %v3786, %v3781
        %v3789 = vsel %vm356, %v3786, %v3787
        %v3790 = vsel %vm354, %v3789, %v3783
        %v3791 = vsel %vm354, %v3787, %v3785
        %v3795 = vmul.f32 %v3750, %v3788
        %v3796 = vmul.f32 %v3751, %v3790
        %v3797 = vmul.f32 %v3752, %v3791
        %v3801 = vcombine.low %v3795, %v3795
        %v3802 = vcombine.low %v3796, %v3796
        %v3803 = vcombine.low %v3797, %v3797
        %3804 = vrot.lane.b32.xlu0 %v3801, 127
        %v3805 = vpop.permute.xlu0 %3804
        %3806 = vrot.lane.b32.xlu0 %v3795, 127
        %v3807 = vpop.permute.xlu0 %3806
        %3808 = vrot.lane.b32.xlu0 %v3802, 127
        %v3809 = vpop.permute.xlu0 %3808
        %3810 = vrot.lane.b32.xlu0 %v3796, 127
        %v3811 = vpop.permute.xlu0 %3810
        %3812 = vrot.lane.b32.xlu0 %v3803, 127
        %v3813 = vpop.permute.xlu0 %3812
        %v3814 = vsel %vm1476, %v3805, %v3807
        %v3815 = vsel %vm1476, %v3807, %v3809
        %v3816 = vsel %vm1476, %v3809, %v3811
        %v3817 = vsel %vm1476, %v3811, %v3813
        %3823 = vst [vmem:[#allocation3 + $0xf0] sm:$0xf0] %v3814
        %3824 = vst [vmem:[#allocation3 + $0xf8] sm:$0xf0] %v3815
        %3825 = vst [vmem:[#allocation3 + $0x100] sm:$0xf0] %v3816
        %3826 = vst [vmem:[#allocation3 + $0x108] sm:$0xf0] %v3817
        %3827 = vst.msk [vmem:[#allocation3 + $0x110] sm:$0xf0] %vm527, %v3813
        %v3828 = vld [vmem:[#allocation2 + $0x8] sm:$0xff]
        %v3829 = vld [vmem:[#allocation2 + $0x10] sm:$0xff]
        %v3830 = vld [vmem:[#allocation2 + $0x18] sm:$0xff]
        %s3831 = scalar_lea.vmem %s7, 46
        %v3832 = vld [vmem:[%s3831] ss:$8 sm:$0xf]
        %v3833 = vld [vmem:[%s3831] ss:$8 sm:$0x10]
        %v3834 = vor.u32 %v3832, %v3833
        %v3836 = vlaneseq
        %v3837 = vshrl.u32 %v3836, 7
        %v3838 = vsub.s32 0, %v3837
        %v3839 = vrot.slane %v3834, %v3838
        %v3840 = vlaneseq
        %v3841 = vshrl.u32 %v3840, 7
        %v3842 = vsub.s32 1, %v3841
        %v3843 = vrot.slane %v3834, %v3842
        %v3844 = vlaneseq
        %v3845 = vshrl.u32 %v3844, 7
        %v3846 = vsub.s32 2, %v3845
        %v3847 = vrot.slane %v3834, %v3846
        %v3848 = vlaneseq
        %v3849 = vshrl.u32 %v3848, 7
        %v3850 = vsub.s32 3, %v3849
        %v3851 = vrot.slane %v3834, %v3850
        %v3852 = vlaneseq
        %v3853 = vshrl.u32 %v3852, 7
        %v3854 = vsub.s32 4, %v3853
        %v3855 = vrot.slane %v3834, %v3854
        %v3856 = vcombine.low %v3839, %v3843
        %v3857 = vcombine.low %v3847, %v3851
        %3858 = vrot.lane.b32.xlu0 %v3856, 65
        %v3859 = vpop.permute.xlu0 %3858
        %3860 = vrot.lane.b32.xlu0 %v3857, 65
        %v3861 = vpop.permute.xlu0 %3860
        %3862 = vrot.lane.b32.xlu0 %v3855, 65
        %v3863 = vpop.permute.xlu0 %3862
        %v3864 = vrot.slane %v3859, 4
        %v3865 = vrot.slane %v3861, 4
        %v3866 = vrot.slane %v3863, 4
        %v3867 = vsel %vm726, %v3864, %v3859
        %v3868 = vsel %vm356, %v3864, %v3865
        %v3869 = vsel %vm726, %v3868, %v3861
        %v3870 = vsel %vm356, %v3865, %v3866
        %v3871 = vsel %vm726, %v3870, %v3863
        %v3875 = vmul.f32 %v3828, %v3867
        %v3876 = vmul.f32 %v3829, %v3869
        %v3877 = vmul.f32 %v3830, %v3871
        %v3881 = vcombine.high %v3875, %v3875
        %v3882 = vcombine.high %v3876, %v3876
        %v3883 = vcombine.high %v3877, %v3877
        %3884 = vrot.lane.b32.xlu0 %v3875, 63
        %v3885 = vpop.permute.xlu0 %3884
        %3886 = vrot.lane.b32.xlu0 %v3881, 63
        %v3887 = vpop.permute.xlu0 %3886
        %3888 = vrot.lane.b32.xlu0 %v3876, 63
        %v3889 = vpop.permute.xlu0 %3888
        %3890 = vrot.lane.b32.xlu0 %v3882, 63
        %v3891 = vpop.permute.xlu0 %3890
        %3892 = vrot.lane.b32.xlu0 %v3877, 63
        %v3893 = vpop.permute.xlu0 %3892
        %3894 = vrot.lane.b32.xlu0 %v3883, 63
        %v3895 = vpop.permute.xlu0 %3894
        %v3896 = vsel %vm756, %v3885, %v3887
        %v3897 = vsel %vm756, %v3887, %v3889
        %v3898 = vsel %vm756, %v3889, %v3891
        %v3899 = vsel %vm756, %v3891, %v3893
        %v3900 = vsel %vm756, %v3893, %v3895
        %3906 = vst [vmem:[#allocation3 + $0x118] sm:$0xf] %v3896
        %3907 = vst [vmem:[#allocation3 + $0x120] sm:$0xf] %v3897
        %3908 = vst [vmem:[#allocation3 + $0x128] sm:$0xf] %v3898
        %3909 = vst [vmem:[#allocation3 + $0x130] sm:$0xf] %v3899
        %3910 = vst.msk [vmem:[#allocation3 + $0x138] sm:$0xf] %vm446, %v3900
        %v3911 = vld [vmem:[#allocation2 + $0xc] sm:$0xff]
        %v3912 = vld [vmem:[#allocation2 + $0x14] sm:$0xff]
        %v3913 = vld [vmem:[#allocation2 + $0x1c] sm:$0xf]
        %s3914 = scalar_lea.vmem %s7, 47
        %v3915 = vld [vmem:[%s3914] ss:$8 sm:$0xf]
        %v3916 = vld [vmem:[%s3914] ss:$8 sm:$0x10]
        %v3917 = vor.u32 %v3915, %v3916
        %v3919 = vlaneseq
        %v3920 = vshrl.u32 %v3919, 7
        %v3921 = vsub.s32 0, %v3920
        %v3922 = vrot.slane %v3917, %v3921
        %v3923 = vlaneseq
        %v3924 = vshrl.u32 %v3923, 7
        %v3925 = vsub.s32 1, %v3924
        %v3926 = vrot.slane %v3917, %v3925
        %v3927 = vlaneseq
        %v3928 = vshrl.u32 %v3927, 7
        %v3929 = vsub.s32 2, %v3928
        %v3930 = vrot.slane %v3917, %v3929
        %v3931 = vlaneseq
        %v3932 = vshrl.u32 %v3931, 7
        %v3933 = vsub.s32 3, %v3932
        %v3934 = vrot.slane %v3917, %v3933
        %v3935 = vlaneseq
        %v3936 = vshrl.u32 %v3935, 7
        %v3937 = vsub.s32 4, %v3936
        %v3938 = vrot.slane %v3917, %v3937
        %v3939 = vcombine.low %v3922, %v3926
        %v3940 = vcombine.low %v3930, %v3934
        %3941 = vrot.lane.b32.xlu0 %v3939, 1
        %v3942 = vpop.permute.xlu0 %3941
        %3943 = vrot.lane.b32.xlu0 %v3940, 1
        %v3944 = vpop.permute.xlu0 %3943
        %3945 = vrot.lane.b32.xlu0 %v3938, 1
        %v3946 = vpop.permute.xlu0 %3945
        %v3947 = vrot.slane %v3942, 4
        %v3948 = vrot.slane %v3944, 4
        %v3949 = vsel %vm354, %v3947, %v3942
        %v3950 = vsel %vm356, %v3947, %v3948
        %v3951 = vsel %vm354, %v3950, %v3944
        %v3952 = vsel %vm354, %v3948, %v3946
        %v3956 = vmul.f32 %v3911, %v3949
        %v3957 = vmul.f32 %v3912, %v3951
        %v3958 = vmul.f32 %v3913, %v3952
        %v3962 = vcombine.low %v3956, %v3956
        %v3963 = vcombine.low %v3957, %v3957
        %v3964 = vcombine.low %v3958, %v3958
        %3965 = vrot.lane.b32.xlu0 %v3962, 127
        %v3966 = vpop.permute.xlu0 %3965
        %3967 = vrot.lane.b32.xlu0 %v3956, 127
        %v3968 = vpop.permute.xlu0 %3967
        %3969 = vrot.lane.b32.xlu0 %v3963, 127
        %v3970 = vpop.permute.xlu0 %3969
        %3971 = vrot.lane.b32.xlu0 %v3957, 127
        %v3972 = vpop.permute.xlu0 %3971
        %3973 = vrot.lane.b32.xlu0 %v3964, 127
        %v3974 = vpop.permute.xlu0 %3973
        %v3975 = vsel %vm1476, %v3966, %v3968
        %v3976 = vsel %vm1476, %v3968, %v3970
        %v3977 = vsel %vm1476, %v3970, %v3972
        %v3978 = vsel %vm1476, %v3972, %v3974
        %3984 = vst [vmem:[#allocation3 + $0x118] sm:$0xf0] %v3975
        %3985 = vst [vmem:[#allocation3 + $0x120] sm:$0xf0] %v3976
        %3986 = vst [vmem:[#allocation3 + $0x128] sm:$0xf0] %v3977
        %3987 = vst [vmem:[#allocation3 + $0x130] sm:$0xf0] %v3978
        %3988 = vst.msk [vmem:[#allocation3 + $0x138] sm:$0xf0] %vm527, %v3974
        %v3989 = vld [vmem:[#allocation2 + $0xc] sm:$0xff]
        %v3990 = vld [vmem:[#allocation2 + $0x14] sm:$0xff]
        %v3991 = vld [vmem:[#allocation2 + $0x1c] sm:$0xff]
        %s3992 = scalar_lea.vmem %s7, 80
        %v3993 = vld [vmem:[%s3992] ss:$8 sm:$0xf]
        %v3994 = vld [vmem:[%s3992] ss:$8 sm:$0x10]
        %v3995 = vor.u32 %v3993, %v3994
        %v3997 = vlaneseq
        %v3998 = vshrl.u32 %v3997, 7
        %v3999 = vsub.s32 0, %v3998
        %v4000 = vrot.slane %v3995, %v3999
        %v4001 = vlaneseq
        %v4002 = vshrl.u32 %v4001, 7
        %v4003 = vsub.s32 1, %v4002
        %v4004 = vrot.slane %v3995, %v4003
        %v4005 = vlaneseq
        %v4006 = vshrl.u32 %v4005, 7
        %v4007 = vsub.s32 2, %v4006
        %v4008 = vrot.slane %v3995, %v4007
        %v4009 = vlaneseq
        %v4010 = vshrl.u32 %v4009, 7
        %v4011 = vsub.s32 3, %v4010
        %v4012 = vrot.slane %v3995, %v4011
        %v4013 = vlaneseq
        %v4014 = vshrl.u32 %v4013, 7
        %v4015 = vsub.s32 4, %v4014
        %v4016 = vrot.slane %v3995, %v4015
        %v4017 = vcombine.low %v4000, %v4004
        %v4018 = vcombine.low %v4008, %v4012
        %4019 = vrot.lane.b32.xlu0 %v4017, 65
        %v4020 = vpop.permute.xlu0 %4019
        %4021 = vrot.lane.b32.xlu0 %v4018, 65
        %v4022 = vpop.permute.xlu0 %4021
        %4023 = vrot.lane.b32.xlu0 %v4016, 65
        %v4024 = vpop.permute.xlu0 %4023
        %v4025 = vrot.slane %v4020, 4
        %v4026 = vrot.slane %v4022, 4
        %v4027 = vrot.slane %v4024, 4
        %v4028 = vsel %vm726, %v4025, %v4020
        %v4029 = vsel %vm356, %v4025, %v4026
        %v4030 = vsel %vm726, %v4029, %v4022
        %v4031 = vsel %vm356, %v4026, %v4027
        %v4032 = vsel %vm726, %v4031, %v4024
        %v4036 = vmul.f32 %v3989, %v4028
        %v4037 = vmul.f32 %v3990, %v4030
        %v4038 = vmul.f32 %v3991, %v4032
        %v4042 = vcombine.high %v4036, %v4036
        %v4043 = vcombine.high %v4037, %v4037
        %v4044 = vcombine.high %v4038, %v4038
        %4045 = vrot.lane.b32.xlu0 %v4036, 63
        %v4046 = vpop.permute.xlu0 %4045
        %4047 = vrot.lane.b32.xlu0 %v4042, 63
        %v4048 = vpop.permute.xlu0 %4047
        %4049 = vrot.lane.b32.xlu0 %v4037, 63
        %v4050 = vpop.permute.xlu0 %4049
        %4051 = vrot.lane.b32.xlu0 %v4043, 63
        %v4052 = vpop.permute.xlu0 %4051
        %4053 = vrot.lane.b32.xlu0 %v4038, 63
        %v4054 = vpop.permute.xlu0 %4053
        %4055 = vrot.lane.b32.xlu0 %v4044, 63
        %v4056 = vpop.permute.xlu0 %4055
        %v4057 = vsel %vm756, %v4046, %v4048
        %v4058 = vsel %vm756, %v4048, %v4050
        %v4059 = vsel %vm756, %v4050, %v4052
        %v4060 = vsel %vm756, %v4052, %v4054
        %v4061 = vsel %vm756, %v4054, %v4056
        %4067 = vst [vmem:[#allocation3 + $0x140] sm:$0xf] %v4057
        %4068 = vst [vmem:[#allocation3 + $0x148] sm:$0xf] %v4058
        %4069 = vst [vmem:[#allocation3 + $0x150] sm:$0xf] %v4059
        %4070 = vst [vmem:[#allocation3 + $0x158] sm:$0xf] %v4060
        %4071 = vst.msk [vmem:[#allocation3 + $0x160] sm:$0xf] %vm446, %v4061
        %v4072 = vld [vmem:[#allocation2 + $0x10] sm:$0xff]
        %v4073 = vld [vmem:[#allocation2 + $0x18] sm:$0xff]
        %v4074 = vld [vmem:[#allocation2 + $0x20] sm:$0xf]
        %s4075 = scalar_lea.vmem %s7, 81
        %v4076 = vld [vmem:[%s4075] ss:$8 sm:$0xf]
        %v4077 = vld [vmem:[%s4075] ss:$8 sm:$0x10]
        %v4078 = vor.u32 %v4076, %v4077
        %v4080 = vlaneseq
        %v4081 = vshrl.u32 %v4080, 7
        %v4082 = vsub.s32 0, %v4081
        %v4083 = vrot.slane %v4078, %v4082
        %v4084 = vlaneseq
        %v4085 = vshrl.u32 %v4084, 7
        %v4086 = vsub.s32 1, %v4085
        %v4087 = vrot.slane %v4078, %v4086
        %v4088 = vlaneseq
        %v4089 = vshrl.u32 %v4088, 7
        %v4090 = vsub.s32 2, %v4089
        %v4091 = vrot.slane %v4078, %v4090
        %v4092 = vlaneseq
        %v4093 = vshrl.u32 %v4092, 7
        %v4094 = vsub.s32 3, %v4093
        %v4095 = vrot.slane %v4078, %v4094
        %v4096 = vlaneseq
        %v4097 = vshrl.u32 %v4096, 7
        %v4098 = vsub.s32 4, %v4097
        %v4099 = vrot.slane %v4078, %v4098
        %v4100 = vcombine.low %v4083, %v4087
        %v4101 = vcombine.low %v4091, %v4095
        %4102 = vrot.lane.b32.xlu0 %v4100, 1
        %v4103 = vpop.permute.xlu0 %4102
        %4104 = vrot.lane.b32.xlu0 %v4101, 1
        %v4105 = vpop.permute.xlu0 %4104
        %4106 = vrot.lane.b32.xlu0 %v4099, 1
        %v4107 = vpop.permute.xlu0 %4106
        %v4108 = vrot.slane %v4103, 4
        %v4109 = vrot.slane %v4105, 4
        %v4110 = vsel %vm354, %v4108, %v4103
        %v4111 = vsel %vm356, %v4108, %v4109
        %v4112 = vsel %vm354, %v4111, %v4105
        %v4113 = vsel %vm354, %v4109, %v4107
        %v4117 = vmul.f32 %v4072, %v4110
        %v4118 = vmul.f32 %v4073, %v4112
        %v4119 = vmul.f32 %v4074, %v4113
        %v4123 = vcombine.low %v4117, %v4117
        %v4124 = vcombine.low %v4118, %v4118
        %v4125 = vcombine.low %v4119, %v4119
        %4126 = vrot.lane.b32.xlu0 %v4123, 127
        %v4127 = vpop.permute.xlu0 %4126
        %4128 = vrot.lane.b32.xlu0 %v4117, 127
        %v4129 = vpop.permute.xlu0 %4128
        %4130 = vrot.lane.b32.xlu0 %v4124, 127
        %v4131 = vpop.permute.xlu0 %4130
        %4132 = vrot.lane.b32.xlu0 %v4118, 127
        %v4133 = vpop.permute.xlu0 %4132
        %4134 = vrot.lane.b32.xlu0 %v4125, 127
        %v4135 = vpop.permute.xlu0 %4134
        %v4136 = vsel %vm1476, %v4127, %v4129
        %v4137 = vsel %vm1476, %v4129, %v4131
        %v4138 = vsel %vm1476, %v4131, %v4133
        %v4139 = vsel %vm1476, %v4133, %v4135
        %4145 = vst [vmem:[#allocation3 + $0x140] sm:$0xf0] %v4136
        %4146 = vst [vmem:[#allocation3 + $0x148] sm:$0xf0] %v4137
        %4147 = vst [vmem:[#allocation3 + $0x150] sm:$0xf0] %v4138
        %4148 = vst [vmem:[#allocation3 + $0x158] sm:$0xf0] %v4139
        %4149 = vst.msk [vmem:[#allocation3 + $0x160] sm:$0xf0] %vm527, %v4135
        %v4150 = vld [vmem:[#allocation2] sm:$0xff]
        %v4151 = vld [vmem:[#allocation2 + $0x8] sm:$0xff]
        %v4152 = vld [vmem:[#allocation2 + $0x10] sm:$0xf]
        %s4153 = scalar_lea.vmem %s7, 82
        %v4154 = vld [vmem:[%s4153] ss:$8 sm:$0xf]
        %v4155 = vld [vmem:[%s4153] ss:$8 sm:$0x10]
        %v4156 = vor.u32 %v4154, %v4155
        %v4158 = vlaneseq
        %v4159 = vshrl.u32 %v4158, 7
        %v4160 = vsub.s32 0, %v4159
        %v4161 = vrot.slane %v4156, %v4160
        %v4162 = vlaneseq
        %v4163 = vshrl.u32 %v4162, 7
        %v4164 = vsub.s32 1, %v4163
        %v4165 = vrot.slane %v4156, %v4164
        %v4166 = vlaneseq
        %v4167 = vshrl.u32 %v4166, 7
        %v4168 = vsub.s32 2, %v4167
        %v4169 = vrot.slane %v4156, %v4168
        %v4170 = vlaneseq
        %v4171 = vshrl.u32 %v4170, 7
        %v4172 = vsub.s32 3, %v4171
        %v4173 = vrot.slane %v4156, %v4172
        %v4174 = vlaneseq
        %v4175 = vshrl.u32 %v4174, 7
        %v4176 = vsub.s32 4, %v4175
        %v4177 = vrot.slane %v4156, %v4176
        %v4178 = vcombine.low %v4161, %v4165
        %v4179 = vcombine.low %v4169, %v4173
        %4180 = vrot.lane.b32.xlu0 %v4178, 2
        %v4181 = vpop.permute.xlu0 %4180
        %4182 = vrot.lane.b32.xlu0 %v4179, 2
        %v4183 = vpop.permute.xlu0 %4182
        %4184 = vrot.lane.b32.xlu0 %v4177, 2
        %v4185 = vpop.permute.xlu0 %4184
        %v4186 = vrot.slane %v4181, 4
        %v4187 = vrot.slane %v4183, 4
        %v4188 = vsel %vm1529, %v4186, %v4181
        %v4189 = vsel %vm356, %v4186, %v4187
        %v4190 = vsel %vm1529, %v4189, %v4183
        %v4191 = vsel %vm1529, %v4187, %v4185
        %v4195 = vmul.f32 %v4150, %v4188
        %v4196 = vmul.f32 %v4151, %v4190
        %v4197 = vmul.f32 %v4152, %v4191
        %v4201 = vcombine.high %v4195, %v4195
        %v4202 = vcombine.high %v4196, %v4196
        %4203 = vrot.lane.b32.xlu0 %v4195, 126
        %v4204 = vpop.permute.xlu0 %4203
        %4205 = vrot.lane.b32.xlu0 %v4201, 126
        %v4206 = vpop.permute.xlu0 %4205
        %4207 = vrot.lane.b32.xlu0 %v4196, 126
        %v4208 = vpop.permute.xlu0 %4207
        %4209 = vrot.lane.b32.xlu0 %v4202, 126
        %v4210 = vpop.permute.xlu0 %4209
        %4211 = vrot.lane.b32.xlu0 %v4197, 126
        %v4212 = vpop.permute.xlu0 %4211
        %v4213 = vsel %vm1555, %v4204, %v4206
        %v4214 = vsel %vm1555, %v4206, %v4208
        %v4215 = vsel %vm1555, %v4208, %v4210
        %v4216 = vsel %vm1555, %v4210, %v4212
        %4222 = vst [vmem:[#allocation3 + $0x168] sm:$0xf] %v4213
        %4223 = vst [vmem:[#allocation3 + $0x170] sm:$0xf] %v4214
        %4224 = vst [vmem:[#allocation3 + $0x178] sm:$0xf] %v4215
        %4225 = vst [vmem:[#allocation3 + $0x180] sm:$0xf] %v4216
        %4226 = vst.msk [vmem:[#allocation3 + $0x188] sm:$0xf] %vm446, %v4212
        %v4227 = vld [vmem:[#allocation2] sm:$0xff]
        %v4228 = vld [vmem:[#allocation2 + $0x8] sm:$0xff]
        %v4229 = vld [vmem:[#allocation2 + $0x10] sm:$0xff]
        %s4230 = scalar_lea.vmem %s7, 83
        %v4231 = vld [vmem:[%s4230] ss:$8 sm:$0xf]
        %v4232 = vld [vmem:[%s4230] ss:$8 sm:$0x10]
        %v4233 = vor.u32 %v4231, %v4232
        %v4235 = vlaneseq
        %v4236 = vshrl.u32 %v4235, 7
        %v4237 = vsub.s32 0, %v4236
        %v4238 = vrot.slane %v4233, %v4237
        %v4239 = vlaneseq
        %v4240 = vshrl.u32 %v4239, 7
        %v4241 = vsub.s32 1, %v4240
        %v4242 = vrot.slane %v4233, %v4241
        %v4243 = vlaneseq
        %v4244 = vshrl.u32 %v4243, 7
        %v4245 = vsub.s32 2, %v4244
        %v4246 = vrot.slane %v4233, %v4245
        %v4247 = vlaneseq
        %v4248 = vshrl.u32 %v4247, 7
        %v4249 = vsub.s32 3, %v4248
        %v4250 = vrot.slane %v4233, %v4249
        %v4251 = vlaneseq
        %v4252 = vshrl.u32 %v4251, 7
        %v4253 = vsub.s32 4, %v4252
        %v4254 = vrot.slane %v4233, %v4253
        %v4255 = vcombine.low %v4238, %v4242
        %v4256 = vcombine.low %v4246, %v4250
        %4257 = vrot.lane.b32.xlu0 %v4255, 66
        %v4258 = vpop.permute.xlu0 %4257
        %4259 = vrot.lane.b32.xlu0 %v4256, 66
        %v4260 = vpop.permute.xlu0 %4259
        %4261 = vrot.lane.b32.xlu0 %v4254, 66
        %v4262 = vpop.permute.xlu0 %4261
        %v4263 = vrot.slane %v4258, 4
        %v4264 = vrot.slane %v4260, 4
        %v4265 = vrot.slane %v4262, 4
        %v4266 = vsel %vm811, %v4263, %v4258
        %v4267 = vsel %vm356, %v4263, %v4264
        %v4268 = vsel %vm811, %v4267, %v4260
        %v4269 = vsel %vm356, %v4264, %v4265
        %v4270 = vsel %vm811, %v4269, %v4262
        %v4274 = vmul.f32 %v4227, %v4266
        %v4275 = vmul.f32 %v4228, %v4268
        %v4276 = vmul.f32 %v4229, %v4270
        %v4280 = vcombine.low %v4274, %v4274
        %v4281 = vcombine.low %v4275, %v4275
        %v4282 = vcombine.low %v4276, %v4276
        %4283 = vrot.lane.b32.xlu0 %v4280, 62
        %v4284 = vpop.permute.xlu0 %4283
        %4285 = vrot.lane.b32.xlu0 %v4274, 62
        %v4286 = vpop.permute.xlu0 %4285
        %4287 = vrot.lane.b32.xlu0 %v4281, 62
        %v4288 = vpop.permute.xlu0 %4287
        %4289 = vrot.lane.b32.xlu0 %v4275, 62
        %v4290 = vpop.permute.xlu0 %4289
        %4291 = vrot.lane.b32.xlu0 %v4282, 62
        %v4292 = vpop.permute.xlu0 %4291
        %4293 = vrot.lane.b32.xlu0 %v4276, 62
        %v4294 = vpop.permute.xlu0 %4293
        %v4295 = vsel %vm841, %v4284, %v4286
        %v4296 = vsel %vm841, %v4286, %v4288
        %v4297 = vsel %vm841, %v4288, %v4290
        %v4298 = vsel %vm841, %v4290, %v4292
        %v4299 = vsel %vm841, %v4292, %v4294
        %4305 = vst [vmem:[#allocation3 + $0x168] sm:$0xf0] %v4295
        %4306 = vst [vmem:[#allocation3 + $0x170] sm:$0xf0] %v4296
        %4307 = vst [vmem:[#allocation3 + $0x178] sm:$0xf0] %v4297
        %4308 = vst [vmem:[#allocation3 + $0x180] sm:$0xf0] %v4298
        %4309 = vst.msk [vmem:[#allocation3 + $0x188] sm:$0xf0] %vm527, %v4299
        %v4310 = vld [vmem:[#allocation2 + $0x4] sm:$0xff]
        %v4311 = vld [vmem:[#allocation2 + $0xc] sm:$0xff]
        %v4312 = vld [vmem:[#allocation2 + $0x14] sm:$0xf]
        %s4313 = scalar_lea.vmem %s7, 84
        %v4314 = vld [vmem:[%s4313] ss:$8 sm:$0xf]
        %v4315 = vld [vmem:[%s4313] ss:$8 sm:$0x10]
        %v4316 = vor.u32 %v4314, %v4315
        %v4318 = vlaneseq
        %v4319 = vshrl.u32 %v4318, 7
        %v4320 = vsub.s32 0, %v4319
        %v4321 = vrot.slane %v4316, %v4320
        %v4322 = vlaneseq
        %v4323 = vshrl.u32 %v4322, 7
        %v4324 = vsub.s32 1, %v4323
        %v4325 = vrot.slane %v4316, %v4324
        %v4326 = vlaneseq
        %v4327 = vshrl.u32 %v4326, 7
        %v4328 = vsub.s32 2, %v4327
        %v4329 = vrot.slane %v4316, %v4328
        %v4330 = vlaneseq
        %v4331 = vshrl.u32 %v4330, 7
        %v4332 = vsub.s32 3, %v4331
        %v4333 = vrot.slane %v4316, %v4332
        %v4334 = vlaneseq
        %v4335 = vshrl.u32 %v4334, 7
        %v4336 = vsub.s32 4, %v4335
        %v4337 = vrot.slane %v4316, %v4336
        %v4338 = vcombine.low %v4321, %v4325
        %v4339 = vcombine.low %v4329, %v4333
        %4340 = vrot.lane.b32.xlu0 %v4338, 2
        %v4341 = vpop.permute.xlu0 %4340
        %4342 = vrot.lane.b32.xlu0 %v4339, 2
        %v4343 = vpop.permute.xlu0 %4342
        %4344 = vrot.lane.b32.xlu0 %v4337, 2
        %v4345 = vpop.permute.xlu0 %4344
        %v4346 = vrot.slane %v4341, 4
        %v4347 = vrot.slane %v4343, 4
        %v4348 = vsel %vm1529, %v4346, %v4341
        %v4349 = vsel %vm356, %v4346, %v4347
        %v4350 = vsel %vm1529, %v4349, %v4343
        %v4351 = vsel %vm1529, %v4347, %v4345
        %v4355 = vmul.f32 %v4310, %v4348
        %v4356 = vmul.f32 %v4311, %v4350
        %v4357 = vmul.f32 %v4312, %v4351
        %v4361 = vcombine.high %v4355, %v4355
        %v4362 = vcombine.high %v4356, %v4356
        %4363 = vrot.lane.b32.xlu0 %v4355, 126
        %v4364 = vpop.permute.xlu0 %4363
        %4365 = vrot.lane.b32.xlu0 %v4361, 126
        %v4366 = vpop.permute.xlu0 %4365
        %4367 = vrot.lane.b32.xlu0 %v4356, 126
        %v4368 = vpop.permute.xlu0 %4367
        %4369 = vrot.lane.b32.xlu0 %v4362, 126
        %v4370 = vpop.permute.xlu0 %4369
        %4371 = vrot.lane.b32.xlu0 %v4357, 126
        %v4372 = vpop.permute.xlu0 %4371
        %v4373 = vsel %vm1555, %v4364, %v4366
        %v4374 = vsel %vm1555, %v4366, %v4368
        %v4375 = vsel %vm1555, %v4368, %v4370
        %v4376 = vsel %vm1555, %v4370, %v4372
        %4382 = vst [vmem:[#allocation3 + $0x190] sm:$0xf] %v4373
        %4383 = vst [vmem:[#allocation3 + $0x198] sm:$0xf] %v4374
        %4384 = vst [vmem:[#allocation3 + $0x1a0] sm:$0xf] %v4375
        %4385 = vst [vmem:[#allocation3 + $0x1a8] sm:$0xf] %v4376
        %4386 = vst.msk [vmem:[#allocation3 + $0x1b0] sm:$0xf] %vm446, %v4372
        %v4387 = vld [vmem:[#allocation2 + $0x4] sm:$0xff]
        %v4388 = vld [vmem:[#allocation2 + $0xc] sm:$0xff]
        %v4389 = vld [vmem:[#allocation2 + $0x14] sm:$0xff]
        %s4390 = scalar_lea.vmem %s7, 85
        %v4391 = vld [vmem:[%s4390] ss:$8 sm:$0xf]
        %v4392 = vld [vmem:[%s4390] ss:$8 sm:$0x10]
        %v4393 = vor.u32 %v4391, %v4392
        %v4395 = vlaneseq
        %v4396 = vshrl.u32 %v4395, 7
        %v4397 = vsub.s32 0, %v4396
        %v4398 = vrot.slane %v4393, %v4397
        %v4399 = vlaneseq
        %v4400 = vshrl.u32 %v4399, 7
        %v4401 = vsub.s32 1, %v4400
        %v4402 = vrot.slane %v4393, %v4401
        %v4403 = vlaneseq
        %v4404 = vshrl.u32 %v4403, 7
        %v4405 = vsub.s32 2, %v4404
        %v4406 = vrot.slane %v4393, %v4405
        %v4407 = vlaneseq
        %v4408 = vshrl.u32 %v4407, 7
        %v4409 = vsub.s32 3, %v4408
        %v4410 = vrot.slane %v4393, %v4409
        %v4411 = vlaneseq
        %v4412 = vshrl.u32 %v4411, 7
        %v4413 = vsub.s32 4, %v4412
        %v4414 = vrot.slane %v4393, %v4413
        %v4415 = vcombine.low %v4398, %v4402
        %v4416 = vcombine.low %v4406, %v4410
        %4417 = vrot.lane.b32.xlu0 %v4415, 66
        %v4418 = vpop.permute.xlu0 %4417
        %4419 = vrot.lane.b32.xlu0 %v4416, 66
        %v4420 = vpop.permute.xlu0 %4419
        %4421 = vrot.lane.b32.xlu0 %v4414, 66
        %v4422 = vpop.permute.xlu0 %4421
        %v4423 = vrot.slane %v4418, 4
        %v4424 = vrot.slane %v4420, 4
        %v4425 = vrot.slane %v4422, 4
        %v4426 = vsel %vm811, %v4423, %v4418
        %v4427 = vsel %vm356, %v4423, %v4424
        %v4428 = vsel %vm811, %v4427, %v4420
        %v4429 = vsel %vm356, %v4424, %v4425
        %v4430 = vsel %vm811, %v4429, %v4422
        %v4434 = vmul.f32 %v4387, %v4426
        %v4435 = vmul.f32 %v4388, %v4428
        %v4436 = vmul.f32 %v4389, %v4430
        %v4440 = vcombine.low %v4434, %v4434
        %v4441 = vcombine.low %v4435, %v4435
        %v4442 = vcombine.low %v4436, %v4436
        %4443 = vrot.lane.b32.xlu0 %v4440, 62
        %v4444 = vpop.permute.xlu0 %4443
        %4445 = vrot.lane.b32.xlu0 %v4434, 62
        %v4446 = vpop.permute.xlu0 %4445
        %4447 = vrot.lane.b32.xlu0 %v4441, 62
        %v4448 = vpop.permute.xlu0 %4447
        %4449 = vrot.lane.b32.xlu0 %v4435, 62
        %v4450 = vpop.permute.xlu0 %4449
        %4451 = vrot.lane.b32.xlu0 %v4442, 62
        %v4452 = vpop.permute.xlu0 %4451
        %4453 = vrot.lane.b32.xlu0 %v4436, 62
        %v4454 = vpop.permute.xlu0 %4453
        %v4455 = vsel %vm841, %v4444, %v4446
        %v4456 = vsel %vm841, %v4446, %v4448
        %v4457 = vsel %vm841, %v4448, %v4450
        %v4458 = vsel %vm841, %v4450, %v4452
        %v4459 = vsel %vm841, %v4452, %v4454
        %4465 = vst [vmem:[#allocation3 + $0x190] sm:$0xf0] %v4455
        %4466 = vst [vmem:[#allocation3 + $0x198] sm:$0xf0] %v4456
        %4467 = vst [vmem:[#allocation3 + $0x1a0] sm:$0xf0] %v4457
        %4468 = vst [vmem:[#allocation3 + $0x1a8] sm:$0xf0] %v4458
        %4469 = vst.msk [vmem:[#allocation3 + $0x1b0] sm:$0xf0] %vm527, %v4459
        %v4470 = vld [vmem:[#allocation2 + $0x8] sm:$0xff]
        %v4471 = vld [vmem:[#allocation2 + $0x10] sm:$0xff]
        %v4472 = vld [vmem:[#allocation2 + $0x18] sm:$0xf]
        %s4473 = scalar_lea.vmem %s7, 86
        %v4474 = vld [vmem:[%s4473] ss:$8 sm:$0xf]
        %v4475 = vld [vmem:[%s4473] ss:$8 sm:$0x10]
        %v4476 = vor.u32 %v4474, %v4475
        %v4478 = vlaneseq
        %v4479 = vshrl.u32 %v4478, 7
        %v4480 = vsub.s32 0, %v4479
        %v4481 = vrot.slane %v4476, %v4480
        %v4482 = vlaneseq
        %v4483 = vshrl.u32 %v4482, 7
        %v4484 = vsub.s32 1, %v4483
        %v4485 = vrot.slane %v4476, %v4484
        %v4486 = vlaneseq
        %v4487 = vshrl.u32 %v4486, 7
        %v4488 = vsub.s32 2, %v4487
        %v4489 = vrot.slane %v4476, %v4488
        %v4490 = vlaneseq
        %v4491 = vshrl.u32 %v4490, 7
        %v4492 = vsub.s32 3, %v4491
        %v4493 = vrot.slane %v4476, %v4492
        %v4494 = vlaneseq
        %v4495 = vshrl.u32 %v4494, 7
        %v4496 = vsub.s32 4, %v4495
        %v4497 = vrot.slane %v4476, %v4496
        %v4498 = vcombine.low %v4481, %v4485
        %v4499 = vcombine.low %v4489, %v4493
        %4500 = vrot.lane.b32.xlu0 %v4498, 2
        %v4501 = vpop.permute.xlu0 %4500
        %4502 = vrot.lane.b32.xlu0 %v4499, 2
        %v4503 = vpop.permute.xlu0 %4502
        %4504 = vrot.lane.b32.xlu0 %v4497, 2
        %v4505 = vpop.permute.xlu0 %4504
        %v4506 = vrot.slane %v4501, 4
        %v4507 = vrot.slane %v4503, 4
        %v4508 = vsel %vm1529, %v4506, %v4501
        %v4509 = vsel %vm356, %v4506, %v4507
        %v4510 = vsel %vm1529, %v4509, %v4503
        %v4511 = vsel %vm1529, %v4507, %v4505
        %v4515 = vmul.f32 %v4470, %v4508
        %v4516 = vmul.f32 %v4471, %v4510
        %v4517 = vmul.f32 %v4472, %v4511
        %v4521 = vcombine.high %v4515, %v4515
        %v4522 = vcombine.high %v4516, %v4516
        %4523 = vrot.lane.b32.xlu0 %v4515, 126
        %v4524 = vpop.permute.xlu0 %4523
        %4525 = vrot.lane.b32.xlu0 %v4521, 126
        %v4526 = vpop.permute.xlu0 %4525
        %4527 = vrot.lane.b32.xlu0 %v4516, 126
        %v4528 = vpop.permute.xlu0 %4527
        %4529 = vrot.lane.b32.xlu0 %v4522, 126
        %v4530 = vpop.permute.xlu0 %4529
        %4531 = vrot.lane.b32.xlu0 %v4517, 126
        %v4532 = vpop.permute.xlu0 %4531
        %v4533 = vsel %vm1555, %v4524, %v4526
        %v4534 = vsel %vm1555, %v4526, %v4528
        %v4535 = vsel %vm1555, %v4528, %v4530
        %v4536 = vsel %vm1555, %v4530, %v4532
        %4542 = vst [vmem:[#allocation3 + $0x1b8] sm:$0xf] %v4533
        %4543 = vst [vmem:[#allocation3 + $0x1c0] sm:$0xf] %v4534
        %4544 = vst [vmem:[#allocation3 + $0x1c8] sm:$0xf] %v4535
        %4545 = vst [vmem:[#allocation3 + $0x1d0] sm:$0xf] %v4536
        %4546 = vst.msk [vmem:[#allocation3 + $0x1d8] sm:$0xf] %vm446, %v4532
        %v4547 = vld [vmem:[#allocation2 + $0x8] sm:$0xff]
        %v4548 = vld [vmem:[#allocation2 + $0x10] sm:$0xff]
        %v4549 = vld [vmem:[#allocation2 + $0x18] sm:$0xff]
        %s4550 = scalar_lea.vmem %s7, 87
        %v4551 = vld [vmem:[%s4550] ss:$8 sm:$0xf]
        %v4552 = vld [vmem:[%s4550] ss:$8 sm:$0x10]
        %v4553 = vor.u32 %v4551, %v4552
        %v4555 = vlaneseq
        %v4556 = vshrl.u32 %v4555, 7
        %v4557 = vsub.s32 0, %v4556
        %v4558 = vrot.slane %v4553, %v4557
        %v4559 = vlaneseq
        %v4560 = vshrl.u32 %v4559, 7
        %v4561 = vsub.s32 1, %v4560
        %v4562 = vrot.slane %v4553, %v4561
        %v4563 = vlaneseq
        %v4564 = vshrl.u32 %v4563, 7
        %v4565 = vsub.s32 2, %v4564
        %v4566 = vrot.slane %v4553, %v4565
        %v4567 = vlaneseq
        %v4568 = vshrl.u32 %v4567, 7
        %v4569 = vsub.s32 3, %v4568
        %v4570 = vrot.slane %v4553, %v4569
        %v4571 = vlaneseq
        %v4572 = vshrl.u32 %v4571, 7
        %v4573 = vsub.s32 4, %v4572
        %v4574 = vrot.slane %v4553, %v4573
        %v4575 = vcombine.low %v4558, %v4562
        %v4576 = vcombine.low %v4566, %v4570
        %4577 = vrot.lane.b32.xlu0 %v4575, 66
        %v4578 = vpop.permute.xlu0 %4577
        %4579 = vrot.lane.b32.xlu0 %v4576, 66
        %v4580 = vpop.permute.xlu0 %4579
        %4581 = vrot.lane.b32.xlu0 %v4574, 66
        %v4582 = vpop.permute.xlu0 %4581
        %v4583 = vrot.slane %v4578, 4
        %v4584 = vrot.slane %v4580, 4
        %v4585 = vrot.slane %v4582, 4
        %v4586 = vsel %vm811, %v4583, %v4578
        %v4587 = vsel %vm356, %v4583, %v4584
        %v4588 = vsel %vm811, %v4587, %v4580
        %v4589 = vsel %vm356, %v4584, %v4585
        %v4590 = vsel %vm811, %v4589, %v4582
        %v4594 = vmul.f32 %v4547, %v4586
        %v4595 = vmul.f32 %v4548, %v4588
        %v4596 = vmul.f32 %v4549, %v4590
        %v4600 = vcombine.low %v4594, %v4594
        %v4601 = vcombine.low %v4595, %v4595
        %v4602 = vcombine.low %v4596, %v4596
        %4603 = vrot.lane.b32.xlu0 %v4600, 62
        %v4604 = vpop.permute.xlu0 %4603
        %4605 = vrot.lane.b32.xlu0 %v4594, 62
        %v4606 = vpop.permute.xlu0 %4605
        %4607 = vrot.lane.b32.xlu0 %v4601, 62
        %v4608 = vpop.permute.xlu0 %4607
        %4609 = vrot.lane.b32.xlu0 %v4595, 62
        %v4610 = vpop.permute.xlu0 %4609
        %4611 = vrot.lane.b32.xlu0 %v4602, 62
        %v4612 = vpop.permute.xlu0 %4611
        %4613 = vrot.lane.b32.xlu0 %v4596, 62
        %v4614 = vpop.permute.xlu0 %4613
        %v4615 = vsel %vm841, %v4604, %v4606
        %v4616 = vsel %vm841, %v4606, %v4608
        %v4617 = vsel %vm841, %v4608, %v4610
        %v4618 = vsel %vm841, %v4610, %v4612
        %v4619 = vsel %vm841, %v4612, %v4614
        %4625 = vst [vmem:[#allocation3 + $0x1b8] sm:$0xf0] %v4615
        %4626 = vst [vmem:[#allocation3 + $0x1c0] sm:$0xf0] %v4616
        %4627 = vst [vmem:[#allocation3 + $0x1c8] sm:$0xf0] %v4617
        %4628 = vst [vmem:[#allocation3 + $0x1d0] sm:$0xf0] %v4618
        %4629 = vst.msk [vmem:[#allocation3 + $0x1d8] sm:$0xf0] %vm527, %v4619
        %v4630 = vld [vmem:[#allocation2 + $0xc] sm:$0xff]
        %v4631 = vld [vmem:[#allocation2 + $0x14] sm:$0xff]
        %v4632 = vld [vmem:[#allocation2 + $0x1c] sm:$0xf]
        %s4633 = scalar_lea.vmem %s7, 120
        %v4634 = vld [vmem:[%s4633] ss:$8 sm:$0xf]
        %v4635 = vld [vmem:[%s4633] ss:$8 sm:$0x10]
        %v4636 = vor.u32 %v4634, %v4635
        %v4638 = vlaneseq
        %v4639 = vshrl.u32 %v4638, 7
        %v4640 = vsub.s32 0, %v4639
        %v4641 = vrot.slane %v4636, %v4640
        %v4642 = vlaneseq
        %v4643 = vshrl.u32 %v4642, 7
        %v4644 = vsub.s32 1, %v4643
        %v4645 = vrot.slane %v4636, %v4644
        %v4646 = vlaneseq
        %v4647 = vshrl.u32 %v4646, 7
        %v4648 = vsub.s32 2, %v4647
        %v4649 = vrot.slane %v4636, %v4648
        %v4650 = vlaneseq
        %v4651 = vshrl.u32 %v4650, 7
        %v4652 = vsub.s32 3, %v4651
        %v4653 = vrot.slane %v4636, %v4652
        %v4654 = vlaneseq
        %v4655 = vshrl.u32 %v4654, 7
        %v4656 = vsub.s32 4, %v4655
        %v4657 = vrot.slane %v4636, %v4656
        %v4658 = vcombine.low %v4641, %v4645
        %v4659 = vcombine.low %v4649, %v4653
        %4660 = vrot.lane.b32.xlu0 %v4658, 2
        %v4661 = vpop.permute.xlu0 %4660
        %4662 = vrot.lane.b32.xlu0 %v4659, 2
        %v4663 = vpop.permute.xlu0 %4662
        %4664 = vrot.lane.b32.xlu0 %v4657, 2
        %v4665 = vpop.permute.xlu0 %4664
        %v4666 = vrot.slane %v4661, 4
        %v4667 = vrot.slane %v4663, 4
        %v4668 = vsel %vm1529, %v4666, %v4661
        %v4669 = vsel %vm356, %v4666, %v4667
        %v4670 = vsel %vm1529, %v4669, %v4663
        %v4671 = vsel %vm1529, %v4667, %v4665
        %v4675 = vmul.f32 %v4630, %v4668
        %v4676 = vmul.f32 %v4631, %v4670
        %v4677 = vmul.f32 %v4632, %v4671
        %v4681 = vcombine.high %v4675, %v4675
        %v4682 = vcombine.high %v4676, %v4676
        %4683 = vrot.lane.b32.xlu0 %v4675, 126
        %v4684 = vpop.permute.xlu0 %4683
        %4685 = vrot.lane.b32.xlu0 %v4681, 126
        %v4686 = vpop.permute.xlu0 %4685
        %4687 = vrot.lane.b32.xlu0 %v4676, 126
        %v4688 = vpop.permute.xlu0 %4687
        %4689 = vrot.lane.b32.xlu0 %v4682, 126
        %v4690 = vpop.permute.xlu0 %4689
        %4691 = vrot.lane.b32.xlu0 %v4677, 126
        %v4692 = vpop.permute.xlu0 %4691
        %v4693 = vsel %vm1555, %v4684, %v4686
        %v4694 = vsel %vm1555, %v4686, %v4688
        %v4695 = vsel %vm1555, %v4688, %v4690
        %v4696 = vsel %vm1555, %v4690, %v4692
        %4702 = vst [vmem:[#allocation3 + $0x1e0] sm:$0xf] %v4693
        %4703 = vst [vmem:[#allocation3 + $0x1e8] sm:$0xf] %v4694
        %4704 = vst [vmem:[#allocation3 + $0x1f0] sm:$0xf] %v4695
        %4705 = vst [vmem:[#allocation3 + $0x1f8] sm:$0xf] %v4696
        %4706 = vst.msk [vmem:[#allocation3 + $0x200] sm:$0xf] %vm446, %v4692
        %v4707 = vld [vmem:[#allocation2 + $0xc] sm:$0xff]
        %v4708 = vld [vmem:[#allocation2 + $0x14] sm:$0xff]
        %v4709 = vld [vmem:[#allocation2 + $0x1c] sm:$0xff]
        %s4710 = scalar_lea.vmem %s7, 121
        %v4711 = vld [vmem:[%s4710] ss:$8 sm:$0xf]
        %v4712 = vld [vmem:[%s4710] ss:$8 sm:$0x10]
        %v4713 = vor.u32 %v4711, %v4712
        %v4715 = vlaneseq
        %v4716 = vshrl.u32 %v4715, 7
        %v4717 = vsub.s32 0, %v4716
        %v4718 = vrot.slane %v4713, %v4717
        %v4719 = vlaneseq
        %v4720 = vshrl.u32 %v4719, 7
        %v4721 = vsub.s32 1, %v4720
        %v4722 = vrot.slane %v4713, %v4721
        %v4723 = vlaneseq
        %v4724 = vshrl.u32 %v4723, 7
        %v4725 = vsub.s32 2, %v4724
        %v4726 = vrot.slane %v4713, %v4725
        %v4727 = vlaneseq
        %v4728 = vshrl.u32 %v4727, 7
        %v4729 = vsub.s32 3, %v4728
        %v4730 = vrot.slane %v4713, %v4729
        %v4731 = vlaneseq
        %v4732 = vshrl.u32 %v4731, 7
        %v4733 = vsub.s32 4, %v4732
        %v4734 = vrot.slane %v4713, %v4733
        %v4735 = vcombine.low %v4718, %v4722
        %v4736 = vcombine.low %v4726, %v4730
        %4737 = vrot.lane.b32.xlu0 %v4735, 66
        %v4738 = vpop.permute.xlu0 %4737
        %4739 = vrot.lane.b32.xlu0 %v4736, 66
        %v4740 = vpop.permute.xlu0 %4739
        %4741 = vrot.lane.b32.xlu0 %v4734, 66
        %v4742 = vpop.permute.xlu0 %4741
        %v4743 = vrot.slane %v4738, 4
        %v4744 = vrot.slane %v4740, 4
        %v4745 = vrot.slane %v4742, 4
        %v4746 = vsel %vm811, %v4743, %v4738
        %v4747 = vsel %vm356, %v4743, %v4744
        %v4748 = vsel %vm811, %v4747, %v4740
        %v4749 = vsel %vm356, %v4744, %v4745
        %v4750 = vsel %vm811, %v4749, %v4742
        %v4754 = vmul.f32 %v4707, %v4746
        %v4755 = vmul.f32 %v4708, %v4748
        %v4756 = vmul.f32 %v4709, %v4750
        %v4760 = vcombine.low %v4754, %v4754
        %v4761 = vcombine.low %v4755, %v4755
        %v4762 = vcombine.low %v4756, %v4756
        %4763 = vrot.lane.b32.xlu0 %v4760, 62
        %v4764 = vpop.permute.xlu0 %4763
        %4765 = vrot.lane.b32.xlu0 %v4754, 62
        %v4766 = vpop.permute.xlu0 %4765
        %4767 = vrot.lane.b32.xlu0 %v4761, 62
        %v4768 = vpop.permute.xlu0 %4767
        %4769 = vrot.lane.b32.xlu0 %v4755, 62
        %v4770 = vpop.permute.xlu0 %4769
        %4771 = vrot.lane.b32.xlu0 %v4762, 62
        %v4772 = vpop.permute.xlu0 %4771
        %4773 = vrot.lane.b32.xlu0 %v4756, 62
        %v4774 = vpop.permute.xlu0 %4773
        %v4775 = vsel %vm841, %v4764, %v4766
        %v4776 = vsel %vm841, %v4766, %v4768
        %v4777 = vsel %vm841, %v4768, %v4770
        %v4778 = vsel %vm841, %v4770, %v4772
        %v4779 = vsel %vm841, %v4772, %v4774
        %4785 = vst [vmem:[#allocation3 + $0x1e0] sm:$0xf0] %v4775
        %4786 = vst [vmem:[#allocation3 + $0x1e8] sm:$0xf0] %v4776
        %4787 = vst [vmem:[#allocation3 + $0x1f0] sm:$0xf0] %v4777
        %4788 = vst [vmem:[#allocation3 + $0x1f8] sm:$0xf0] %v4778
        %4789 = vst.msk [vmem:[#allocation3 + $0x200] sm:$0xf0] %vm527, %v4779
        %v4790 = vld [vmem:[#allocation2 + $0x10] sm:$0xff]
        %v4791 = vld [vmem:[#allocation2 + $0x18] sm:$0xff]
        %v4792 = vld [vmem:[#allocation2 + $0x20] sm:$0xf]
        %s4793 = scalar_lea.vmem %s7, 122
        %v4794 = vld [vmem:[%s4793] ss:$8 sm:$0xf]
        %v4795 = vld [vmem:[%s4793] ss:$8 sm:$0x10]
        %v4796 = vor.u32 %v4794, %v4795
        %v4798 = vlaneseq
        %v4799 = vshrl.u32 %v4798, 7
        %v4800 = vsub.s32 0, %v4799
        %v4801 = vrot.slane %v4796, %v4800
        %v4802 = vlaneseq
        %v4803 = vshrl.u32 %v4802, 7
        %v4804 = vsub.s32 1, %v4803
        %v4805 = vrot.slane %v4796, %v4804
        %v4806 = vlaneseq
        %v4807 = vshrl.u32 %v4806, 7
        %v4808 = vsub.s32 2, %v4807
        %v4809 = vrot.slane %v4796, %v4808
        %v4810 = vlaneseq
        %v4811 = vshrl.u32 %v4810, 7
        %v4812 = vsub.s32 3, %v4811
        %v4813 = vrot.slane %v4796, %v4812
        %v4814 = vlaneseq
        %v4815 = vshrl.u32 %v4814, 7
        %v4816 = vsub.s32 4, %v4815
        %v4817 = vrot.slane %v4796, %v4816
        %v4818 = vcombine.low %v4801, %v4805
        %v4819 = vcombine.low %v4809, %v4813
        %4820 = vrot.lane.b32.xlu0 %v4818, 2
        %v4821 = vpop.permute.xlu0 %4820
        %4822 = vrot.lane.b32.xlu0 %v4819, 2
        %v4823 = vpop.permute.xlu0 %4822
        %4824 = vrot.lane.b32.xlu0 %v4817, 2
        %v4825 = vpop.permute.xlu0 %4824
        %v4826 = vrot.slane %v4821, 4
        %v4827 = vrot.slane %v4823, 4
        %v4828 = vsel %vm1529, %v4826, %v4821
        %v4829 = vsel %vm356, %v4826, %v4827
        %v4830 = vsel %vm1529, %v4829, %v4823
        %v4831 = vsel %vm1529, %v4827, %v4825
        %v4835 = vmul.f32 %v4790, %v4828
        %v4836 = vmul.f32 %v4791, %v4830
        %v4837 = vmul.f32 %v4792, %v4831
        %v4841 = vcombine.high %v4835, %v4835
        %v4842 = vcombine.high %v4836, %v4836
        %4843 = vrot.lane.b32.xlu0 %v4835, 126
        %v4844 = vpop.permute.xlu0 %4843
        %4845 = vrot.lane.b32.xlu0 %v4841, 126
        %v4846 = vpop.permute.xlu0 %4845
        %4847 = vrot.lane.b32.xlu0 %v4836, 126
        %v4848 = vpop.permute.xlu0 %4847
        %4849 = vrot.lane.b32.xlu0 %v4842, 126
        %v4850 = vpop.permute.xlu0 %4849
        %4851 = vrot.lane.b32.xlu0 %v4837, 126
        %v4852 = vpop.permute.xlu0 %4851
        %v4853 = vsel %vm1555, %v4844, %v4846
        %v4854 = vsel %vm1555, %v4846, %v4848
        %v4855 = vsel %vm1555, %v4848, %v4850
        %v4856 = vsel %vm1555, %v4850, %v4852
        %4862 = vst [vmem:[#allocation3 + $0x208] sm:$0xf] %v4853
        %4863 = vst [vmem:[#allocation3 + $0x210] sm:$0xf] %v4854
        %4864 = vst [vmem:[#allocation3 + $0x218] sm:$0xf] %v4855
        %4865 = vst [vmem:[#allocation3 + $0x220] sm:$0xf] %v4856
        %4866 = vst.msk [vmem:[#allocation3 + $0x228] sm:$0xf] %vm446, %v4852
        %v4867 = vld [vmem:[%s4] sm:$0xf]
        %v4868 = vld [vmem:[#allocation3] sm:$0xff]
        %v4869 = vld [vmem:[#allocation3 + $0x8] sm:$0xff]
        %v4870 = vld [vmem:[#allocation3 + $0x10] sm:$0xff]
        %v4871 = vld [vmem:[#allocation3 + $0x18] sm:$0xff]
        %v4872 = vld [vmem:[#allocation3 + $0x20] sm:$0xff]
        %v4873 = vld [vmem:[#allocation3 + $0x28] sm:$0xff]
        %v4874 = vld [vmem:[#allocation3 + $0x30] sm:$0xff]
        %v4875 = vld [vmem:[#allocation3 + $0x38] sm:$0xff]
        %v4876 = vld [vmem:[#allocation3 + $0x40] sm:$0xff]
        %v4877 = vld [vmem:[#allocation3 + $0x48] sm:$0xff]
        %v4878 = vld [vmem:[#allocation3 + $0x50] sm:$0xff]
        %v4879 = vld [vmem:[#allocation3 + $0x58] sm:$0xff]
        %v4880 = vld [vmem:[#allocation3 + $0x60] sm:$0xff]
        %v4881 = vld [vmem:[#allocation3 + $0x68] sm:$0xff]
        %v4882 = vld [vmem:[#allocation3 + $0x70] sm:$0xff]
        %v4883 = vld [vmem:[#allocation3 + $0x78] sm:$0xff]
        %v4884 = vld [vmem:[#allocation3 + $0x80] sm:$0xff]
        %v4885 = vld [vmem:[#allocation3 + $0x88] sm:$0xff]
        %v4886 = vld [vmem:[#allocation3 + $0x90] sm:$0xff]
        %v4887 = vld [vmem:[#allocation3 + $0x98] sm:$0xff]
        %v4888 = vld [vmem:[#allocation3 + $0xa0] sm:$0xff]
        %v4889 = vld [vmem:[#allocation3 + $0xa8] sm:$0xff]
        %v4890 = vld [vmem:[#allocation3 + $0xb0] sm:$0xff]
        %v4891 = vld [vmem:[#allocation3 + $0xb8] sm:$0xff]
        %v4892 = vld [vmem:[#allocation3 + $0xc0] sm:$0xff]
        %v4893 = vld [vmem:[#allocation3 + $0xc8] sm:$0xff]
        %v4894 = vld [vmem:[#allocation3 + $0xd0] sm:$0xff]
        %v4895 = vld [vmem:[#allocation3 + $0xd8] sm:$0xff]
        %v4896 = vld [vmem:[#allocation3 + $0xe0] sm:$0xff]
        %v4897 = vld [vmem:[#allocation3 + $0xe8] sm:$0xff]
        %v4898 = vld [vmem:[#allocation3 + $0xf0] sm:$0xff]
        %v4899 = vld [vmem:[#allocation3 + $0xf8] sm:$0xff]
        %v4900 = vld [vmem:[#allocation3 + $0x100] sm:$0xff]
        %v4901 = vld [vmem:[#allocation3 + $0x108] sm:$0xff]
        %v4902 = vld [vmem:[#allocation3 + $0x110] sm:$0xff]
        %v4903 = vld [vmem:[#allocation3 + $0x118] sm:$0xff]
        %v4904 = vld [vmem:[#allocation3 + $0x120] sm:$0xff]
        %v4905 = vld [vmem:[#allocation3 + $0x128] sm:$0xff]
        %v4906 = vld [vmem:[#allocation3 + $0x130] sm:$0xff]
        %v4907 = vld [vmem:[#allocation3 + $0x138] sm:$0xff]
        %v4908 = vld [vmem:[#allocation3 + $0x140] sm:$0xff]
        %v4909 = vld [vmem:[#allocation3 + $0x148] sm:$0xff]
        %v4910 = vld [vmem:[#allocation3 + $0x150] sm:$0xff]
        %v4911 = vld [vmem:[#allocation3 + $0x158] sm:$0xff]
        %v4912 = vld [vmem:[#allocation3 + $0x160] sm:$0xff]
        %v4913 = vld [vmem:[#allocation3 + $0x168] sm:$0xff]
        %v4914 = vld [vmem:[#allocation3 + $0x170] sm:$0xff]
        %v4915 = vld [vmem:[#allocation3 + $0x178] sm:$0xff]
        %v4916 = vld [vmem:[#allocation3 + $0x180] sm:$0xff]
        %v4917 = vld [vmem:[#allocation3 + $0x188] sm:$0xff]
        %v4918 = vld [vmem:[#allocation3 + $0x190] sm:$0xff]
        %v4919 = vld [vmem:[#allocation3 + $0x198] sm:$0xff]
        %v4920 = vld [vmem:[#allocation3 + $0x1a0] sm:$0xff]
        %v4921 = vld [vmem:[#allocation3 + $0x1a8] sm:$0xff]
        %v4922 = vld [vmem:[#allocation3 + $0x1b0] sm:$0xff]
        %v4923 = vld [vmem:[#allocation3 + $0x1b8] sm:$0xff]
        %v4924 = vld [vmem:[#allocation3 + $0x1c0] sm:$0xff]
        %v4925 = vld [vmem:[#allocation3 + $0x1c8] sm:$0xff]
        %v4926 = vld [vmem:[#allocation3 + $0x1d0] sm:$0xff]
        %v4927 = vld [vmem:[#allocation3 + $0x1d8] sm:$0xff]
        %v4928 = vld [vmem:[#allocation3 + $0x1e0] sm:$0xff]
        %v4929 = vld [vmem:[#allocation3 + $0x1e8] sm:$0xff]
        %v4930 = vld [vmem:[#allocation3 + $0x1f0] sm:$0xff]
        %v4931 = vld [vmem:[#allocation3 + $0x1f8] sm:$0xff]
        %v4932 = vld [vmem:[#allocation3 + $0x200] sm:$0xff]
        %v4933 = vld [vmem:[#allocation3 + $0x208] sm:$0xf]
        %v4934 = vld [vmem:[#allocation3 + $0x210] sm:$0xf]
        %v4935 = vld [vmem:[#allocation3 + $0x218] sm:$0xf]
        %v4936 = vld [vmem:[#allocation3 + $0x220] sm:$0xf]
        %v4937 = vld [vmem:[#allocation3 + $0x228] sm:$0xf]
        %v4938 = vld [vmem:[%s5] sm:$0xf]
        %4940 = vset.pattern.permute.xlu0 0
        %4941 = vperm.xlu0 %4940, %v4938
        %v4942 = vpop.permute.xlu0 %4941
        %v4945 = vsel %vm2609, %v4867, 0
        %v4948 = vsel %vm356, %v4933, 0
        %v4951 = vsel %vm356, %v4934, 0
        %v4954 = vsel %vm356, %v4935, 0
        %v4957 = vsel %vm356, %v4936, 0
        %v4960 = vsel %vm356, %v4937, 0
        %4962 = vmatprep.subr.mxu0 %v4869
        %4963 = vmatpush1.msra.mxu0 %v4868
        %4964 = vmatprep.subr.mxu0 %v4874
        %4965 = vmatpush1.msra.mxu0 %v4873
        %4966 = vmatprep.subr.mxu0 %v4879
        %4967 = vmatpush1.msra.mxu0 %v4878
        %4968 = vmatprep.subr.mxu0 %v4884
        %4969 = vmatpush1.msra.mxu0 %v4883
        %4970 = vmatprep.subr.mxu0 %v4889
        %4971 = vmatpush1.msra.mxu0 %v4888
        %4972 = vmatprep.subr.mxu0 %v4894
        %4973 = vmatpush1.msra.mxu0 %v4893
        %4974 = vmatprep.subr.mxu0 %v4899
        %4975 = vmatpush1.msra.mxu0 %v4898
        %4976 = vmatprep.subr.mxu0 %v4904
        %4977 = vmatpush1.msra.mxu0 %v4903
        %4978 = vmatprep.subr.mxu0 %v4909
        %4979 = vmatpush1.msra.mxu0 %v4908
        %4980 = vmatprep.subr.mxu0 %v4914
        %4981 = vmatpush1.msra.mxu0 %v4913
        %4982 = vmatprep.subr.mxu0 %v4919
        %4983 = vmatpush1.msra.mxu0 %v4918
        %4984 = vmatprep.subr.mxu0 %v4924
        %4985 = vmatpush1.msra.mxu0 %v4923
        %4986 = vmatprep.subr.mxu0 %v4929
        %4987 = vmatpush1.msra.mxu0 %v4928
        %4988 = vmatprep.subr.mxu0 %v4951
        %4989 = vmatpush1.msra.mxu0 %v4948
        %4990 = vmatprep.subr.mxu0 0.0
        %4991 = vmatpush1.msra.mxu0 0.0
        %4992 = vmatprep.subr.mxu0 0.0
        %4993 = vmatpush1.msra.mxu0 0.0
        %4994 = vmatprep.subr.mxu0 0.0
        %4995 = vmatpush1.msra.mxu0 0.0
        %4996 = vmatprep.subr.mxu0 0.0
        %4997 = vmatpush1.msra.mxu0 0.0
        %4998 = vmatprep.subr.mxu0 0.0
        %4999 = vmatpush1.msra.mxu0 0.0
        %5000 = vmatprep.subr.mxu0 0.0
        %5001 = vmatpush1.msra.mxu0 0.0
        %5002 = vmatprep.subr.mxu0 0.0
        %5003 = vmatpush1.msra.mxu0 0.0
        %5004 = vmatprep.subr.mxu0 0.0
        %5005 = vmatpush1.msra.mxu0 0.0
        %5006 = vmatprep.subr.mxu0 0.0
        %5007 = vmatpush1.msra.mxu0 0.0
        %5008 = vmatprep.subr.mxu0 0.0
        %5009 = vmatpush1.msra.mxu0 0.0
        %5010 = vmatprep.subr.mxu0 0.0
        %5011 = vmatpush1.msra.mxu0 0.0
        %5012 = vmatprep.subr.mxu0 0.0
        %5013 = vmatpush1.msra.mxu0 0.0
        %5014 = vmatprep.subr.mxu0 0.0
        %5015 = vmatpush1.msra.mxu0 0.0
        %5016 = vmatprep.subr.mxu0 0.0
        %5017 = vmatpush1.msra.mxu0 0.0
        %5018 = vmatprep.subr.mxu0 0.0
        %5019 = vmatpush1.msra.mxu0 0.0
        %5020 = vmatprep.subr.mxu0 0.0
        %5021 = vmatpush1.msra.mxu0 0.0
        %5022 = vmatprep.subr.mxu0 0.0
        %5023 = vmatpush1.msra.mxu0 0.0
        %5024 = vmatprep.subr.mxu0 0.0
        %5025 = vmatpush1.msra.mxu0 0.0
        %5026 = vmatprep.mubr.f32.mxu0 0.0
        %5027 = vmatmul.mubr.f32.gmra.mrb[0].mxu0 %v4945
        %v5028 = vpop.f32.mrb[0].mxu0
        %v5029 = vadd.f32 %v4942, %v5028
        %v5030 = vpop.f32.mrb[0].mxu0
        %v5031 = vadd.f32 %v4942, %v5030
        %5032 = vdwg.mxu0
        %5033 = vmatprep.subr.mxu0 %v4871
        %5034 = vmatpush1.msra.mxu0 %v4870
        %5035 = vmatprep.subr.mxu0 %v4876
        %5036 = vmatpush1.msra.mxu0 %v4875
        %5037 = vmatprep.subr.mxu0 %v4881
        %5038 = vmatpush1.msra.mxu0 %v4880
        %5039 = vmatprep.subr.mxu0 %v4886
        %5040 = vmatpush1.msra.mxu0 %v4885
        %5041 = vmatprep.subr.mxu0 %v4891
        %5042 = vmatpush1.msra.mxu0 %v4890
        %5043 = vmatprep.subr.mxu0 %v4896
        %5044 = vmatpush1.msra.mxu0 %v4895
        %5045 = vmatprep.subr.mxu0 %v4901
        %5046 = vmatpush1.msra.mxu0 %v4900
        %5047 = vmatprep.subr.mxu0 %v4906
        %5048 = vmatpush1.msra.mxu0 %v4905
        %5049 = vmatprep.subr.mxu0 %v4911
        %5050 = vmatpush1.msra.mxu0 %v4910
        %5051 = vmatprep.subr.mxu0 %v4916
        %5052 = vmatpush1.msra.mxu0 %v4915
        %5053 = vmatprep.subr.mxu0 %v4921
        %5054 = vmatpush1.msra.mxu0 %v4920
        %5055 = vmatprep.subr.mxu0 %v4926
        %5056 = vmatpush1.msra.mxu0 %v4925
        %5057 = vmatprep.subr.mxu0 %v4931
        %5058 = vmatpush1.msra.mxu0 %v4930
        %5059 = vmatprep.subr.mxu0 %v4957
        %5060 = vmatpush1.msra.mxu0 %v4954
        %5061 = vmatprep.subr.mxu0 0.0
        %5062 = vmatpush1.msra.mxu0 0.0
        %5063 = vmatprep.subr.mxu0 0.0
        %5064 = vmatpush1.msra.mxu0 0.0
        %5065 = vmatprep.subr.mxu0 0.0
        %5066 = vmatpush1.msra.mxu0 0.0
        %5067 = vmatprep.subr.mxu0 0.0
        %5068 = vmatpush1.msra.mxu0 0.0
        %5069 = vmatprep.subr.mxu0 0.0
        %5070 = vmatpush1.msra.mxu0 0.0
        %5071 = vmatprep.subr.mxu0 0.0
        %5072 = vmatpush1.msra.mxu0 0.0
        %5073 = vmatprep.subr.mxu0 0.0
        %5074 = vmatpush1.msra.mxu0 0.0
        %5075 = vmatprep.subr.mxu0 0.0
        %5076 = vmatpush1.msra.mxu0 0.0
        %5077 = vmatprep.subr.mxu0 0.0
        %5078 = vmatpush1.msra.mxu0 0.0
        %5079 = vmatprep.subr.mxu0 0.0
        %5080 = vmatpush1.msra.mxu0 0.0
        %5081 = vmatprep.subr.mxu0 0.0
        %5082 = vmatpush1.msra.mxu0 0.0
        %5083 = vmatprep.subr.mxu0 0.0
        %5084 = vmatpush1.msra.mxu0 0.0
        %5085 = vmatprep.subr.mxu0 0.0
        %5086 = vmatpush1.msra.mxu0 0.0
        %5087 = vmatprep.subr.mxu0 0.0
        %5088 = vmatpush1.msra.mxu0 0.0
        %5089 = vmatprep.subr.mxu0 0.0
        %5090 = vmatpush1.msra.mxu0 0.0
        %5091 = vmatprep.subr.mxu0 0.0
        %5092 = vmatpush1.msra.mxu0 0.0
        %5093 = vmatprep.subr.mxu0 0.0
        %5094 = vmatpush1.msra.mxu0 0.0
        %5095 = vmatprep.subr.mxu0 0.0
        %5096 = vmatpush1.msra.mxu0 0.0
        %5097 = vmatprep.mubr.f32.mxu0 0.0
        %5098 = vmatmul.mubr.f32.gmra.mrb[0].mxu0 %v4945
        %v5099 = vpop.f32.mrb[0].mxu0
        %v5100 = vadd.f32 %v4942, %v5099
        %v5101 = vpop.f32.mrb[0].mxu0
        %v5102 = vadd.f32 %v4942, %v5101
        %5103 = vdwg.mxu0
        %5104 = vmatprep.subr.mxu0 0.0
        %5105 = vmatpush1.msra.mxu0 %v4872
        %5106 = vmatprep.subr.mxu0 0.0
        %5107 = vmatpush1.msra.mxu0 %v4877
        %5108 = vmatprep.subr.mxu0 0.0
        %5109 = vmatpush1.msra.mxu0 %v4882
        %5110 = vmatprep.subr.mxu0 0.0
        %5111 = vmatpush1.msra.mxu0 %v4887
        %5112 = vmatprep.subr.mxu0 0.0
        %5113 = vmatpush1.msra.mxu0 %v4892
        %5114 = vmatprep.subr.mxu0 0.0
        %5115 = vmatpush1.msra.mxu0 %v4897
        %5116 = vmatprep.subr.mxu0 0.0
        %5117 = vmatpush1.msra.mxu0 %v4902
        %5118 = vmatprep.subr.mxu0 0.0
        %5119 = vmatpush1.msra.mxu0 %v4907
        %5120 = vmatprep.subr.mxu0 0.0
        %5121 = vmatpush1.msra.mxu0 %v4912
        %5122 = vmatprep.subr.mxu0 0.0
        %5123 = vmatpush1.msra.mxu0 %v4917
        %5124 = vmatprep.subr.mxu0 0.0
        %5125 = vmatpush1.msra.mxu0 %v4922
        %5126 = vmatprep.subr.mxu0 0.0
        %5127 = vmatpush1.msra.mxu0 %v4927
        %5128 = vmatprep.subr.mxu0 0.0
        %5129 = vmatpush1.msra.mxu0 %v4932
        %5130 = vmatprep.subr.mxu0 0.0
        %5131 = vmatpush1.msra.mxu0 %v4960
        %5132 = vmatprep.subr.mxu0 0.0
        %5133 = vmatpush1.msra.mxu0 0.0
        %5134 = vmatprep.subr.mxu0 0.0
        %5135 = vmatpush1.msra.mxu0 0.0
        %5136 = vmatprep.subr.mxu0 0.0
        %5137 = vmatpush1.msra.mxu0 0.0
        %5138 = vmatprep.subr.mxu0 0.0
        %5139 = vmatpush1.msra.mxu0 0.0
        %5140 = vmatprep.subr.mxu0 0.0
        %5141 = vmatpush1.msra.mxu0 0.0
        %5142 = vmatprep.subr.mxu0 0.0
        %5143 = vmatpush1.msra.mxu0 0.0
        %5144 = vmatprep.subr.mxu0 0.0
        %5145 = vmatpush1.msra.mxu0 0.0
        %5146 = vmatprep.subr.mxu0 0.0
        %5147 = vmatpush1.msra.mxu0 0.0
        %5148 = vmatprep.subr.mxu0 0.0
        %5149 = vmatpush1.msra.mxu0 0.0
        %5150 = vmatprep.subr.mxu0 0.0
        %5151 = vmatpush1.msra.mxu0 0.0
        %5152 = vmatprep.subr.mxu0 0.0
        %5153 = vmatpush1.msra.mxu0 0.0
        %5154 = vmatprep.subr.mxu0 0.0
        %5155 = vmatpush1.msra.mxu0 0.0
        %5156 = vmatprep.subr.mxu0 0.0
        %5157 = vmatpush1.msra.mxu0 0.0
        %5158 = vmatprep.subr.mxu0 0.0
        %5159 = vmatpush1.msra.mxu0 0.0
        %5160 = vmatprep.subr.mxu0 0.0
        %5161 = vmatpush1.msra.mxu0 0.0
        %5162 = vmatprep.subr.mxu0 0.0
        %5163 = vmatpush1.msra.mxu0 0.0
        %5164 = vmatprep.subr.mxu0 0.0
        %5165 = vmatpush1.msra.mxu0 0.0
        %5166 = vmatprep.subr.mxu0 0.0
        %5167 = vmatpush1.msra.mxu0 0.0
        %5168 = vmatprep.mubr.f32.mxu0 0.0
        %5169 = vmatmul.mubr.f32.gmra.mrb[0].mxu0 %v4945
        %v5170 = vpop.f32.mrb[0].mxu0
        %v5171 = vadd.f32 %v4942, %v5170
        %v5172 = vpop.f32.mrb[0].mxu0
        %5173 = vdwg.mxu0
        %v5176 = vcombine.high %v329, %v329
        %v5177 = vcombine.high %v330, %v330
        %v5180 = vadd.f32 %v5029, %v329
        %v5181 = vadd.f32 %v5031, %v5176
        %v5182 = vadd.f32 %v5100, %v330
        %v5183 = vadd.f32 %v5102, %v5177
        %v5184 = vadd.f32 %v5171, %v331
        %v5189 = vcombine.low %v5180, %v5181
        %v5190 = vcombine.low %v5182, %v5183
        %5193 = vst [vmem:[%s319] sm:$0xff] %v5189
        %5194 = vst [vmem:[%s319 + $0x8] sm:$0xff] %v5190
        %5195 = vst.msk [vmem:[%s319 + $0x10] sm:$0xf] %vm446, %v5184
        %p5196 = scmp.lt.s32.totalorder %s20, 1
        %s5197 = scalar_select %p5196, %s20, 1
        %s5198 = smul.addr %s5197, 5
        %s5199 = smul.addr %s5198, 4
        %s5200 = scalar_lea.vmem %s8, %s5199
        // Predicated region
        $region57: #{res_block_sa_2d.1} parent=51 // pred_check
          %p5201 = pneg %p211
        $region58: #{res_block_sa_2d.1} parent=51 // pred_check_branch
          %5203 = sbr.rel (%p5201) target = $region60
        $region59: #{res_block_sa_2d.1} parent=51 // pred_region
          _
        $region60: #{res_block_sa_2d.1} parent=51 // pred_fallthru
          _
      $region52: #{res_block_sa_2d.1} parent=5 // pred_fallthru
        _
      %p5204 = scmp.le.s32.totalorder 2, %s15
      // Predicated region
      $region61: #{res_block_sa_2d.1} parent=5 // pred_check
        %p5205 = pneg %p5204
      $region62: #{res_block_sa_2d.1} parent=5 // pred_check_branch
        %5207 = sbr.rel (%p5205) target = $region64
      $region63: #{res_block_sa_2d.1} parent=5 // pred_region
        %s5208 = ssub.s32 %s15, 2
        // Predicated region
        $region65: #{res_block_sa_2d.1} parent=63 // pred_check
          %p5209 = pneg %p217
        $region66: #{res_block_sa_2d.1} parent=63 // pred_check_branch
          %5211 = sbr.rel (%p5209) target = $region68
        $region67: #{res_block_sa_2d.1} parent=63 // pred_region
          %p5212 = scmp.lt.s32.totalorder %s21, 1
          %s5213 = scalar_select %p5212, %s21, 1
          %s5214 = smul.addr %s5213, 5
          %s5215 = smul.addr %s5214, 4
          %s5216 = scalar_lea.vmem %s8, %s5215
        $region68: #{res_block_sa_2d.1} parent=63 // pred_fallthru
          _
      $region64: #{res_block_sa_2d.1} parent=5 // pred_fallthru
        _
    $region6: #{res_block_sa_2d.1} parent=1 // loop_footer
      %s19 = sadd.s32 1, %s15
    $region7: #{res_block_sa_2d.1} parent=1 // loop_footer_branch
      %14 = sbr.rel target = $region3
    $region8: #{res_block_sa_2d.1} parent=1 // loop_exit
      _
    %5217 = vsyncpa [#allocation5], 1
    %s5218 = scalar_lea.sflag [#allocation5], 1
    %5219 = vsyncpa %s5218, 1

</llo_original>
